<compile_context>
chip_gen: v6e
topology: v6e:2x2x1
jax: 0.10.0
libtpu: 0.0.40
codegen_flags: <defaults>
</compile_context>

<pallas_src>
import jax
import jax.numpy as jnp
import numpy as np
from jax.experimental import pallas as pl
from jax.experimental.pallas import tpu as pltpu


def _round8(n):
    return ((n + 7) // 8) * 8


# ----------------------------------------------------------------------------
# Weight packing: one dense (rows, 4H) f32 slab, every operand 8-row aligned.
# ----------------------------------------------------------------------------
def pack_params(params, input_size, hidden_size, num_layers):
    four_h = 4 * hidden_size
    cursor = [0]

    def alloc(nrows):
        start = cursor[0]
        cursor[0] += _round8(nrows)
        return start

    # Column scale per gate block (i, f, g, o): sigmoid via 0.5*tanh(0.5*x)+0.5
    gate_scale = np.concatenate([
        np.full(hidden_size, 0.5, np.float32),
        np.full(hidden_size, 0.5, np.float32),
        np.full(hidden_size, 1.0, np.float32),
        np.full(hidden_size, 0.5, np.float32)])[None, :]

    entries = []

    def add_lstm_stack(layers, in0):
        out = []
        isz = in0
        for (wih, whh, b) in layers:
            wo, ho, bo = alloc(isz), alloc(hidden_size), alloc(1)
            entries.append((wo, np.asarray(wih, np.float32) * gate_scale))
            entries.append((ho, np.asarray(whh, np.float32) * gate_scale))
            entries.append((bo, np.asarray(b, np.float32) * gate_scale))
            out.append((wo, isz, ho, bo))
            isz = hidden_size
        return out

    enc = add_lstm_stack(params["enc"], input_size)
    dec = add_lstm_stack(params["dec"], hidden_size)

    def add_linear(w, b):
        wo, bo = alloc(w.shape[0]), alloc(1)
        entries.append((wo, np.asarray(w, np.float32)))
        entries.append((bo, np.asarray(b, np.float32)))
        return (wo, bo)

    fc1 = add_linear(params["fc1_w"], params["fc1_b"])
    fc2 = add_linear(params["fc2_w"], params["fc2_b"])
    fc = add_linear(params["fc_w"], params["fc_b"])

    rows = _round8(cursor[0])
    buf = np.zeros((rows, four_h), np.float32)
    for ro, arr in entries:
        r, c = arr.shape
        buf[ro:ro + r, :c] = arr

    layout = {"enc": enc, "dec": dec, "fc1": fc1, "fc2": fc2, "fc": fc}
    return jnp.asarray(buf), layout


# ----------------------------------------------------------------------------
# Fused forward kernel
# ----------------------------------------------------------------------------
def _make_fused_kernel(T, B, Bp, I, H, layout):
    TI = T * I

    def kernel(x_ref, w_ref, out_ref, enc_slab, dec_slab):
        # ---- load input (batch-major) and pad batch to one sublane tile ----
        x_in = x_ref[...]                                     # (B, T*I)
        if Bp > B:
            x_pad = jnp.concatenate(
                [x_in, jnp.zeros((Bp - B, TI), jnp.float32)], axis=0)
        else:
            x_pad = x_in                                       # (Bp, T*I)

        # Gate weights are pre-scaled: sigmoid(x) == 0.5*tanh(scaled) + 0.5.
        def lstm_step(xg_t, h, c, whh_s):
            g = xg_t + jnp.dot(h, whh_s, preferred_element_type=jnp.float32)
            t_all = jnp.tanh(g)                                # one EUP pass, 4H wide
            i_g = 0.5 * t_all[:, 0 * H:1 * H] + 0.5
            f_g = 0.5 * t_all[:, 1 * H:2 * H] + 0.5
            g_g = t_all[:, 2 * H:3 * H]
            o_g = 0.5 * t_all[:, 3 * H:4 * H] + 0.5
            c_new = f_g * c + i_g * g_g
            h_new = o_g * jnp.tanh(c_new)
            return h_new, c_new

        def run_layer(xg_list, whh_s, slab_ref):
            h = jnp.zeros((Bp, H), jnp.float32)
            c = jnp.zeros((Bp, H), jnp.float32)
            for t in range(T):                                 # static unroll
                h, c = lstm_step(xg_list[t], h, c, whh_s)
                slab_ref[t * Bp:(t + 1) * Bp, :] = h           # aligned store
            return h

        # -------------------- encoder LSTM stack --------------------
        h_last = None
        for li, (wo, isz, ho, bo) in enumerate(layout["enc"]):
            wih_s = w_ref[wo:wo + isz, :]
            whh_s = w_ref[ho:ho + H, :]
            b_s = w_ref[bo:bo + 1, :]
            if li == 0:
                # Input projection hoisted out of the serial recurrence.
                xg_list = [
                    jnp.dot(x_pad[:, t * I:(t + 1) * I], wih_s,
                            preferred_element_type=jnp.float32) + b_s
                    for t in range(T)]
            else:
                seq = enc_slab[...]                            # (T*Bp, H)
                xg_all = jnp.dot(seq, wih_s,
                                 preferred_element_type=jnp.float32) + b_s
                xg_list = [xg_all[t * Bp:(t + 1) * Bp, :] for t in range(T)]
            h_last = run_layer(xg_list, whh_s, enc_slab)

        enc_seq = enc_slab[...]                                # (T*Bp, H) time-major
        enc_last = h_last                                      # (Bp, H)

        # -------------------- classifier head --------------------
        fc1_wo, fc1_bo = layout["fc1"]
        fc2_wo, fc2_bo = layout["fc2"]
        hcls = (jnp.dot(enc_seq, w_ref[fc1_wo:fc1_wo + H, 0:H],
                        preferred_element_type=jnp.float32)
                + w_ref[fc1_bo:fc1_bo + 1, 0:H])
        hcls = jnp.maximum(hcls, 0.0)
        cls = (jnp.dot(hcls, w_ref[fc2_wo:fc2_wo + H, 0:I],
                       preferred_element_type=jnp.float32)
               + w_ref[fc2_bo:fc2_bo + 1, 0:I])                # (T*Bp, I)

        # predictions, batch-major: pred[:, 0] = x[:, 1]; pred[:, t] = cls[t-1]
        for t in range(T):
            piece = x_pad[:, I:2 * I] if t == 0 else cls[(t - 1) * Bp:t * Bp, :]
            out_ref[:, TI + t * I:TI + (t + 1) * I] = piece

        # -------------------- decoder LSTM stack --------------------
        for li, (wo, isz, ho, bo) in enumerate(layout["dec"]):
            wih_s = w_ref[wo:wo + isz, :]
            whh_s = w_ref[ho:ho + H, :]
            b_s = w_ref[bo:bo + 1, :]
            if li == 0:
                # Constant input every step -> single projection.
                xg_c = jnp.dot(enc_last, wih_s,
                               preferred_element_type=jnp.float32) + b_s
                xg_list = [xg_c] * T
            else:
                seq = dec_slab[...]
                xg_all = jnp.dot(seq, wih_s,
                                 preferred_element_type=jnp.float32) + b_s
                xg_list = [xg_all[t * Bp:(t + 1) * Bp, :] for t in range(T)]
            run_layer(xg_list, whh_s, dec_slab)

        # -------------------- output fc, batch-major packing --------------------
        fc_wo, fc_bo = layout["fc"]
        dec_flat = (jnp.dot(dec_slab[...], w_ref[fc_wo:fc_wo + H, 0:I],
                            preferred_element_type=jnp.float32)
                    + w_ref[fc_bo:fc_bo + 1, 0:I])             # (T*Bp, I)
        for t in range(T):
            out_ref[:, t * I:(t + 1) * I] = dec_flat[t * Bp:(t + 1) * Bp, :]

    return kernel


# ----------------------------------------------------------------------------
# Wrapper
# ----------------------------------------------------------------------------
def make_forward(layout, *, batch, seq_len, input_size, hidden_size):
    assert seq_len >= 2, "module indexes x[:, 1, :]; needs sequence_length >= 2"
    B, T, I, H = batch, seq_len, input_size, hidden_size
    Bp = max(8, _round8(B))
    TI = T * I
    kernel = _make_fused_kernel(T, B, Bp, I, H, layout)

    def forward(packed_w, x):
        # (B, T, I) -> (B, T*I) is a row-major reshape: free, no data movement.
        x2 = x.reshape(B, TI)
        out = pl.pallas_call(
            kernel,
            out_shape=jax.ShapeDtypeStruct((Bp, 2 * TI), jnp.float32),
            scratch_shapes=[pltpu.VMEM((T * Bp, H), jnp.float32),   # encoder seq
                            pltpu.VMEM((T * Bp, H), jnp.float32)],  # decoder seq
        )(x2, packed_w)
        dec = out[:B, :TI].reshape(B, T, I)
        pred = out[:B, TI:2 * TI].reshape(B, T, I)
        return dec, pred

    return forward


# ----------------------------------------------------------------------------
# Deterministic parameter init (PyTorch shapes, uniform(-1/sqrt(H), 1/sqrt(H)))
# ----------------------------------------------------------------------------
def _uniform(key, shape, bound):
    return jax.random.uniform(key, shape, jnp.float32, -bound, bound)


def init_lstm_params(key, in_size, hidden, num_layers):
    layers = []
    bound = 1.0 / (hidden ** 0.5)
    for l in range(num_layers):
        isz = in_size if l == 0 else hidden
        key, k1, k2, k3, k4 = jax.random.split(key, 5)
        wih = _uniform(k1, (isz, 4 * hidden), bound)      # weight_ih^T
        whh = _uniform(k2, (hidden, 4 * hidden), bound)   # weight_hh^T
        b = _uniform(k3, (1, 4 * hidden), bound) + _uniform(k4, (1, 4 * hidden), bound)
        layers.append((wih, whh, b))
    return key, layers


def init_params(key, input_size, encoded_size, hidden_size, num_layers):
    # The PyTorch module only works when encoded_size == hidden_size.
    assert encoded_size == hidden_size, "module requires encoded_size == hidden_size"

    key, enc = init_lstm_params(key, input_size, encoded_size, num_layers)
    key, dec = init_lstm_params(key, encoded_size, hidden_size, num_layers)

    def lin(key, in_f, out_f):
        b = 1.0 / (in_f ** 0.5)
        key, kw, kb = jax.random.split(key, 3)
        return key, _uniform(kw, (in_f, out_f), b), _uniform(kb, (1, out_f), b)

    key, fc_w, fc_b = lin(key, hidden_size, input_size)
    key, fc1_w, fc1_b = lin(key, hidden_size, encoded_size)
    key, fc2_w, fc2_b = lin(key, encoded_size, input_size)
    return {"enc": enc, "dec": dec,
            "fc_w": fc_w, "fc_b": fc_b,
            "fc1_w": fc1_w, "fc1_b": fc1_b,
            "fc2_w": fc2_w, "fc2_b": fc2_b}


# ----------------------------------------------------------------------------
# Pure-JAX reference (sanity check, uses the raw unscaled parameters)
# ----------------------------------------------------------------------------
def _ref_lstm_stack(x_tm, layers):
    h_seq = x_tm
    for wih, whh, b in layers:
        T, B, _ = h_seq.shape
        H = whh.shape[0]
        h = jnp.zeros((B, H), jnp.float32)
        c = jnp.zeros((B, H), jnp.float32)
        outs = []
        for t in range(T):
            g = h_seq[t] @ wih + h @ whh + b
            i_g = jax.nn.sigmoid(g[:, :H])
            f_g = jax.nn.sigmoid(g[:, H:2 * H])
            g_g = jnp.tanh(g[:, 2 * H:3 * H])
            o_g = jax.nn.sigmoid(g[:, 3 * H:])
            c = f_g * c + i_g * g_g
            h = o_g * jnp.tanh(c)
            outs.append(h)
        h_seq = jnp.stack(outs, 0)
    return h_seq


def ref_forward(params, x):
    B, T, I = x.shape
    x_tm = jnp.transpose(x, (1, 0, 2))
    enc = jnp.transpose(_ref_lstm_stack(x_tm, params["enc"]), (1, 0, 2))
    E = enc.shape[-1]
    pred = jnp.maximum(enc.reshape(B * T, E) @ params["fc1_w"] + params["fc1_b"], 0.0)
    pred = (pred @ params["fc2_w"] + params["fc2_b"]).reshape(B, T, I)
    pred = jnp.concatenate([x[:, 1:2, :], pred[:, :-1, :]], axis=1)
    enc_last = enc[:, -1, :]
    dec_in_tm = jnp.broadcast_to(enc_last[None, :, :], (T, B, E))
    dec_h_tm = _ref_lstm_stack(dec_in_tm, params["dec"])
    H = dec_h_tm.shape[-1]
    dec = (dec_h_tm.reshape(T * B, H) @ params["fc_w"] + params["fc_b"])
    dec = dec.reshape(T, B, I).transpose(1, 0, 2)
    return dec, pred


# ----------------------------------------------------------------------------
if __name__ == "__main__":
    batch = 2
    input_size = 8
    sequence_length = 8
    hidden_size = 32
    encoded_size = hidden_size   # module assumes encoded_size == hidden_size
    num_layers = 1

    key = jax.random.PRNGKey(0)
    key, kx = jax.random.split(key)
    params = init_params(key, input_size, encoded_size, hidden_size, num_layers)
    x = jax.random.normal(kx, (batch, sequence_length, input_size), jnp.float32)

    packed_w, layout = pack_params(params, input_size, hidden_size, num_layers)
    fwd = jax.jit(make_forward(layout, batch=batch, seq_len=sequence_length,
                               input_size=input_size, hidden_size=hidden_size))

    decoded, predictions = fwd(packed_w, x)
    decoded = jax.block_until_ready(decoded)
    predictions = jax.block_until_ready(predictions)

    # Sanity check against the pure-JAX reference.
    ref_dec, ref_pred = ref_forward(params, x)
    np.testing.assert_allclose(np.asarray(decoded), np.asarray(ref_dec),
                               rtol=1e-2, atol=1e-2)
    np.testing.assert_allclose(np.asarray(predictions), np.asarray(ref_pred),
                               rtol=1e-2, atol=1e-2)
    assert decoded.shape == (batch, sequence_length, input_size)
    assert predictions.shape == (batch, sequence_length, input_size)

    print("KERNEL_OK")
</pallas_src>

<mosaic_0001>
module attributes {stable_mosaic.version = 11 : i64} {
  func.func @kernel(%arg0: memref<2x64xf32, #tpu.memory_space<vmem>>, %arg1: memref<240x128xf32, #tpu.memory_space<vmem>>, %arg2: memref<8x128xf32, #tpu.memory_space<vmem>>, %arg3: memref<64x32xf32, #tpu.memory_space<vmem>>, %arg4: memref<64x32xf32, #tpu.memory_space<vmem>>) attributes {dimension_semantics = [], scalar_prefetch = 0 : i64, scratch_operands = 2 : i64, tpu.core_type = #tpu.core_type<tc>} {
    %c0 = arith.constant 0 : index
    %c0_0 = arith.constant 0 : index
    %0 = vector.load %arg0[%c0, %c0_0] : memref<2x64xf32, #tpu.memory_space<vmem>>, vector<2x64xf32>
    %cst = arith.constant 0.000000e+00 : f32
    %1 = vector.broadcast %cst : f32 to vector<6x64xf32>
    %2 = tpu.concatenate %0, %1 in 0 : vector<2x64xf32>, vector<6x64xf32> -> vector<8x64xf32>
    %c0_1 = arith.constant 0 : index
    %c0_2 = arith.constant 0 : index
    %3 = vector.load %arg1[%c0_1, %c0_2] : memref<240x128xf32, #tpu.memory_space<vmem>>, vector<8x128xf32>
    %c8 = arith.constant 8 : index
    %c0_3 = arith.constant 0 : index
    %4 = vector.load %arg1[%c8, %c0_3] : memref<240x128xf32, #tpu.memory_space<vmem>>, vector<32x128xf32>
    %c40 = arith.constant 40 : index
    %c0_4 = arith.constant 0 : index
    %5 = vector.load %arg1[%c40, %c0_4] : memref<240x128xf32, #tpu.memory_space<vmem>>, vector<1x128xf32>
    %6 = vector.extract_strided_slice %2 {offsets = [0, 0], sizes = [8, 8], strides = [1, 1]} : vector<8x64xf32> to vector<8x8xf32>
    %cst_5 = arith.constant dense<0.000000e+00> : vector<8x128xf32>
    %7 = tpu.matmul %6, %3, %cst_5 {dimension_numbers = #tpu.dot_dimension_numbers<[1], [0], [0], [1], [0, 0, 1, 1], [], []>} : vector<8x8xf32>, vector<8x128xf32>, vector<8x128xf32> -> vector<8x128xf32>
    %8 = vector.broadcast %5 : vector<1x128xf32> to vector<8x128xf32>
    %9 = arith.addf %7, %8 : vector<8x128xf32>
    %10 = vector.extract_strided_slice %2 {offsets = [0, 8], sizes = [8, 8], strides = [1, 1]} : vector<8x64xf32> to vector<8x8xf32>
    %cst_6 = arith.constant dense<0.000000e+00> : vector<8x128xf32>
    %11 = tpu.matmul %10, %3, %cst_6 {dimension_numbers = #tpu.dot_dimension_numbers<[1], [0], [0], [1], [0, 0, 1, 1], [], []>} : vector<8x8xf32>, vector<8x128xf32>, vector<8x128xf32> -> vector<8x128xf32>
    %12 = vector.broadcast %5 : vector<1x128xf32> to vector<8x128xf32>
    %13 = arith.addf %11, %12 : vector<8x128xf32>
    %14 = vector.extract_strided_slice %2 {offsets = [0, 16], sizes = [8, 8], strides = [1, 1]} : vector<8x64xf32> to vector<8x8xf32>
    %cst_7 = arith.constant dense<0.000000e+00> : vector<8x128xf32>
    %15 = tpu.matmul %14, %3, %cst_7 {dimension_numbers = #tpu.dot_dimension_numbers<[1], [0], [0], [1], [0, 0, 1, 1], [], []>} : vector<8x8xf32>, vector<8x128xf32>, vector<8x128xf32> -> vector<8x128xf32>
    %16 = vector.broadcast %5 : vector<1x128xf32> to vector<8x128xf32>
    %17 = arith.addf %15, %16 : vector<8x128xf32>
    %18 = vector.extract_strided_slice %2 {offsets = [0, 24], sizes = [8, 8], strides = [1, 1]} : vector<8x64xf32> to vector<8x8xf32>
    %cst_8 = arith.constant dense<0.000000e+00> : vector<8x128xf32>
    %19 = tpu.matmul %18, %3, %cst_8 {dimension_numbers = #tpu.dot_dimension_numbers<[1], [0], [0], [1], [0, 0, 1, 1], [], []>} : vector<8x8xf32>, vector<8x128xf32>, vector<8x128xf32> -> vector<8x128xf32>
    %20 = vector.broadcast %5 : vector<1x128xf32> to vector<8x128xf32>
    %21 = arith.addf %19, %20 : vector<8x128xf32>
    %22 = vector.extract_strided_slice %2 {offsets = [0, 32], sizes = [8, 8], strides = [1, 1]} : vector<8x64xf32> to vector<8x8xf32>
    %cst_9 = arith.constant dense<0.000000e+00> : vector<8x128xf32>
    %23 = tpu.matmul %22, %3, %cst_9 {dimension_numbers = #tpu.dot_dimension_numbers<[1], [0], [0], [1], [0, 0, 1, 1], [], []>} : vector<8x8xf32>, vector<8x128xf32>, vector<8x128xf32> -> vector<8x128xf32>
    %24 = vector.broadcast %5 : vector<1x128xf32> to vector<8x128xf32>
    %25 = arith.addf %23, %24 : vector<8x128xf32>
    %26 = vector.extract_strided_slice %2 {offsets = [0, 40], sizes = [8, 8], strides = [1, 1]} : vector<8x64xf32> to vector<8x8xf32>
    %cst_10 = arith.constant dense<0.000000e+00> : vector<8x128xf32>
    %27 = tpu.matmul %26, %3, %cst_10 {dimension_numbers = #tpu.dot_dimension_numbers<[1], [0], [0], [1], [0, 0, 1, 1], [], []>} : vector<8x8xf32>, vector<8x128xf32>, vector<8x128xf32> -> vector<8x128xf32>
    %28 = vector.broadcast %5 : vector<1x128xf32> to vector<8x128xf32>
    %29 = arith.addf %27, %28 : vector<8x128xf32>
    %30 = vector.extract_strided_slice %2 {offsets = [0, 48], sizes = [8, 8], strides = [1, 1]} : vector<8x64xf32> to vector<8x8xf32>
    %cst_11 = arith.constant dense<0.000000e+00> : vector<8x128xf32>
    %31 = tpu.matmul %30, %3, %cst_11 {dimension_numbers = #tpu.dot_dimension_numbers<[1], [0], [0], [1], [0, 0, 1, 1], [], []>} : vector<8x8xf32>, vector<8x128xf32>, vector<8x128xf32> -> vector<8x128xf32>
    %32 = vector.broadcast %5 : vector<1x128xf32> to vector<8x128xf32>
    %33 = arith.addf %31, %32 : vector<8x128xf32>
    %34 = vector.extract_strided_slice %2 {offsets = [0, 56], sizes = [8, 8], strides = [1, 1]} : vector<8x64xf32> to vector<8x8xf32>
    %cst_12 = arith.constant dense<0.000000e+00> : vector<8x128xf32>
    %35 = tpu.matmul %34, %3, %cst_12 {dimension_numbers = #tpu.dot_dimension_numbers<[1], [0], [0], [1], [0, 0, 1, 1], [], []>} : vector<8x8xf32>, vector<8x128xf32>, vector<8x128xf32> -> vector<8x128xf32>
    %36 = vector.broadcast %5 : vector<1x128xf32> to vector<8x128xf32>
    %37 = arith.addf %35, %36 : vector<8x128xf32>
    %cst_13 = arith.constant 0.000000e+00 : f32
    %38 = vector.broadcast %cst_13 : f32 to vector<8x32xf32>
    %cst_14 = arith.constant 0.000000e+00 : f32
    %39 = vector.broadcast %cst_14 : f32 to vector<8x32xf32>
    %cst_15 = arith.constant dense<0.000000e+00> : vector<8x128xf32>
    %40 = tpu.matmul %38, %4, %cst_15 {dimension_numbers = #tpu.dot_dimension_numbers<[1], [0], [0], [1], [0, 0, 1, 1], [], []>} : vector<8x32xf32>, vector<32x128xf32>, vector<8x128xf32> -> vector<8x128xf32>
    %41 = arith.addf %9, %40 : vector<8x128xf32>
    %42 = math.tanh %41 : vector<8x128xf32>
    %43 = vector.extract_strided_slice %42 {offsets = [0, 0], sizes = [8, 32], strides = [1, 1]} : vector<8x128xf32> to vector<8x32xf32>
    %cst_16 = arith.constant 5.000000e-01 : f32
    %44 = vector.broadcast %cst_16 : f32 to vector<8x32xf32>
    %45 = arith.mulf %44, %43 : vector<8x32xf32>
    %cst_17 = arith.constant 5.000000e-01 : f32
    %46 = vector.broadcast %cst_17 : f32 to vector<8x32xf32>
    %47 = arith.addf %45, %46 : vector<8x32xf32>
    %48 = vector.extract_strided_slice %42 {offsets = [0, 32], sizes = [8, 32], strides = [1, 1]} : vector<8x128xf32> to vector<8x32xf32>
    %cst_18 = arith.constant 5.000000e-01 : f32
    %49 = vector.broadcast %cst_18 : f32 to vector<8x32xf32>
    %50 = arith.mulf %49, %48 : vector<8x32xf32>
    %cst_19 = arith.constant 5.000000e-01 : f32
    %51 = vector.broadcast %cst_19 : f32 to vector<8x32xf32>
    %52 = arith.addf %50, %51 : vector<8x32xf32>
    %53 = vector.extract_strided_slice %42 {offsets = [0, 64], sizes = [8, 32], strides = [1, 1]} : vector<8x128xf32> to vector<8x32xf32>
    %54 = vector.extract_strided_slice %42 {offsets = [0, 96], sizes = [8, 32], strides = [1, 1]} : vector<8x128xf32> to vector<8x32xf32>
    %cst_20 = arith.constant 5.000000e-01 : f32
    %55 = vector.broadcast %cst_20 : f32 to vector<8x32xf32>
    %56 = arith.mulf %55, %54 : vector<8x32xf32>
    %cst_21 = arith.constant 5.000000e-01 : f32
    %57 = vector.broadcast %cst_21 : f32 to vector<8x32xf32>
    %58 = arith.addf %56, %57 : vector<8x32xf32>
    %59 = arith.mulf %52, %39 : vector<8x32xf32>
    %60 = arith.mulf %47, %53 : vector<8x32xf32>
    %61 = arith.addf %59, %60 : vector<8x32xf32>
    %62 = math.tanh %61 : vector<8x32xf32>
    %63 = arith.mulf %58, %62 : vector<8x32xf32>
    %c0_22 = arith.constant 0 : index
    %c0_23 = arith.constant 0 : index
    %64 = vector.load %arg3[%c0_22, %c0_23] : memref<64x32xf32, #tpu.memory_space<vmem>>, vector<8x32xf32>
    tpu.vector_store %arg3[%c0_22, %c0_23], %63 {strides = array<i32>} : memref<64x32xf32, #tpu.memory_space<vmem>>, vector<8x32xf32>,
    %cst_24 = arith.constant dense<0.000000e+00> : vector<8x128xf32>
    %65 = tpu.matmul %63, %4, %cst_24 {dimension_numbers = #tpu.dot_dimension_numbers<[1], [0], [0], [1], [0, 0, 1, 1], [], []>} : vector<8x32xf32>, vector<32x128xf32>, vector<8x128xf32> -> vector<8x128xf32>
    %66 = arith.addf %13, %65 : vector<8x128xf32>
    %67 = math.tanh %66 : vector<8x128xf32>
    %68 = vector.extract_strided_slice %67 {offsets = [0, 0], sizes = [8, 32], strides = [1, 1]} : vector<8x128xf32> to vector<8x32xf32>
    %cst_25 = arith.constant 5.000000e-01 : f32
    %69 = vector.broadcast %cst_25 : f32 to vector<8x32xf32>
    %70 = arith.mulf %69, %68 : vector<8x32xf32>
    %cst_26 = arith.constant 5.000000e-01 : f32
    %71 = vector.broadcast %cst_26 : f32 to vector<8x32xf32>
    %72 = arith.addf %70, %71 : vector<8x32xf32>
    %73 = vector.extract_strided_slice %67 {offsets = [0, 32], sizes = [8, 32], strides = [1, 1]} : vector<8x128xf32> to vector<8x32xf32>
    %cst_27 = arith.constant 5.000000e-01 : f32
    %74 = vector.broadcast %cst_27 : f32 to vector<8x32xf32>
    %75 = arith.mulf %74, %73 : vector<8x32xf32>
    %cst_28 = arith.constant 5.000000e-01 : f32
    %76 = vector.broadcast %cst_28 : f32 to vector<8x32xf32>
    %77 = arith.addf %75, %76 : vector<8x32xf32>
    %78 = vector.extract_strided_slice %67 {offsets = [0, 64], sizes = [8, 32], strides = [1, 1]} : vector<8x128xf32> to vector<8x32xf32>
    %79 = vector.extract_strided_slice %67 {offsets = [0, 96], sizes = [8, 32], strides = [1, 1]} : vector<8x128xf32> to vector<8x32xf32>
    %cst_29 = arith.constant 5.000000e-01 : f32
    %80 = vector.broadcast %cst_29 : f32 to vector<8x32xf32>
    %81 = arith.mulf %80, %79 : vector<8x32xf32>
    %cst_30 = arith.constant 5.000000e-01 : f32
    %82 = vector.broadcast %cst_30 : f32 to vector<8x32xf32>
    %83 = arith.addf %81, %82 : vector<8x32xf32>
    %84 = arith.mulf %77, %61 : vector<8x32xf32>
    %85 = arith.mulf %72, %78 : vector<8x32xf32>
    %86 = arith.addf %84, %85 : vector<8x32xf32>
    %87 = math.tanh %86 : vector<8x32xf32>
    %88 = arith.mulf %83, %87 : vector<8x32xf32>
    %c8_31 = arith.constant 8 : index
    %c0_32 = arith.constant 0 : index
    %89 = vector.load %arg3[%c8_31, %c0_32] : memref<64x32xf32, #tpu.memory_space<vmem>>, vector<8x32xf32>
    tpu.vector_store %arg3[%c8_31, %c0_32], %88 {strides = array<i32>} : memref<64x32xf32, #tpu.memory_space<vmem>>, vector<8x32xf32>,
    %cst_33 = arith.constant dense<0.000000e+00> : vector<8x128xf32>
    %90 = tpu.matmul %88, %4, %cst_33 {dimension_numbers = #tpu.dot_dimension_numbers<[1], [0], [0], [1], [0, 0, 1, 1], [], []>} : vector<8x32xf32>, vector<32x128xf32>, vector<8x128xf32> -> vector<8x128xf32>
    %91 = arith.addf %17, %90 : vector<8x128xf32>
    %92 = math.tanh %91 : vector<8x128xf32>
    %93 = vector.extract_strided_slice %92 {offsets = [0, 0], sizes = [8, 32], strides = [1, 1]} : vector<8x128xf32> to vector<8x32xf32>
    %cst_34 = arith.constant 5.000000e-01 : f32
    %94 = vector.broadcast %cst_34 : f32 to vector<8x32xf32>
    %95 = arith.mulf %94, %93 : vector<8x32xf32>
    %cst_35 = arith.constant 5.000000e-01 : f32
    %96 = vector.broadcast %cst_35 : f32 to vector<8x32xf32>
    %97 = arith.addf %95, %96 : vector<8x32xf32>
    %98 = vector.extract_strided_slice %92 {offsets = [0, 32], sizes = [8, 32], strides = [1, 1]} : vector<8x128xf32> to vector<8x32xf32>
    %cst_36 = arith.constant 5.000000e-01 : f32
    %99 = vector.broadcast %cst_36 : f32 to vector<8x32xf32>
    %100 = arith.mulf %99, %98 : vector<8x32xf32>
    %cst_37 = arith.constant 5.000000e-01 : f32
    %101 = vector.broadcast %cst_37 : f32 to vector<8x32xf32>
    %102 = arith.addf %100, %101 : vector<8x32xf32>
    %103 = vector.extract_strided_slice %92 {offsets = [0, 64], sizes = [8, 32], strides = [1, 1]} : vector<8x128xf32> to vector<8x32xf32>
    %104 = vector.extract_strided_slice %92 {offsets = [0, 96], sizes = [8, 32], strides = [1, 1]} : vector<8x128xf32> to vector<8x32xf32>
    %cst_38 = arith.constant 5.000000e-01 : f32
    %105 = vector.broadcast %cst_38 : f32 to vector<8x32xf32>
    %106 = arith.mulf %105, %104 : vector<8x32xf32>
    %cst_39 = arith.constant 5.000000e-01 : f32
    %107 = vector.broadcast %cst_39 : f32 to vector<8x32xf32>
    %108 = arith.addf %106, %107 : vector<8x32xf32>
    %109 = arith.mulf %102, %86 : vector<8x32xf32>
    %110 = arith.mulf %97, %103 : vector<8x32xf32>
    %111 = arith.addf %109, %110 : vector<8x32xf32>
    %112 = math.tanh %111 : vector<8x32xf32>
    %113 = arith.mulf %108, %112 : vector<8x32xf32>
    %c16 = arith.constant 16 : index
    %c0_40 = arith.constant 0 : index
    %114 = vector.load %arg3[%c16, %c0_40] : memref<64x32xf32, #tpu.memory_space<vmem>>, vector<8x32xf32>
    tpu.vector_store %arg3[%c16, %c0_40], %113 {strides = array<i32>} : memref<64x32xf32, #tpu.memory_space<vmem>>, vector<8x32xf32>,
    %cst_41 = arith.constant dense<0.000000e+00> : vector<8x128xf32>
    %115 = tpu.matmul %113, %4, %cst_41 {dimension_numbers = #tpu.dot_dimension_numbers<[1], [0], [0], [1], [0, 0, 1, 1], [], []>} : vector<8x32xf32>, vector<32x128xf32>, vector<8x128xf32> -> vector<8x128xf32>
    %116 = arith.addf %21, %115 : vector<8x128xf32>
    %117 = math.tanh %116 : vector<8x128xf32>
    %118 = vector.extract_strided_slice %117 {offsets = [0, 0], sizes = [8, 32], strides = [1, 1]} : vector<8x128xf32> to vector<8x32xf32>
    %cst_42 = arith.constant 5.000000e-01 : f32
    %119 = vector.broadcast %cst_42 : f32 to vector<8x32xf32>
    %120 = arith.mulf %119, %118 : vector<8x32xf32>
    %cst_43 = arith.constant 5.000000e-01 : f32
    %121 = vector.broadcast %cst_43 : f32 to vector<8x32xf32>
    %122 = arith.addf %120, %121 : vector<8x32xf32>
    %123 = vector.extract_strided_slice %117 {offsets = [0, 32], sizes = [8, 32], strides = [1, 1]} : vector<8x128xf32> to vector<8x32xf32>
    %cst_44 = arith.constant 5.000000e-01 : f32
    %124 = vector.broadcast %cst_44 : f32 to vector<8x32xf32>
    %125 = arith.mulf %124, %123 : vector<8x32xf32>
    %cst_45 = arith.constant 5.000000e-01 : f32
    %126 = vector.broadcast %cst_45 : f32 to vector<8x32xf32>
    %127 = arith.addf %125, %126 : vector<8x32xf32>
    %128 = vector.extract_strided_slice %117 {offsets = [0, 64], sizes = [8, 32], strides = [1, 1]} : vector<8x128xf32> to vector<8x32xf32>
    %129 = vector.extract_strided_slice %117 {offsets = [0, 96], sizes = [8, 32], strides = [1, 1]} : vector<8x128xf32> to vector<8x32xf32>
    %cst_46 = arith.constant 5.000000e-01 : f32
    %130 = vector.broadcast %cst_46 : f32 to vector<8x32xf32>
    %131 = arith.mulf %130, %129 : vector<8x32xf32>
    %cst_47 = arith.constant 5.000000e-01 : f32
    %132 = vector.broadcast %cst_47 : f32 to vector<8x32xf32>
    %133 = arith.addf %131, %132 : vector<8x32xf32>
    %134 = arith.mulf %127, %111 : vector<8x32xf32>
    %135 = arith.mulf %122, %128 : vector<8x32xf32>
    %136 = arith.addf %134, %135 : vector<8x32xf32>
    %137 = math.tanh %136 : vector<8x32xf32>
    %138 = arith.mulf %133, %137 : vector<8x32xf32>
    %c24 = arith.constant 24 : index
    %c0_48 = arith.constant 0 : index
    %139 = vector.load %arg3[%c24, %c0_48] : memref<64x32xf32, #tpu.memory_space<vmem>>, vector<8x32xf32>
    tpu.vector_store %arg3[%c24, %c0_48], %138 {strides = array<i32>} : memref<64x32xf32, #tpu.memory_space<vmem>>, vector<8x32xf32>,
    %cst_49 = arith.constant dense<0.000000e+00> : vector<8x128xf32>
    %140 = tpu.matmul %138, %4, %cst_49 {dimension_numbers = #tpu.dot_dimension_numbers<[1], [0], [0], [1], [0, 0, 1, 1], [], []>} : vector<8x32xf32>, vector<32x128xf32>, vector<8x128xf32> -> vector<8x128xf32>
    %141 = arith.addf %25, %140 : vector<8x128xf32>
    %142 = math.tanh %141 : vector<8x128xf32>
    %143 = vector.extract_strided_slice %142 {offsets = [0, 0], sizes = [8, 32], strides = [1, 1]} : vector<8x128xf32> to vector<8x32xf32>
    %cst_50 = arith.constant 5.000000e-01 : f32
    %144 = vector.broadcast %cst_50 : f32 to vector<8x32xf32>
    %145 = arith.mulf %144, %143 : vector<8x32xf32>
    %cst_51 = arith.constant 5.000000e-01 : f32
    %146 = vector.broadcast %cst_51 : f32 to vector<8x32xf32>
    %147 = arith.addf %145, %146 : vector<8x32xf32>
    %148 = vector.extract_strided_slice %142 {offsets = [0, 32], sizes = [8, 32], strides = [1, 1]} : vector<8x128xf32> to vector<8x32xf32>
    %cst_52 = arith.constant 5.000000e-01 : f32
    %149 = vector.broadcast %cst_52 : f32 to vector<8x32xf32>
    %150 = arith.mulf %149, %148 : vector<8x32xf32>
    %cst_53 = arith.constant 5.000000e-01 : f32
    %151 = vector.broadcast %cst_53 : f32 to vector<8x32xf32>
    %152 = arith.addf %150, %151 : vector<8x32xf32>
    %153 = vector.extract_strided_slice %142 {offsets = [0, 64], sizes = [8, 32], strides = [1, 1]} : vector<8x128xf32> to vector<8x32xf32>
    %154 = vector.extract_strided_slice %142 {offsets = [0, 96], sizes = [8, 32], strides = [1, 1]} : vector<8x128xf32> to vector<8x32xf32>
    %cst_54 = arith.constant 5.000000e-01 : f32
    %155 = vector.broadcast %cst_54 : f32 to vector<8x32xf32>
    %156 = arith.mulf %155, %154 : vector<8x32xf32>
    %cst_55 = arith.constant 5.000000e-01 : f32
    %157 = vector.broadcast %cst_55 : f32 to vector<8x32xf32>
    %158 = arith.addf %156, %157 : vector<8x32xf32>
    %159 = arith.mulf %152, %136 : vector<8x32xf32>
    %160 = arith.mulf %147, %153 : vector<8x32xf32>
    %161 = arith.addf %159, %160 : vector<8x32xf32>
    %162 = math.tanh %161 : vector<8x32xf32>
    %163 = arith.mulf %158, %162 : vector<8x32xf32>
    %c32 = arith.constant 32 : index
    %c0_56 = arith.constant 0 : index
    %164 = vector.load %arg3[%c32, %c0_56] : memref<64x32xf32, #tpu.memory_space<vmem>>, vector<8x32xf32>
    tpu.vector_store %arg3[%c32, %c0_56], %163 {strides = array<i32>} : memref<64x32xf32, #tpu.memory_space<vmem>>, vector<8x32xf32>,
    %cst_57 = arith.constant dense<0.000000e+00> : vector<8x128xf32>
    %165 = tpu.matmul %163, %4, %cst_57 {dimension_numbers = #tpu.dot_dimension_numbers<[1], [0], [0], [1], [0, 0, 1, 1], [], []>} : vector<8x32xf32>, vector<32x128xf32>, vector<8x128xf32> -> vector<8x128xf32>
    %166 = arith.addf %29, %165 : vector<8x128xf32>
    %167 = math.tanh %166 : vector<8x128xf32>
    %168 = vector.extract_strided_slice %167 {offsets = [0, 0], sizes = [8, 32], strides = [1, 1]} : vector<8x128xf32> to vector<8x32xf32>
    %cst_58 = arith.constant 5.000000e-01 : f32
    %169 = vector.broadcast %cst_58 : f32 to vector<8x32xf32>
    %170 = arith.mulf %169, %168 : vector<8x32xf32>
    %cst_59 = arith.constant 5.000000e-01 : f32
    %171 = vector.broadcast %cst_59 : f32 to vector<8x32xf32>
    %172 = arith.addf %170, %171 : vector<8x32xf32>
    %173 = vector.extract_strided_slice %167 {offsets = [0, 32], sizes = [8, 32], strides = [1, 1]} : vector<8x128xf32> to vector<8x32xf32>
    %cst_60 = arith.constant 5.000000e-01 : f32
    %174 = vector.broadcast %cst_60 : f32 to vector<8x32xf32>
    %175 = arith.mulf %174, %173 : vector<8x32xf32>
    %cst_61 = arith.constant 5.000000e-01 : f32
    %176 = vector.broadcast %cst_61 : f32 to vector<8x32xf32>
    %177 = arith.addf %175, %176 : vector<8x32xf32>
    %178 = vector.extract_strided_slice %167 {offsets = [0, 64], sizes = [8, 32], strides = [1, 1]} : vector<8x128xf32> to vector<8x32xf32>
    %179 = vector.extract_strided_slice %167 {offsets = [0, 96], sizes = [8, 32], strides = [1, 1]} : vector<8x128xf32> to vector<8x32xf32>
    %cst_62 = arith.constant 5.000000e-01 : f32
    %180 = vector.broadcast %cst_62 : f32 to vector<8x32xf32>
    %181 = arith.mulf %180, %179 : vector<8x32xf32>
    %cst_63 = arith.constant 5.000000e-01 : f32
    %182 = vector.broadcast %cst_63 : f32 to vector<8x32xf32>
    %183 = arith.addf %181, %182 : vector<8x32xf32>
    %184 = arith.mulf %177, %161 : vector<8x32xf32>
    %185 = arith.mulf %172, %178 : vector<8x32xf32>
    %186 = arith.addf %184, %185 : vector<8x32xf32>
    %187 = math.tanh %186 : vector<8x32xf32>
    %188 = arith.mulf %183, %187 : vector<8x32xf32>
    %c40_64 = arith.constant 40 : index
    %c0_65 = arith.constant 0 : index
    %189 = vector.load %arg3[%c40_64, %c0_65] : memref<64x32xf32, #tpu.memory_space<vmem>>, vector<8x32xf32>
    tpu.vector_store %arg3[%c40_64, %c0_65], %188 {strides = array<i32>} : memref<64x32xf32, #tpu.memory_space<vmem>>, vector<8x32xf32>,
    %cst_66 = arith.constant dense<0.000000e+00> : vector<8x128xf32>
    %190 = tpu.matmul %188, %4, %cst_66 {dimension_numbers = #tpu.dot_dimension_numbers<[1], [0], [0], [1], [0, 0, 1, 1], [], []>} : vector<8x32xf32>, vector<32x128xf32>, vector<8x128xf32> -> vector<8x128xf32>
    %191 = arith.addf %33, %190 : vector<8x128xf32>
    %192 = math.tanh %191 : vector<8x128xf32>
    %193 = vector.extract_strided_slice %192 {offsets = [0, 0], sizes = [8, 32], strides = [1, 1]} : vector<8x128xf32> to vector<8x32xf32>
    %cst_67 = arith.constant 5.000000e-01 : f32
    %194 = vector.broadcast %cst_67 : f32 to vector<8x32xf32>
    %195 = arith.mulf %194, %193 : vector<8x32xf32>
    %cst_68 = arith.constant 5.000000e-01 : f32
    %196 = vector.broadcast %cst_68 : f32 to vector<8x32xf32>
    %197 = arith.addf %195, %196 : vector<8x32xf32>
    %198 = vector.extract_strided_slice %192 {offsets = [0, 32], sizes = [8, 32], strides = [1, 1]} : vector<8x128xf32> to vector<8x32xf32>
    %cst_69 = arith.constant 5.000000e-01 : f32
    %199 = vector.broadcast %cst_69 : f32 to vector<8x32xf32>
    %200 = arith.mulf %199, %198 : vector<8x32xf32>
    %cst_70 = arith.constant 5.000000e-01 : f32
    %201 = vector.broadcast %cst_70 : f32 to vector<8x32xf32>
    %202 = arith.addf %200, %201 : vector<8x32xf32>
    %203 = vector.extract_strided_slice %192 {offsets = [0, 64], sizes = [8, 32], strides = [1, 1]} : vector<8x128xf32> to vector<8x32xf32>
    %204 = vector.extract_strided_slice %192 {offsets = [0, 96], sizes = [8, 32], strides = [1, 1]} : vector<8x128xf32> to vector<8x32xf32>
    %cst_71 = arith.constant 5.000000e-01 : f32
    %205 = vector.broadcast %cst_71 : f32 to vector<8x32xf32>
    %206 = arith.mulf %205, %204 : vector<8x32xf32>
    %cst_72 = arith.constant 5.000000e-01 : f32
    %207 = vector.broadcast %cst_72 : f32 to vector<8x32xf32>
    %208 = arith.addf %206, %207 : vector<8x32xf32>
    %209 = arith.mulf %202, %186 : vector<8x32xf32>
    %210 = arith.mulf %197, %203 : vector<8x32xf32>
    %211 = arith.addf %209, %210 : vector<8x32xf32>
    %212 = math.tanh %211 : vector<8x32xf32>
    %213 = arith.mulf %208, %212 : vector<8x32xf32>
    %c48 = arith.constant 48 : index
    %c0_73 = arith.constant 0 : index
    %214 = vector.load %arg3[%c48, %c0_73] : memref<64x32xf32, #tpu.memory_space<vmem>>, vector<8x32xf32>
    tpu.vector_store %arg3[%c48, %c0_73], %213 {strides = array<i32>} : memref<64x32xf32, #tpu.memory_space<vmem>>, vector<8x32xf32>,
    %cst_74 = arith.constant dense<0.000000e+00> : vector<8x128xf32>
    %215 = tpu.matmul %213, %4, %cst_74 {dimension_numbers = #tpu.dot_dimension_numbers<[1], [0], [0], [1], [0, 0, 1, 1], [], []>} : vector<8x32xf32>, vector<32x128xf32>, vector<8x128xf32> -> vector<8x128xf32>
    %216 = arith.addf %37, %215 : vector<8x128xf32>
    %217 = math.tanh %216 : vector<8x128xf32>
    %218 = vector.extract_strided_slice %217 {offsets = [0, 0], sizes = [8, 32], strides = [1, 1]} : vector<8x128xf32> to vector<8x32xf32>
    %cst_75 = arith.constant 5.000000e-01 : f32
    %219 = vector.broadcast %cst_75 : f32 to vector<8x32xf32>
    %220 = arith.mulf %219, %218 : vector<8x32xf32>
    %cst_76 = arith.constant 5.000000e-01 : f32
    %221 = vector.broadcast %cst_76 : f32 to vector<8x32xf32>
    %222 = arith.addf %220, %221 : vector<8x32xf32>
    %223 = vector.extract_strided_slice %217 {offsets = [0, 32], sizes = [8, 32], strides = [1, 1]} : vector<8x128xf32> to vector<8x32xf32>
    %cst_77 = arith.constant 5.000000e-01 : f32
    %224 = vector.broadcast %cst_77 : f32 to vector<8x32xf32>
    %225 = arith.mulf %224, %223 : vector<8x32xf32>
    %cst_78 = arith.constant 5.000000e-01 : f32
    %226 = vector.broadcast %cst_78 : f32 to vector<8x32xf32>
    %227 = arith.addf %225, %226 : vector<8x32xf32>
    %228 = vector.extract_strided_slice %217 {offsets = [0, 64], sizes = [8, 32], strides = [1, 1]} : vector<8x128xf32> to vector<8x32xf32>
    %229 = vector.extract_strided_slice %217 {offsets = [0, 96], sizes = [8, 32], strides = [1, 1]} : vector<8x128xf32> to vector<8x32xf32>
    %cst_79 = arith.constant 5.000000e-01 : f32
    %230 = vector.broadcast %cst_79 : f32 to vector<8x32xf32>
    %231 = arith.mulf %230, %229 : vector<8x32xf32>
    %cst_80 = arith.constant 5.000000e-01 : f32
    %232 = vector.broadcast %cst_80 : f32 to vector<8x32xf32>
    %233 = arith.addf %231, %232 : vector<8x32xf32>
    %234 = arith.mulf %227, %211 : vector<8x32xf32>
    %235 = arith.mulf %222, %228 : vector<8x32xf32>
    %236 = arith.addf %234, %235 : vector<8x32xf32>
    %237 = math.tanh %236 : vector<8x32xf32>
    %238 = arith.mulf %233, %237 : vector<8x32xf32>
    %c56 = arith.constant 56 : index
    %c0_81 = arith.constant 0 : index
    %239 = vector.load %arg3[%c56, %c0_81] : memref<64x32xf32, #tpu.memory_space<vmem>>, vector<8x32xf32>
    tpu.vector_store %arg3[%c56, %c0_81], %238 {strides = array<i32>} : memref<64x32xf32, #tpu.memory_space<vmem>>, vector<8x32xf32>,
    %c0_82 = arith.constant 0 : index
    %c0_83 = arith.constant 0 : index
    %240 = vector.load %arg3[%c0_82, %c0_83] : memref<64x32xf32, #tpu.memory_space<vmem>>, vector<64x32xf32>
    %c120 = arith.constant 120 : index
    %c0_84 = arith.constant 0 : index
    %241 = vector.load %arg1[%c120, %c0_84] : memref<240x128xf32, #tpu.memory_space<vmem>>, vector<32x32xf32>
    %cst_85 = arith.constant dense<0.000000e+00> : vector<64x32xf32>
    %242 = tpu.matmul %240, %241, %cst_85 {dimension_numbers = #tpu.dot_dimension_numbers<[1], [0], [0], [1], [0, 0, 1, 1], [], []>} : vector<64x32xf32>, vector<32x32xf32>, vector<64x32xf32> -> vector<64x32xf32>
    %c152 = arith.constant 152 : index
    %c0_86 = arith.constant 0 : index
    %243 = vector.load %arg1[%c152, %c0_86] : memref<240x128xf32, #tpu.memory_space<vmem>>, vector<1x32xf32>
    %244 = vector.broadcast %243 : vector<1x32xf32> to vector<64x32xf32>
    %245 = arith.addf %242, %244 : vector<64x32xf32>
    %cst_87 = arith.constant 0.000000e+00 : f32
    %246 = vector.broadcast %cst_87 : f32 to vector<64x32xf32>
    %247 = arith.maximumf %245, %246 : vector<64x32xf32>
    %c160 = arith.constant 160 : index
    %c0_88 = arith.constant 0 : index
    %248 = vector.load %arg1[%c160, %c0_88] : memref<240x128xf32, #tpu.memory_space<vmem>>, vector<32x8xf32>
    %cst_89 = arith.constant dense<0.000000e+00> : vector<64x8xf32>
    %249 = tpu.matmul %247, %248, %cst_89 {dimension_numbers = #tpu.dot_dimension_numbers<[1], [0], [0], [1], [0, 0, 1, 1], [], []>} : vector<64x32xf32>, vector<32x8xf32>, vector<64x8xf32> -> vector<64x8xf32>
    %c192 = arith.constant 192 : index
    %c0_90 = arith.constant 0 : index
    %250 = vector.load %arg1[%c192, %c0_90] : memref<240x128xf32, #tpu.memory_space<vmem>>, vector<1x8xf32>
    %251 = vector.broadcast %250 : vector<1x8xf32> to vector<64x8xf32>
    %252 = arith.addf %249, %251 : vector<64x8xf32>
    %253 = vector.extract_strided_slice %2 {offsets = [0, 8], sizes = [8, 8], strides = [1, 1]} : vector<8x64xf32> to vector<8x8xf32>
    %c0_91 = arith.constant 0 : index
    %c64 = arith.constant 64 : index
    %254 = vector.load %arg2[%c0_91, %c64] : memref<8x128xf32, #tpu.memory_space<vmem>>, vector<8x8xf32>
    tpu.vector_store %arg2[%c0_91, %c64], %253 {strides = array<i32>} : memref<8x128xf32, #tpu.memory_space<vmem>>, vector<8x8xf32>,
    %255 = vector.extract_strided_slice %252 {offsets = [0, 0], sizes = [8, 8], strides = [1, 1]} : vector<64x8xf32> to vector<8x8xf32>
    %c0_92 = arith.constant 0 : index
    %c72 = arith.constant 72 : index
    %256 = vector.load %arg2[%c0_92, %c72] : memref<8x128xf32, #tpu.memory_space<vmem>>, vector<8x8xf32>
    tpu.vector_store %arg2[%c0_92, %c72], %255 {strides = array<i32>} : memref<8x128xf32, #tpu.memory_space<vmem>>, vector<8x8xf32>,
    %257 = vector.extract_strided_slice %252 {offsets = [8, 0], sizes = [8, 8], strides = [1, 1]} : vector<64x8xf32> to vector<8x8xf32>
    %c0_93 = arith.constant 0 : index
    %c80 = arith.constant 80 : index
    %258 = vector.load %arg2[%c0_93, %c80] : memref<8x128xf32, #tpu.memory_space<vmem>>, vector<8x8xf32>
    tpu.vector_store %arg2[%c0_93, %c80], %257 {strides = array<i32>} : memref<8x128xf32, #tpu.memory_space<vmem>>, vector<8x8xf32>,
    %259 = vector.extract_strided_slice %252 {offsets = [16, 0], sizes = [8, 8], strides = [1, 1]} : vector<64x8xf32> to vector<8x8xf32>
    %c0_94 = arith.constant 0 : index
    %c88 = arith.constant 88 : index
    %260 = vector.load %arg2[%c0_94, %c88] : memref<8x128xf32, #tpu.memory_space<vmem>>, vector<8x8xf32>
    tpu.vector_store %arg2[%c0_94, %c88], %259 {strides = array<i32>} : memref<8x128xf32, #tpu.memory_space<vmem>>, vector<8x8xf32>,
    %261 = vector.extract_strided_slice %252 {offsets = [24, 0], sizes = [8, 8], strides = [1, 1]} : vector<64x8xf32> to vector<8x8xf32>
    %c0_95 = arith.constant 0 : index
    %c96 = arith.constant 96 : index
    %262 = vector.load %arg2[%c0_95, %c96] : memref<8x128xf32, #tpu.memory_space<vmem>>, vector<8x8xf32>
    tpu.vector_store %arg2[%c0_95, %c96], %261 {strides = array<i32>} : memref<8x128xf32, #tpu.memory_space<vmem>>, vector<8x8xf32>,
    %263 = vector.extract_strided_slice %252 {offsets = [32, 0], sizes = [8, 8], strides = [1, 1]} : vector<64x8xf32> to vector<8x8xf32>
    %c0_96 = arith.constant 0 : index
    %c104 = arith.constant 104 : index
    %264 = vector.load %arg2[%c0_96, %c104] : memref<8x128xf32, #tpu.memory_space<vmem>>, vector<8x8xf32>
    tpu.vector_store %arg2[%c0_96, %c104], %263 {strides = array<i32>} : memref<8x128xf32, #tpu.memory_space<vmem>>, vector<8x8xf32>,
    %265 = vector.extract_strided_slice %252 {offsets = [40, 0], sizes = [8, 8], strides = [1, 1]} : vector<64x8xf32> to vector<8x8xf32>
    %c0_97 = arith.constant 0 : index
    %c112 = arith.constant 112 : index
    %266 = vector.load %arg2[%c0_97, %c112] : memref<8x128xf32, #tpu.memory_space<vmem>>, vector<8x8xf32>
    tpu.vector_store %arg2[%c0_97, %c112], %265 {strides = array<i32>} : memref<8x128xf32, #tpu.memory_space<vmem>>, vector<8x8xf32>,
    %267 = vector.extract_strided_slice %252 {offsets = [48, 0], sizes = [8, 8], strides = [1, 1]} : vector<64x8xf32> to vector<8x8xf32>
    %c0_98 = arith.constant 0 : index
    %c120_99 = arith.constant 120 : index
    %268 = vector.load %arg2[%c0_98, %c120_99] : memref<8x128xf32, #tpu.memory_space<vmem>>, vector<8x8xf32>
    tpu.vector_store %arg2[%c0_98, %c120_99], %267 {strides = array<i32>} : memref<8x128xf32, #tpu.memory_space<vmem>>, vector<8x8xf32>,
    %c48_100 = arith.constant 48 : index
    %c0_101 = arith.constant 0 : index
    %269 = vector.load %arg1[%c48_100, %c0_101] : memref<240x128xf32, #tpu.memory_space<vmem>>, vector<32x128xf32>
    %c80_102 = arith.constant 80 : index
    %c0_103 = arith.constant 0 : index
    %270 = vector.load %arg1[%c80_102, %c0_103] : memref<240x128xf32, #tpu.memory_space<vmem>>, vector<32x128xf32>
    %c112_104 = arith.constant 112 : index
    %c0_105 = arith.constant 0 : index
    %271 = vector.load %arg1[%c112_104, %c0_105] : memref<240x128xf32, #tpu.memory_space<vmem>>, vector<1x128xf32>
    %cst_106 = arith.constant dense<0.000000e+00> : vector<8x128xf32>
    %272 = tpu.matmul %238, %269, %cst_106 {dimension_numbers = #tpu.dot_dimension_numbers<[1], [0], [0], [1], [0, 0, 1, 1], [], []>} : vector<8x32xf32>, vector<32x128xf32>, vector<8x128xf32> -> vector<8x128xf32>
    %273 = vector.broadcast %271 : vector<1x128xf32> to vector<8x128xf32>
    %274 = arith.addf %272, %273 : vector<8x128xf32>
    %cst_107 = arith.constant 0.000000e+00 : f32
    %275 = vector.broadcast %cst_107 : f32 to vector<8x32xf32>
    %cst_108 = arith.constant 0.000000e+00 : f32
    %276 = vector.broadcast %cst_108 : f32 to vector<8x32xf32>
    %cst_109 = arith.constant dense<0.000000e+00> : vector<8x128xf32>
    %277 = tpu.matmul %275, %270, %cst_109 {dimension_numbers = #tpu.dot_dimension_numbers<[1], [0], [0], [1], [0, 0, 1, 1], [], []>} : vector<8x32xf32>, vector<32x128xf32>, vector<8x128xf32> -> vector<8x128xf32>
    %278 = arith.addf %274, %277 : vector<8x128xf32>
    %279 = math.tanh %278 : vector<8x128xf32>
    %280 = vector.extract_strided_slice %279 {offsets = [0, 0], sizes = [8, 32], strides = [1, 1]} : vector<8x128xf32> to vector<8x32xf32>
    %cst_110 = arith.constant 5.000000e-01 : f32
    %281 = vector.broadcast %cst_110 : f32 to vector<8x32xf32>
    %282 = arith.mulf %281, %280 : vector<8x32xf32>
    %cst_111 = arith.constant 5.000000e-01 : f32
    %283 = vector.broadcast %cst_111 : f32 to vector<8x32xf32>
    %284 = arith.addf %282, %283 : vector<8x32xf32>
    %285 = vector.extract_strided_slice %279 {offsets = [0, 32], sizes = [8, 32], strides = [1, 1]} : vector<8x128xf32> to vector<8x32xf32>
    %cst_112 = arith.constant 5.000000e-01 : f32
    %286 = vector.broadcast %cst_112 : f32 to vector<8x32xf32>
    %287 = arith.mulf %286, %285 : vector<8x32xf32>
    %cst_113 = arith.constant 5.000000e-01 : f32
    %288 = vector.broadcast %cst_113 : f32 to vector<8x32xf32>
    %289 = arith.addf %287, %288 : vector<8x32xf32>
    %290 = vector.extract_strided_slice %279 {offsets = [0, 64], sizes = [8, 32], strides = [1, 1]} : vector<8x128xf32> to vector<8x32xf32>
    %291 = vector.extract_strided_slice %279 {offsets = [0, 96], sizes = [8, 32], strides = [1, 1]} : vector<8x128xf32> to vector<8x32xf32>
    %cst_114 = arith.constant 5.000000e-01 : f32
    %292 = vector.broadcast %cst_114 : f32 to vector<8x32xf32>
    %293 = arith.mulf %292, %291 : vector<8x32xf32>
    %cst_115 = arith.constant 5.000000e-01 : f32
    %294 = vector.broadcast %cst_115 : f32 to vector<8x32xf32>
    %295 = arith.addf %293, %294 : vector<8x32xf32>
    %296 = arith.mulf %289, %276 : vector<8x32xf32>
    %297 = arith.mulf %284, %290 : vector<8x32xf32>
    %298 = arith.addf %296, %297 : vector<8x32xf32>
    %299 = math.tanh %298 : vector<8x32xf32>
    %300 = arith.mulf %295, %299 : vector<8x32xf32>
    %c0_116 = arith.constant 0 : index
    %c0_117 = arith.constant 0 : index
    %301 = vector.load %arg4[%c0_116, %c0_117] : memref<64x32xf32, #tpu.memory_space<vmem>>, vector<8x32xf32>
    tpu.vector_store %arg4[%c0_116, %c0_117], %300 {strides = array<i32>} : memref<64x32xf32, #tpu.memory_space<vmem>>, vector<8x32xf32>,
    %cst_118 = arith.constant dense<0.000000e+00> : vector<8x128xf32>
    %302 = tpu.matmul %300, %270, %cst_118 {dimension_numbers = #tpu.dot_dimension_numbers<[1], [0], [0], [1], [0, 0, 1, 1], [], []>} : vector<8x32xf32>, vector<32x128xf32>, vector<8x128xf32> -> vector<8x128xf32>
    %303 = arith.addf %274, %302 : vector<8x128xf32>
    %304 = math.tanh %303 : vector<8x128xf32>
    %305 = vector.extract_strided_slice %304 {offsets = [0, 0], sizes = [8, 32], strides = [1, 1]} : vector<8x128xf32> to vector<8x32xf32>
    %cst_119 = arith.constant 5.000000e-01 : f32
    %306 = vector.broadcast %cst_119 : f32 to vector<8x32xf32>
    %307 = arith.mulf %306, %305 : vector<8x32xf32>
    %cst_120 = arith.constant 5.000000e-01 : f32
    %308 = vector.broadcast %cst_120 : f32 to vector<8x32xf32>
    %309 = arith.addf %307, %308 : vector<8x32xf32>
    %310 = vector.extract_strided_slice %304 {offsets = [0, 32], sizes = [8, 32], strides = [1, 1]} : vector<8x128xf32> to vector<8x32xf32>
    %cst_121 = arith.constant 5.000000e-01 : f32
    %311 = vector.broadcast %cst_121 : f32 to vector<8x32xf32>
    %312 = arith.mulf %311, %310 : vector<8x32xf32>
    %cst_122 = arith.constant 5.000000e-01 : f32
    %313 = vector.broadcast %cst_122 : f32 to vector<8x32xf32>
    %314 = arith.addf %312, %313 : vector<8x32xf32>
    %315 = vector.extract_strided_slice %304 {offsets = [0, 64], sizes = [8, 32], strides = [1, 1]} : vector<8x128xf32> to vector<8x32xf32>
    %316 = vector.extract_strided_slice %304 {offsets = [0, 96], sizes = [8, 32], strides = [1, 1]} : vector<8x128xf32> to vector<8x32xf32>
    %cst_123 = arith.constant 5.000000e-01 : f32
    %317 = vector.broadcast %cst_123 : f32 to vector<8x32xf32>
    %318 = arith.mulf %317, %316 : vector<8x32xf32>
    %cst_124 = arith.constant 5.000000e-01 : f32
    %319 = vector.broadcast %cst_124 : f32 to vector<8x32xf32>
    %320 = arith.addf %318, %319 : vector<8x32xf32>
    %321 = arith.mulf %314, %298 : vector<8x32xf32>
    %322 = arith.mulf %309, %315 : vector<8x32xf32>
    %323 = arith.addf %321, %322 : vector<8x32xf32>
    %324 = math.tanh %323 : vector<8x32xf32>
    %325 = arith.mulf %320, %324 : vector<8x32xf32>
    %c8_125 = arith.constant 8 : index
    %c0_126 = arith.constant 0 : index
    %326 = vector.load %arg4[%c8_125, %c0_126] : memref<64x32xf32, #tpu.memory_space<vmem>>, vector<8x32xf32>
    tpu.vector_store %arg4[%c8_125, %c0_126], %325 {strides = array<i32>} : memref<64x32xf32, #tpu.memory_space<vmem>>, vector<8x32xf32>,
    %cst_127 = arith.constant dense<0.000000e+00> : vector<8x128xf32>
    %327 = tpu.matmul %325, %270, %cst_127 {dimension_numbers = #tpu.dot_dimension_numbers<[1], [0], [0], [1], [0, 0, 1, 1], [], []>} : vector<8x32xf32>, vector<32x128xf32>, vector<8x128xf32> -> vector<8x128xf32>
    %328 = arith.addf %274, %327 : vector<8x128xf32>
    %329 = math.tanh %328 : vector<8x128xf32>
    %330 = vector.extract_strided_slice %329 {offsets = [0, 0], sizes = [8, 32], strides = [1, 1]} : vector<8x128xf32> to vector<8x32xf32>
    %cst_128 = arith.constant 5.000000e-01 : f32
    %331 = vector.broadcast %cst_128 : f32 to vector<8x32xf32>
    %332 = arith.mulf %331, %330 : vector<8x32xf32>
    %cst_129 = arith.constant 5.000000e-01 : f32
    %333 = vector.broadcast %cst_129 : f32 to vector<8x32xf32>
    %334 = arith.addf %332, %333 : vector<8x32xf32>
    %335 = vector.extract_strided_slice %329 {offsets = [0, 32], sizes = [8, 32], strides = [1, 1]} : vector<8x128xf32> to vector<8x32xf32>
    %cst_130 = arith.constant 5.000000e-01 : f32
    %336 = vector.broadcast %cst_130 : f32 to vector<8x32xf32>
    %337 = arith.mulf %336, %335 : vector<8x32xf32>
    %cst_131 = arith.constant 5.000000e-01 : f32
    %338 = vector.broadcast %cst_131 : f32 to vector<8x32xf32>
    %339 = arith.addf %337, %338 : vector<8x32xf32>
    %340 = vector.extract_strided_slice %329 {offsets = [0, 64], sizes = [8, 32], strides = [1, 1]} : vector<8x128xf32> to vector<8x32xf32>
    %341 = vector.extract_strided_slice %329 {offsets = [0, 96], sizes = [8, 32], strides = [1, 1]} : vector<8x128xf32> to vector<8x32xf32>
    %cst_132 = arith.constant 5.000000e-01 : f32
    %342 = vector.broadcast %cst_132 : f32 to vector<8x32xf32>
    %343 = arith.mulf %342, %341 : vector<8x32xf32>
    %cst_133 = arith.constant 5.000000e-01 : f32
    %344 = vector.broadcast %cst_133 : f32 to vector<8x32xf32>
    %345 = arith.addf %343, %344 : vector<8x32xf32>
    %346 = arith.mulf %339, %323 : vector<8x32xf32>
    %347 = arith.mulf %334, %340 : vector<8x32xf32>
    %348 = arith.addf %346, %347 : vector<8x32xf32>
    %349 = math.tanh %348 : vector<8x32xf32>
    %350 = arith.mulf %345, %349 : vector<8x32xf32>
    %c16_134 = arith.constant 16 : index
    %c0_135 = arith.constant 0 : index
    %351 = vector.load %arg4[%c16_134, %c0_135] : memref<64x32xf32, #tpu.memory_space<vmem>>, vector<8x32xf32>
    tpu.vector_store %arg4[%c16_134, %c0_135], %350 {strides = array<i32>} : memref<64x32xf32, #tpu.memory_space<vmem>>, vector<8x32xf32>,
    %cst_136 = arith.constant dense<0.000000e+00> : vector<8x128xf32>
    %352 = tpu.matmul %350, %270, %cst_136 {dimension_numbers = #tpu.dot_dimension_numbers<[1], [0], [0], [1], [0, 0, 1, 1], [], []>} : vector<8x32xf32>, vector<32x128xf32>, vector<8x128xf32> -> vector<8x128xf32>
    %353 = arith.addf %274, %352 : vector<8x128xf32>
    %354 = math.tanh %353 : vector<8x128xf32>
    %355 = vector.extract_strided_slice %354 {offsets = [0, 0], sizes = [8, 32], strides = [1, 1]} : vector<8x128xf32> to vector<8x32xf32>
    %cst_137 = arith.constant 5.000000e-01 : f32
    %356 = vector.broadcast %cst_137 : f32 to vector<8x32xf32>
    %357 = arith.mulf %356, %355 : vector<8x32xf32>
    %cst_138 = arith.constant 5.000000e-01 : f32
    %358 = vector.broadcast %cst_138 : f32 to vector<8x32xf32>
    %359 = arith.addf %357, %358 : vector<8x32xf32>
    %360 = vector.extract_strided_slice %354 {offsets = [0, 32], sizes = [8, 32], strides = [1, 1]} : vector<8x128xf32> to vector<8x32xf32>
    %cst_139 = arith.constant 5.000000e-01 : f32
    %361 = vector.broadcast %cst_139 : f32 to vector<8x32xf32>
    %362 = arith.mulf %361, %360 : vector<8x32xf32>
    %cst_140 = arith.constant 5.000000e-01 : f32
    %363 = vector.broadcast %cst_140 : f32 to vector<8x32xf32>
    %364 = arith.addf %362, %363 : vector<8x32xf32>
    %365 = vector.extract_strided_slice %354 {offsets = [0, 64], sizes = [8, 32], strides = [1, 1]} : vector<8x128xf32> to vector<8x32xf32>
    %366 = vector.extract_strided_slice %354 {offsets = [0, 96], sizes = [8, 32], strides = [1, 1]} : vector<8x128xf32> to vector<8x32xf32>
    %cst_141 = arith.constant 5.000000e-01 : f32
    %367 = vector.broadcast %cst_141 : f32 to vector<8x32xf32>
    %368 = arith.mulf %367, %366 : vector<8x32xf32>
    %cst_142 = arith.constant 5.000000e-01 : f32
    %369 = vector.broadcast %cst_142 : f32 to vector<8x32xf32>
    %370 = arith.addf %368, %369 : vector<8x32xf32>
    %371 = arith.mulf %364, %348 : vector<8x32xf32>
    %372 = arith.mulf %359, %365 : vector<8x32xf32>
    %373 = arith.addf %371, %372 : vector<8x32xf32>
    %374 = math.tanh %373 : vector<8x32xf32>
    %375 = arith.mulf %370, %374 : vector<8x32xf32>
    %c24_143 = arith.constant 24 : index
    %c0_144 = arith.constant 0 : index
    %376 = vector.load %arg4[%c24_143, %c0_144] : memref<64x32xf32, #tpu.memory_space<vmem>>, vector<8x32xf32>
    tpu.vector_store %arg4[%c24_143, %c0_144], %375 {strides = array<i32>} : memref<64x32xf32, #tpu.memory_space<vmem>>, vector<8x32xf32>,
    %cst_145 = arith.constant dense<0.000000e+00> : vector<8x128xf32>
    %377 = tpu.matmul %375, %270, %cst_145 {dimension_numbers = #tpu.dot_dimension_numbers<[1], [0], [0], [1], [0, 0, 1, 1], [], []>} : vector<8x32xf32>, vector<32x128xf32>, vector<8x128xf32> -> vector<8x128xf32>
    %378 = arith.addf %274, %377 : vector<8x128xf32>
    %379 = math.tanh %378 : vector<8x128xf32>
    %380 = vector.extract_strided_slice %379 {offsets = [0, 0], sizes = [8, 32], strides = [1, 1]} : vector<8x128xf32> to vector<8x32xf32>
    %cst_146 = arith.constant 5.000000e-01 : f32
    %381 = vector.broadcast %cst_146 : f32 to vector<8x32xf32>
    %382 = arith.mulf %381, %380 : vector<8x32xf32>
    %cst_147 = arith.constant 5.000000e-01 : f32
    %383 = vector.broadcast %cst_147 : f32 to vector<8x32xf32>
    %384 = arith.addf %382, %383 : vector<8x32xf32>
    %385 = vector.extract_strided_slice %379 {offsets = [0, 32], sizes = [8, 32], strides = [1, 1]} : vector<8x128xf32> to vector<8x32xf32>
    %cst_148 = arith.constant 5.000000e-01 : f32
    %386 = vector.broadcast %cst_148 : f32 to vector<8x32xf32>
    %387 = arith.mulf %386, %385 : vector<8x32xf32>
    %cst_149 = arith.constant 5.000000e-01 : f32
    %388 = vector.broadcast %cst_149 : f32 to vector<8x32xf32>
    %389 = arith.addf %387, %388 : vector<8x32xf32>
    %390 = vector.extract_strided_slice %379 {offsets = [0, 64], sizes = [8, 32], strides = [1, 1]} : vector<8x128xf32> to vector<8x32xf32>
    %391 = vector.extract_strided_slice %379 {offsets = [0, 96], sizes = [8, 32], strides = [1, 1]} : vector<8x128xf32> to vector<8x32xf32>
    %cst_150 = arith.constant 5.000000e-01 : f32
    %392 = vector.broadcast %cst_150 : f32 to vector<8x32xf32>
    %393 = arith.mulf %392, %391 : vector<8x32xf32>
    %cst_151 = arith.constant 5.000000e-01 : f32
    %394 = vector.broadcast %cst_151 : f32 to vector<8x32xf32>
    %395 = arith.addf %393, %394 : vector<8x32xf32>
    %396 = arith.mulf %389, %373 : vector<8x32xf32>
    %397 = arith.mulf %384, %390 : vector<8x32xf32>
    %398 = arith.addf %396, %397 : vector<8x32xf32>
    %399 = math.tanh %398 : vector<8x32xf32>
    %400 = arith.mulf %395, %399 : vector<8x32xf32>
    %c32_152 = arith.constant 32 : index
    %c0_153 = arith.constant 0 : index
    %401 = vector.load %arg4[%c32_152, %c0_153] : memref<64x32xf32, #tpu.memory_space<vmem>>, vector<8x32xf32>
    tpu.vector_store %arg4[%c32_152, %c0_153], %400 {strides = array<i32>} : memref<64x32xf32, #tpu.memory_space<vmem>>, vector<8x32xf32>,
    %cst_154 = arith.constant dense<0.000000e+00> : vector<8x128xf32>
    %402 = tpu.matmul %400, %270, %cst_154 {dimension_numbers = #tpu.dot_dimension_numbers<[1], [0], [0], [1], [0, 0, 1, 1], [], []>} : vector<8x32xf32>, vector<32x128xf32>, vector<8x128xf32> -> vector<8x128xf32>
    %403 = arith.addf %274, %402 : vector<8x128xf32>
    %404 = math.tanh %403 : vector<8x128xf32>
    %405 = vector.extract_strided_slice %404 {offsets = [0, 0], sizes = [8, 32], strides = [1, 1]} : vector<8x128xf32> to vector<8x32xf32>
    %cst_155 = arith.constant 5.000000e-01 : f32
    %406 = vector.broadcast %cst_155 : f32 to vector<8x32xf32>
    %407 = arith.mulf %406, %405 : vector<8x32xf32>
    %cst_156 = arith.constant 5.000000e-01 : f32
    %408 = vector.broadcast %cst_156 : f32 to vector<8x32xf32>
    %409 = arith.addf %407, %408 : vector<8x32xf32>
    %410 = vector.extract_strided_slice %404 {offsets = [0, 32], sizes = [8, 32], strides = [1, 1]} : vector<8x128xf32> to vector<8x32xf32>
    %cst_157 = arith.constant 5.000000e-01 : f32
    %411 = vector.broadcast %cst_157 : f32 to vector<8x32xf32>
    %412 = arith.mulf %411, %410 : vector<8x32xf32>
    %cst_158 = arith.constant 5.000000e-01 : f32
    %413 = vector.broadcast %cst_158 : f32 to vector<8x32xf32>
    %414 = arith.addf %412, %413 : vector<8x32xf32>
    %415 = vector.extract_strided_slice %404 {offsets = [0, 64], sizes = [8, 32], strides = [1, 1]} : vector<8x128xf32> to vector<8x32xf32>
    %416 = vector.extract_strided_slice %404 {offsets = [0, 96], sizes = [8, 32], strides = [1, 1]} : vector<8x128xf32> to vector<8x32xf32>
    %cst_159 = arith.constant 5.000000e-01 : f32
    %417 = vector.broadcast %cst_159 : f32 to vector<8x32xf32>
    %418 = arith.mulf %417, %416 : vector<8x32xf32>
    %cst_160 = arith.constant 5.000000e-01 : f32
    %419 = vector.broadcast %cst_160 : f32 to vector<8x32xf32>
    %420 = arith.addf %418, %419 : vector<8x32xf32>
    %421 = arith.mulf %414, %398 : vector<8x32xf32>
    %422 = arith.mulf %409, %415 : vector<8x32xf32>
    %423 = arith.addf %421, %422 : vector<8x32xf32>
    %424 = math.tanh %423 : vector<8x32xf32>
    %425 = arith.mulf %420, %424 : vector<8x32xf32>
    %c40_161 = arith.constant 40 : index
    %c0_162 = arith.constant 0 : index
    %426 = vector.load %arg4[%c40_161, %c0_162] : memref<64x32xf32, #tpu.memory_space<vmem>>, vector<8x32xf32>
    tpu.vector_store %arg4[%c40_161, %c0_162], %425 {strides = array<i32>} : memref<64x32xf32, #tpu.memory_space<vmem>>, vector<8x32xf32>,
    %cst_163 = arith.constant dense<0.000000e+00> : vector<8x128xf32>
    %427 = tpu.matmul %425, %270, %cst_163 {dimension_numbers = #tpu.dot_dimension_numbers<[1], [0], [0], [1], [0, 0, 1, 1], [], []>} : vector<8x32xf32>, vector<32x128xf32>, vector<8x128xf32> -> vector<8x128xf32>
    %428 = arith.addf %274, %427 : vector<8x128xf32>
    %429 = math.tanh %428 : vector<8x128xf32>
    %430 = vector.extract_strided_slice %429 {offsets = [0, 0], sizes = [8, 32], strides = [1, 1]} : vector<8x128xf32> to vector<8x32xf32>
    %cst_164 = arith.constant 5.000000e-01 : f32
    %431 = vector.broadcast %cst_164 : f32 to vector<8x32xf32>
    %432 = arith.mulf %431, %430 : vector<8x32xf32>
    %cst_165 = arith.constant 5.000000e-01 : f32
    %433 = vector.broadcast %cst_165 : f32 to vector<8x32xf32>
    %434 = arith.addf %432, %433 : vector<8x32xf32>
    %435 = vector.extract_strided_slice %429 {offsets = [0, 32], sizes = [8, 32], strides = [1, 1]} : vector<8x128xf32> to vector<8x32xf32>
    %cst_166 = arith.constant 5.000000e-01 : f32
    %436 = vector.broadcast %cst_166 : f32 to vector<8x32xf32>
    %437 = arith.mulf %436, %435 : vector<8x32xf32>
    %cst_167 = arith.constant 5.000000e-01 : f32
    %438 = vector.broadcast %cst_167 : f32 to vector<8x32xf32>
    %439 = arith.addf %437, %438 : vector<8x32xf32>
    %440 = vector.extract_strided_slice %429 {offsets = [0, 64], sizes = [8, 32], strides = [1, 1]} : vector<8x128xf32> to vector<8x32xf32>
    %441 = vector.extract_strided_slice %429 {offsets = [0, 96], sizes = [8, 32], strides = [1, 1]} : vector<8x128xf32> to vector<8x32xf32>
    %cst_168 = arith.constant 5.000000e-01 : f32
    %442 = vector.broadcast %cst_168 : f32 to vector<8x32xf32>
    %443 = arith.mulf %442, %441 : vector<8x32xf32>
    %cst_169 = arith.constant 5.000000e-01 : f32
    %444 = vector.broadcast %cst_169 : f32 to vector<8x32xf32>
    %445 = arith.addf %443, %444 : vector<8x32xf32>
    %446 = arith.mulf %439, %423 : vector<8x32xf32>
    %447 = arith.mulf %434, %440 : vector<8x32xf32>
    %448 = arith.addf %446, %447 : vector<8x32xf32>
    %449 = math.tanh %448 : vector<8x32xf32>
    %450 = arith.mulf %445, %449 : vector<8x32xf32>
    %c48_170 = arith.constant 48 : index
    %c0_171 = arith.constant 0 : index
    %451 = vector.load %arg4[%c48_170, %c0_171] : memref<64x32xf32, #tpu.memory_space<vmem>>, vector<8x32xf32>
    tpu.vector_store %arg4[%c48_170, %c0_171], %450 {strides = array<i32>} : memref<64x32xf32, #tpu.memory_space<vmem>>, vector<8x32xf32>,
    %cst_172 = arith.constant dense<0.000000e+00> : vector<8x128xf32>
    %452 = tpu.matmul %450, %270, %cst_172 {dimension_numbers = #tpu.dot_dimension_numbers<[1], [0], [0], [1], [0, 0, 1, 1], [], []>} : vector<8x32xf32>, vector<32x128xf32>, vector<8x128xf32> -> vector<8x128xf32>
    %453 = arith.addf %274, %452 : vector<8x128xf32>
    %454 = math.tanh %453 : vector<8x128xf32>
    %455 = vector.extract_strided_slice %454 {offsets = [0, 0], sizes = [8, 32], strides = [1, 1]} : vector<8x128xf32> to vector<8x32xf32>
    %cst_173 = arith.constant 5.000000e-01 : f32
    %456 = vector.broadcast %cst_173 : f32 to vector<8x32xf32>
    %457 = arith.mulf %456, %455 : vector<8x32xf32>
    %cst_174 = arith.constant 5.000000e-01 : f32
    %458 = vector.broadcast %cst_174 : f32 to vector<8x32xf32>
    %459 = arith.addf %457, %458 : vector<8x32xf32>
    %460 = vector.extract_strided_slice %454 {offsets = [0, 32], sizes = [8, 32], strides = [1, 1]} : vector<8x128xf32> to vector<8x32xf32>
    %cst_175 = arith.constant 5.000000e-01 : f32
    %461 = vector.broadcast %cst_175 : f32 to vector<8x32xf32>
    %462 = arith.mulf %461, %460 : vector<8x32xf32>
    %cst_176 = arith.constant 5.000000e-01 : f32
    %463 = vector.broadcast %cst_176 : f32 to vector<8x32xf32>
    %464 = arith.addf %462, %463 : vector<8x32xf32>
    %465 = vector.extract_strided_slice %454 {offsets = [0, 64], sizes = [8, 32], strides = [1, 1]} : vector<8x128xf32> to vector<8x32xf32>
    %466 = vector.extract_strided_slice %454 {offsets = [0, 96], sizes = [8, 32], strides = [1, 1]} : vector<8x128xf32> to vector<8x32xf32>
    %cst_177 = arith.constant 5.000000e-01 : f32
    %467 = vector.broadcast %cst_177 : f32 to vector<8x32xf32>
    %468 = arith.mulf %467, %466 : vector<8x32xf32>
    %cst_178 = arith.constant 5.000000e-01 : f32
    %469 = vector.broadcast %cst_178 : f32 to vector<8x32xf32>
    %470 = arith.addf %468, %469 : vector<8x32xf32>
    %471 = arith.mulf %464, %448 : vector<8x32xf32>
    %472 = arith.mulf %459, %465 : vector<8x32xf32>
    %473 = arith.addf %471, %472 : vector<8x32xf32>
    %474 = math.tanh %473 : vector<8x32xf32>
    %475 = arith.mulf %470, %474 : vector<8x32xf32>
    %c56_179 = arith.constant 56 : index
    %c0_180 = arith.constant 0 : index
    %476 = vector.load %arg4[%c56_179, %c0_180] : memref<64x32xf32, #tpu.memory_space<vmem>>, vector<8x32xf32>
    tpu.vector_store %arg4[%c56_179, %c0_180], %475 {strides = array<i32>} : memref<64x32xf32, #tpu.memory_space<vmem>>, vector<8x32xf32>,
    %c0_181 = arith.constant 0 : index
    %c0_182 = arith.constant 0 : index
    %477 = vector.load %arg4[%c0_181, %c0_182] : memref<64x32xf32, #tpu.memory_space<vmem>>, vector<64x32xf32>
    %c200 = arith.constant 200 : index
    %c0_183 = arith.constant 0 : index
    %478 = vector.load %arg1[%c200, %c0_183] : memref<240x128xf32, #tpu.memory_space<vmem>>, vector<32x8xf32>
    %cst_184 = arith.constant dense<0.000000e+00> : vector<64x8xf32>
    %479 = tpu.matmul %477, %478, %cst_184 {dimension_numbers = #tpu.dot_dimension_numbers<[1], [0], [0], [1], [0, 0, 1, 1], [], []>} : vector<64x32xf32>, vector<32x8xf32>, vector<64x8xf32> -> vector<64x8xf32>
    %c232 = arith.constant 232 : index
    %c0_185 = arith.constant 0 : index
    %480 = vector.load %arg1[%c232, %c0_185] : memref<240x128xf32, #tpu.memory_space<vmem>>, vector<1x8xf32>
    %481 = vector.broadcast %480 : vector<1x8xf32> to vector<64x8xf32>
    %482 = arith.addf %479, %481 : vector<64x8xf32>
    %483 = vector.extract_strided_slice %482 {offsets = [0, 0], sizes = [8, 8], strides = [1, 1]} : vector<64x8xf32> to vector<8x8xf32>
    %c0_186 = arith.constant 0 : index
    %c0_187 = arith.constant 0 : index
    %484 = vector.load %arg2[%c0_186, %c0_187] : memref<8x128xf32, #tpu.memory_space<vmem>>, vector<8x8xf32>
    tpu.vector_store %arg2[%c0_186, %c0_187], %483 {strides = array<i32>} : memref<8x128xf32, #tpu.memory_space<vmem>>, vector<8x8xf32>,
    %485 = vector.extract_strided_slice %482 {offsets = [8, 0], sizes = [8, 8], strides = [1, 1]} : vector<64x8xf32> to vector<8x8xf32>
    %c0_188 = arith.constant 0 : index
    %c8_189 = arith.constant 8 : index
    %486 = vector.load %arg2[%c0_188, %c8_189] : memref<8x128xf32, #tpu.memory_space<vmem>>, vector<8x8xf32>
    tpu.vector_store %arg2[%c0_188, %c8_189], %485 {strides = array<i32>} : memref<8x128xf32, #tpu.memory_space<vmem>>, vector<8x8xf32>,
    %487 = vector.extract_strided_slice %482 {offsets = [16, 0], sizes = [8, 8], strides = [1, 1]} : vector<64x8xf32> to vector<8x8xf32>
    %c0_190 = arith.constant 0 : index
    %c16_191 = arith.constant 16 : index
    %488 = vector.load %arg2[%c0_190, %c16_191] : memref<8x128xf32, #tpu.memory_space<vmem>>, vector<8x8xf32>
    tpu.vector_store %arg2[%c0_190, %c16_191], %487 {strides = array<i32>} : memref<8x128xf32, #tpu.memory_space<vmem>>, vector<8x8xf32>,
    %489 = vector.extract_strided_slice %482 {offsets = [24, 0], sizes = [8, 8], strides = [1, 1]} : vector<64x8xf32> to vector<8x8xf32>
    %c0_192 = arith.constant 0 : index
    %c24_193 = arith.constant 24 : index
    %490 = vector.load %arg2[%c0_192, %c24_193] : memref<8x128xf32, #tpu.memory_space<vmem>>, vector<8x8xf32>
    tpu.vector_store %arg2[%c0_192, %c24_193], %489 {strides = array<i32>} : memref<8x128xf32, #tpu.memory_space<vmem>>, vector<8x8xf32>,
    %491 = vector.extract_strided_slice %482 {offsets = [32, 0], sizes = [8, 8], strides = [1, 1]} : vector<64x8xf32> to vector<8x8xf32>
    %c0_194 = arith.constant 0 : index
    %c32_195 = arith.constant 32 : index
    %492 = vector.load %arg2[%c0_194, %c32_195] : memref<8x128xf32, #tpu.memory_space<vmem>>, vector<8x8xf32>
    tpu.vector_store %arg2[%c0_194, %c32_195], %491 {strides = array<i32>} : memref<8x128xf32, #tpu.memory_space<vmem>>, vector<8x8xf32>,
    %493 = vector.extract_strided_slice %482 {offsets = [40, 0], sizes = [8, 8], strides = [1, 1]} : vector<64x8xf32> to vector<8x8xf32>
    %c0_196 = arith.constant 0 : index
    %c40_197 = arith.constant 40 : index
    %494 = vector.load %arg2[%c0_196, %c40_197] : memref<8x128xf32, #tpu.memory_space<vmem>>, vector<8x8xf32>
    tpu.vector_store %arg2[%c0_196, %c40_197], %493 {strides = array<i32>} : memref<8x128xf32, #tpu.memory_space<vmem>>, vector<8x8xf32>,
    %495 = vector.extract_strided_slice %482 {offsets = [48, 0], sizes = [8, 8], strides = [1, 1]} : vector<64x8xf32> to vector<8x8xf32>
    %c0_198 = arith.constant 0 : index
    %c48_199 = arith.constant 48 : index
    %496 = vector.load %arg2[%c0_198, %c48_199] : memref<8x128xf32, #tpu.memory_space<vmem>>, vector<8x8xf32>
    tpu.vector_store %arg2[%c0_198, %c48_199], %495 {strides = array<i32>} : memref<8x128xf32, #tpu.memory_space<vmem>>, vector<8x8xf32>,
    %497 = vector.extract_strided_slice %482 {offsets = [56, 0], sizes = [8, 8], strides = [1, 1]} : vector<64x8xf32> to vector<8x8xf32>
    %c0_200 = arith.constant 0 : index
    %c56_201 = arith.constant 56 : index
    %498 = vector.load %arg2[%c0_200, %c56_201] : memref<8x128xf32, #tpu.memory_space<vmem>>, vector<8x8xf32>
    tpu.vector_store %arg2[%c0_200, %c56_201], %497 {strides = array<i32>} : memref<8x128xf32, #tpu.memory_space<vmem>>, vector<8x8xf32>,
    return
  }
}

</mosaic_0001>

<llo_original>
// kernel: forward.1
$region0: #{forward.1}
  #allocation0 [shape = 'u32[]', space=smem, size = 0x4, offset = 0x4, fixed_abs, tag = 'smem constant byte address 0x4 - core index']
  #allocation1 [shape = 'u32[144,128]{1,0:T(1,128)}', space=vmem, size = 0x12000, scoped, tag = 'internal scratch']
  #allocation2 [shape = 'f32[64,32]{1,0:T(8,128)}', space=vmem, size = 0x8000, scoped, tag = 'scratch operand']
  #allocation3 [shape = 'f32[64,32]{1,0:T(8,128)}', space=vmem, size = 0x8000, scoped, tag = 'scratch operand']
  %s0 = inlined_call_operand.vmem [shape: f32[2,64], index: 0, kind: input, shape index: {}]
  %s1 = inlined_call_operand.hbm [shape: f32[240,128], index: 1, kind: input, shape index: {}]
  %s2 = inlined_call_operand.vmem [shape: f32[8,128], index: 2, kind: output, shape index: {}]
  %s3 = sld [smem:[#allocation0]]
  $region22: #{forward.1} parent=0
    _
  %s5 = ssub.s32 1, %s3
  %s6 = scalar_select 0, %s5, %s3
  $region1: #{forward.1} parent=0
    #allocation4 [shape = 'u8[122880]{0}', space=vmem, size = 0x1e000, scoped, tag = 'input window, operand 1, single buffered']
    #allocation5 [shape = 's32[1]{0}', space=sflag, size = 0x4, scoped, tag = 'scoped memory for forward.1']
    %7 = vsyncpa [#allocation5], 0
    // Predicated region
    $region2: #{forward.1} parent=1 // pred_check
      _
    $region3: #{forward.1} parent=1 // pred_check_branch
      %9 = sbr.rel (0) target = $region5
    $region4: #{forward.1} parent=1 // pred_region
      _
    $region5: #{forward.1} parent=1 // pred_fallthru
      _
    // Predicated region
    $region6: #{forward.1} parent=1 // pred_check
      _
    $region7: #{forward.1} parent=1 // pred_check_branch
      %11 = sbr.rel (0) target = $region9
    $region8: #{forward.1} parent=1 // pred_region
      %s13 = ssub.s32 3840, 3840
      %14 = vsyncadd [#allocation5], %s13
      %s15 = sshll.u32 [#allocation4], 4
      %s16 = int_to_ptr.vmem [resolvable:$true] %s15
      %21 = dma.hbm_to_vmem [thread:$0]  %s1, 3840, %s16, [#allocation5], 128, 128, 8
    $region9: #{forward.1} parent=1 // pred_fallthru
      _
    // Predicated region
    $region10: #{forward.1} parent=1 // pred_check
      _
    $region11: #{forward.1} parent=1 // pred_check_branch
      %23 = sbr.rel (0) target = $region13
    $region12: #{forward.1} parent=1 // pred_region
      %24 = dma.done [#allocation5], 3840
    $region13: #{forward.1} parent=1 // pred_fallthru
      _
    %v25 = vld [vmem:[%s0] sm:$0x3]
    %vm26 = vcmask 1041408
    %v27 = vsel %vm26, %v25, 0.0
    %v28 = vld [vmem:[#allocation4] sm:$0xff]
    %v29 = vld [vmem:[#allocation4 + $0x8] sm:$0xff]
    %v30 = vld [vmem:[#allocation4 + $0x10] sm:$0xff]
    %v31 = vld [vmem:[#allocation4 + $0x18] sm:$0xff]
    %v32 = vld [vmem:[#allocation4 + $0x20] sm:$0xff]
    %v33 = vld [vmem:[#allocation4 + $0x28] sm:$0x1]
    %v34 = vlaneseq
    %v35 = vshrl.u32 %v34, 7
    %v36 = vsub.s32 0, %v35
    %v37 = vrot.slane %v33, %v36
    %vm38 = vcmask 64512
    %v40 = vsel %vm38, %v27, 0
    %42 = vmatprep.subr.mxu0 0.0
    %43 = vmatpush1.msra.mxu0 0.0
    %44 = vmatprep.subr.mxu0 0.0
    %45 = vmatpush1.msra.mxu0 0.0
    %46 = vmatprep.subr.mxu0 0.0
    %47 = vmatpush1.msra.mxu0 0.0
    %48 = vmatprep.subr.mxu0 0.0
    %49 = vmatpush1.msra.mxu0 0.0
    %50 = vmatprep.subr.mxu0 0.0
    %51 = vmatpush1.msra.mxu0 0.0
    %52 = vmatprep.subr.mxu0 0.0
    %53 = vmatpush1.msra.mxu0 0.0
    %54 = vmatprep.subr.mxu0 0.0
    %55 = vmatpush1.msra.mxu0 0.0
    %56 = vmatprep.subr.mxu0 0.0
    %57 = vmatpush1.msra.mxu0 0.0
    %58 = vmatprep.subr.mxu0 0.0
    %59 = vmatpush1.msra.mxu0 0.0
    %60 = vmatprep.subr.mxu0 0.0
    %61 = vmatpush1.msra.mxu0 0.0
    %62 = vmatprep.subr.mxu0 0.0
    %63 = vmatpush1.msra.mxu0 0.0
    %64 = vmatprep.subr.mxu0 0.0
    %65 = vmatpush1.msra.mxu0 0.0
    %66 = vmatprep.subr.mxu0 0.0
    %67 = vmatpush1.msra.mxu0 0.0
    %68 = vmatprep.subr.mxu0 0.0
    %69 = vmatpush1.msra.mxu0 0.0
    %70 = vmatprep.subr.mxu0 0.0
    %71 = vmatpush1.msra.mxu0 0.0
    %72 = vmatprep.subr.mxu0 0.0
    %73 = vmatpush1.msra.mxu0 %v28
    %74 = vmatprep.subr.mxu0 0.0
    %75 = vmatpush2.msra.mxu0 0.0
    %76 = vmatprep.subr.mxu0 0.0
    %77 = vmatpush2.msra.mxu0 0.0
    %78 = vmatprep.subr.mxu0 0.0
    %79 = vmatpush2.msra.mxu0 0.0
    %80 = vmatprep.subr.mxu0 0.0
    %81 = vmatpush2.msra.mxu0 0.0
    %82 = vmatprep.subr.mxu0 0.0
    %83 = vmatpush2.msra.mxu0 0.0
    %84 = vmatprep.subr.mxu0 0.0
    %85 = vmatpush2.msra.mxu0 0.0
    %86 = vmatprep.subr.mxu0 0.0
    %87 = vmatpush2.msra.mxu0 0.0
    %88 = vmatprep.subr.mxu0 0.0
    %89 = vmatpush2.msra.mxu0 0.0
    %90 = vmatprep.subr.mxu0 0.0
    %91 = vmatpush2.msra.mxu0 0.0
    %92 = vmatprep.subr.mxu0 0.0
    %93 = vmatpush2.msra.mxu0 0.0
    %94 = vmatprep.subr.mxu0 0.0
    %95 = vmatpush2.msra.mxu0 0.0
    %96 = vmatprep.subr.mxu0 0.0
    %97 = vmatpush2.msra.mxu0 0.0
    %98 = vmatprep.subr.mxu0 0.0
    %99 = vmatpush2.msra.mxu0 0.0
    %100 = vmatprep.subr.mxu0 0.0
    %101 = vmatpush2.msra.mxu0 0.0
    %102 = vmatprep.subr.mxu0 0.0
    %103 = vmatpush2.msra.mxu0 0.0
    %104 = vmatprep.subr.mxu0 0.0
    %105 = vmatpush2.msra.mxu0 0.0
    %106 = vmatprep.mubr.f32.mxu0 0.0
    %107 = vmatmul.mubr.f32.gmra.mxu0 %v40
    %v108 = vpop.f32.mrf.mxu0
    %v109 = vadd.f32 %v37, %v108
    %v110 = vpop.f32.mrf.mxu0
    %111 = vdwg.mxu0
    %112 = vrot.lane.b32.xlu0 %v27, 120
    %v113 = vpop.permute.xlu0 %112
    %v114 = vsel %vm38, %v113, 0
    %116 = vmatprep.subr.mxu0 0.0
    %117 = vmatpush1.msra.mxu0 0.0
    %118 = vmatprep.subr.mxu0 0.0
    %119 = vmatpush1.msra.mxu0 0.0
    %120 = vmatprep.subr.mxu0 0.0
    %121 = vmatpush1.msra.mxu0 0.0
    %122 = vmatprep.subr.mxu0 0.0
    %123 = vmatpush1.msra.mxu0 0.0
    %124 = vmatprep.subr.mxu0 0.0
    %125 = vmatpush1.msra.mxu0 0.0
    %126 = vmatprep.subr.mxu0 0.0
    %127 = vmatpush1.msra.mxu0 0.0
    %128 = vmatprep.subr.mxu0 0.0
    %129 = vmatpush1.msra.mxu0 0.0
    %130 = vmatprep.subr.mxu0 0.0
    %131 = vmatpush1.msra.mxu0 0.0
    %132 = vmatprep.subr.mxu0 0.0
    %133 = vmatpush1.msra.mxu0 0.0
    %134 = vmatprep.subr.mxu0 0.0
    %135 = vmatpush1.msra.mxu0 0.0
    %136 = vmatprep.subr.mxu0 0.0
    %137 = vmatpush1.msra.mxu0 0.0
    %138 = vmatprep.subr.mxu0 0.0
    %139 = vmatpush1.msra.mxu0 0.0
    %140 = vmatprep.subr.mxu0 0.0
    %141 = vmatpush1.msra.mxu0 0.0
    %142 = vmatprep.subr.mxu0 0.0
    %143 = vmatpush1.msra.mxu0 0.0
    %144 = vmatprep.subr.mxu0 0.0
    %145 = vmatpush1.msra.mxu0 0.0
    %146 = vmatprep.subr.mxu0 0.0
    %147 = vmatpush1.msra.mxu0 %v28
    %148 = vmatprep.subr.mxu0 0.0
    %149 = vmatpush2.msra.mxu0 0.0
    %150 = vmatprep.subr.mxu0 0.0
    %151 = vmatpush2.msra.mxu0 0.0
    %152 = vmatprep.subr.mxu0 0.0
    %153 = vmatpush2.msra.mxu0 0.0
    %154 = vmatprep.subr.mxu0 0.0
    %155 = vmatpush2.msra.mxu0 0.0
    %156 = vmatprep.subr.mxu0 0.0
    %157 = vmatpush2.msra.mxu0 0.0
    %158 = vmatprep.subr.mxu0 0.0
    %159 = vmatpush2.msra.mxu0 0.0
    %160 = vmatprep.subr.mxu0 0.0
    %161 = vmatpush2.msra.mxu0 0.0
    %162 = vmatprep.subr.mxu0 0.0
    %163 = vmatpush2.msra.mxu0 0.0
    %164 = vmatprep.subr.mxu0 0.0
    %165 = vmatpush2.msra.mxu0 0.0
    %166 = vmatprep.subr.mxu0 0.0
    %167 = vmatpush2.msra.mxu0 0.0
    %168 = vmatprep.subr.mxu0 0.0
    %169 = vmatpush2.msra.mxu0 0.0
    %170 = vmatprep.subr.mxu0 0.0
    %171 = vmatpush2.msra.mxu0 0.0
    %172 = vmatprep.subr.mxu0 0.0
    %173 = vmatpush2.msra.mxu0 0.0
    %174 = vmatprep.subr.mxu0 0.0
    %175 = vmatpush2.msra.mxu0 0.0
    %176 = vmatprep.subr.mxu0 0.0
    %177 = vmatpush2.msra.mxu0 0.0
    %178 = vmatprep.subr.mxu0 0.0
    %179 = vmatpush2.msra.mxu0 0.0
    %180 = vmatprep.mubr.f32.mxu0 0.0
    %181 = vmatmul.mubr.f32.gmra.mxu0 %v114
    %v182 = vpop.f32.mrf.mxu0
    %v183 = vadd.f32 %v37, %v182
    %v184 = vpop.f32.mrf.mxu0
    %185 = vdwg.mxu0
    %186 = vrot.lane.b32.xlu0 %v27, 112
    %v187 = vpop.permute.xlu0 %186
    %v188 = vsel %vm38, %v187, 0
    %190 = vmatprep.subr.mxu0 0.0
    %191 = vmatpush1.msra.mxu0 0.0
    %192 = vmatprep.subr.mxu0 0.0
    %193 = vmatpush1.msra.mxu0 0.0
    %194 = vmatprep.subr.mxu0 0.0
    %195 = vmatpush1.msra.mxu0 0.0
    %196 = vmatprep.subr.mxu0 0.0
    %197 = vmatpush1.msra.mxu0 0.0
    %198 = vmatprep.subr.mxu0 0.0
    %199 = vmatpush1.msra.mxu0 0.0
    %200 = vmatprep.subr.mxu0 0.0
    %201 = vmatpush1.msra.mxu0 0.0
    %202 = vmatprep.subr.mxu0 0.0
    %203 = vmatpush1.msra.mxu0 0.0
    %204 = vmatprep.subr.mxu0 0.0
    %205 = vmatpush1.msra.mxu0 0.0
    %206 = vmatprep.subr.mxu0 0.0
    %207 = vmatpush1.msra.mxu0 0.0
    %208 = vmatprep.subr.mxu0 0.0
    %209 = vmatpush1.msra.mxu0 0.0
    %210 = vmatprep.subr.mxu0 0.0
    %211 = vmatpush1.msra.mxu0 0.0
    %212 = vmatprep.subr.mxu0 0.0
    %213 = vmatpush1.msra.mxu0 0.0
    %214 = vmatprep.subr.mxu0 0.0
    %215 = vmatpush1.msra.mxu0 0.0
    %216 = vmatprep.subr.mxu0 0.0
    %217 = vmatpush1.msra.mxu0 0.0
    %218 = vmatprep.subr.mxu0 0.0
    %219 = vmatpush1.msra.mxu0 0.0
    %220 = vmatprep.subr.mxu0 0.0
    %221 = vmatpush1.msra.mxu0 %v28
    %222 = vmatprep.subr.mxu0 0.0
    %223 = vmatpush2.msra.mxu0 0.0
    %224 = vmatprep.subr.mxu0 0.0
    %225 = vmatpush2.msra.mxu0 0.0
    %226 = vmatprep.subr.mxu0 0.0
    %227 = vmatpush2.msra.mxu0 0.0
    %228 = vmatprep.subr.mxu0 0.0
    %229 = vmatpush2.msra.mxu0 0.0
    %230 = vmatprep.subr.mxu0 0.0
    %231 = vmatpush2.msra.mxu0 0.0
    %232 = vmatprep.subr.mxu0 0.0
    %233 = vmatpush2.msra.mxu0 0.0
    %234 = vmatprep.subr.mxu0 0.0
    %235 = vmatpush2.msra.mxu0 0.0
    %236 = vmatprep.subr.mxu0 0.0
    %237 = vmatpush2.msra.mxu0 0.0
    %238 = vmatprep.subr.mxu0 0.0
    %239 = vmatpush2.msra.mxu0 0.0
    %240 = vmatprep.subr.mxu0 0.0
    %241 = vmatpush2.msra.mxu0 0.0
    %242 = vmatprep.subr.mxu0 0.0
    %243 = vmatpush2.msra.mxu0 0.0
    %244 = vmatprep.subr.mxu0 0.0
    %245 = vmatpush2.msra.mxu0 0.0
    %246 = vmatprep.subr.mxu0 0.0
    %247 = vmatpush2.msra.mxu0 0.0
    %248 = vmatprep.subr.mxu0 0.0
    %249 = vmatpush2.msra.mxu0 0.0
    %250 = vmatprep.subr.mxu0 0.0
    %251 = vmatpush2.msra.mxu0 0.0
    %252 = vmatprep.subr.mxu0 0.0
    %253 = vmatpush2.msra.mxu0 0.0
    %254 = vmatprep.mubr.f32.mxu0 0.0
    %255 = vmatmul.mubr.f32.gmra.mxu0 %v188
    %v256 = vpop.f32.mrf.mxu0
    %v257 = vadd.f32 %v37, %v256
    %v258 = vpop.f32.mrf.mxu0
    %259 = vdwg.mxu0
    %260 = vrot.lane.b32.xlu0 %v27, 104
    %v261 = vpop.permute.xlu0 %260
    %v262 = vsel %vm38, %v261, 0
    %264 = vmatprep.subr.mxu0 0.0
    %265 = vmatpush1.msra.mxu0 0.0
    %266 = vmatprep.subr.mxu0 0.0
    %267 = vmatpush1.msra.mxu0 0.0
    %268 = vmatprep.subr.mxu0 0.0
    %269 = vmatpush1.msra.mxu0 0.0
    %270 = vmatprep.subr.mxu0 0.0
    %271 = vmatpush1.msra.mxu0 0.0
    %272 = vmatprep.subr.mxu0 0.0
    %273 = vmatpush1.msra.mxu0 0.0
    %274 = vmatprep.subr.mxu0 0.0
    %275 = vmatpush1.msra.mxu0 0.0
    %276 = vmatprep.subr.mxu0 0.0
    %277 = vmatpush1.msra.mxu0 0.0
    %278 = vmatprep.subr.mxu0 0.0
    %279 = vmatpush1.msra.mxu0 0.0
    %280 = vmatprep.subr.mxu0 0.0
    %281 = vmatpush1.msra.mxu0 0.0
    %282 = vmatprep.subr.mxu0 0.0
    %283 = vmatpush1.msra.mxu0 0.0
    %284 = vmatprep.subr.mxu0 0.0
    %285 = vmatpush1.msra.mxu0 0.0
    %286 = vmatprep.subr.mxu0 0.0
    %287 = vmatpush1.msra.mxu0 0.0
    %288 = vmatprep.subr.mxu0 0.0
    %289 = vmatpush1.msra.mxu0 0.0
    %290 = vmatprep.subr.mxu0 0.0
    %291 = vmatpush1.msra.mxu0 0.0
    %292 = vmatprep.subr.mxu0 0.0
    %293 = vmatpush1.msra.mxu0 0.0
    %294 = vmatprep.subr.mxu0 0.0
    %295 = vmatpush1.msra.mxu0 %v28
    %296 = vmatprep.subr.mxu0 0.0
    %297 = vmatpush2.msra.mxu0 0.0
    %298 = vmatprep.subr.mxu0 0.0
    %299 = vmatpush2.msra.mxu0 0.0
    %300 = vmatprep.subr.mxu0 0.0
    %301 = vmatpush2.msra.mxu0 0.0
    %302 = vmatprep.subr.mxu0 0.0
    %303 = vmatpush2.msra.mxu0 0.0
    %304 = vmatprep.subr.mxu0 0.0
    %305 = vmatpush2.msra.mxu0 0.0
    %306 = vmatprep.subr.mxu0 0.0
    %307 = vmatpush2.msra.mxu0 0.0
    %308 = vmatprep.subr.mxu0 0.0
    %309 = vmatpush2.msra.mxu0 0.0
    %310 = vmatprep.subr.mxu0 0.0
    %311 = vmatpush2.msra.mxu0 0.0
    %312 = vmatprep.subr.mxu0 0.0
    %313 = vmatpush2.msra.mxu0 0.0
    %314 = vmatprep.subr.mxu0 0.0
    %315 = vmatpush2.msra.mxu0 0.0
    %316 = vmatprep.subr.mxu0 0.0
    %317 = vmatpush2.msra.mxu0 0.0
    %318 = vmatprep.subr.mxu0 0.0
    %319 = vmatpush2.msra.mxu0 0.0
    %320 = vmatprep.subr.mxu0 0.0
    %321 = vmatpush2.msra.mxu0 0.0
    %322 = vmatprep.subr.mxu0 0.0
    %323 = vmatpush2.msra.mxu0 0.0
    %324 = vmatprep.subr.mxu0 0.0
    %325 = vmatpush2.msra.mxu0 0.0
    %326 = vmatprep.subr.mxu0 0.0
    %327 = vmatpush2.msra.mxu0 0.0
    %328 = vmatprep.mubr.f32.mxu0 0.0
    %329 = vmatmul.mubr.f32.gmra.mxu0 %v262
    %v330 = vpop.f32.mrf.mxu0
    %v331 = vadd.f32 %v37, %v330
    %v332 = vpop.f32.mrf.mxu0
    %333 = vdwg.mxu0
    %334 = vrot.lane.b32.xlu0 %v27, 96
    %v335 = vpop.permute.xlu0 %334
    %v336 = vsel %vm38, %v335, 0
    %338 = vmatprep.subr.mxu0 0.0
    %339 = vmatpush1.msra.mxu0 0.0
    %340 = vmatprep.subr.mxu0 0.0
    %341 = vmatpush1.msra.mxu0 0.0
    %342 = vmatprep.subr.mxu0 0.0
    %343 = vmatpush1.msra.mxu0 0.0
    %344 = vmatprep.subr.mxu0 0.0
    %345 = vmatpush1.msra.mxu0 0.0
    %346 = vmatprep.subr.mxu0 0.0
    %347 = vmatpush1.msra.mxu0 0.0
    %348 = vmatprep.subr.mxu0 0.0
    %349 = vmatpush1.msra.mxu0 0.0
    %350 = vmatprep.subr.mxu0 0.0
    %351 = vmatpush1.msra.mxu0 0.0
    %352 = vmatprep.subr.mxu0 0.0
    %353 = vmatpush1.msra.mxu0 0.0
    %354 = vmatprep.subr.mxu0 0.0
    %355 = vmatpush1.msra.mxu0 0.0
    %356 = vmatprep.subr.mxu0 0.0
    %357 = vmatpush1.msra.mxu0 0.0
    %358 = vmatprep.subr.mxu0 0.0
    %359 = vmatpush1.msra.mxu0 0.0
    %360 = vmatprep.subr.mxu0 0.0
    %361 = vmatpush1.msra.mxu0 0.0
    %362 = vmatprep.subr.mxu0 0.0
    %363 = vmatpush1.msra.mxu0 0.0
    %364 = vmatprep.subr.mxu0 0.0
    %365 = vmatpush1.msra.mxu0 0.0
    %366 = vmatprep.subr.mxu0 0.0
    %367 = vmatpush1.msra.mxu0 0.0
    %368 = vmatprep.subr.mxu0 0.0
    %369 = vmatpush1.msra.mxu0 %v28
    %370 = vmatprep.subr.mxu0 0.0
    %371 = vmatpush2.msra.mxu0 0.0
    %372 = vmatprep.subr.mxu0 0.0
    %373 = vmatpush2.msra.mxu0 0.0
    %374 = vmatprep.subr.mxu0 0.0
    %375 = vmatpush2.msra.mxu0 0.0
    %376 = vmatprep.subr.mxu0 0.0
    %377 = vmatpush2.msra.mxu0 0.0
    %378 = vmatprep.subr.mxu0 0.0
    %379 = vmatpush2.msra.mxu0 0.0
    %380 = vmatprep.subr.mxu0 0.0
    %381 = vmatpush2.msra.mxu0 0.0
    %382 = vmatprep.subr.mxu0 0.0
    %383 = vmatpush2.msra.mxu0 0.0
    %384 = vmatprep.subr.mxu0 0.0
    %385 = vmatpush2.msra.mxu0 0.0
    %386 = vmatprep.subr.mxu0 0.0
    %387 = vmatpush2.msra.mxu0 0.0
    %388 = vmatprep.subr.mxu0 0.0
    %389 = vmatpush2.msra.mxu0 0.0
    %390 = vmatprep.subr.mxu0 0.0
    %391 = vmatpush2.msra.mxu0 0.0
    %392 = vmatprep.subr.mxu0 0.0
    %393 = vmatpush2.msra.mxu0 0.0
    %394 = vmatprep.subr.mxu0 0.0
    %395 = vmatpush2.msra.mxu0 0.0
    %396 = vmatprep.subr.mxu0 0.0
    %397 = vmatpush2.msra.mxu0 0.0
    %398 = vmatprep.subr.mxu0 0.0
    %399 = vmatpush2.msra.mxu0 0.0
    %400 = vmatprep.subr.mxu0 0.0
    %401 = vmatpush2.msra.mxu0 0.0
    %402 = vmatprep.mubr.f32.mxu0 0.0
    %403 = vmatmul.mubr.f32.gmra.mxu0 %v336
    %v404 = vpop.f32.mrf.mxu0
    %v405 = vadd.f32 %v37, %v404
    %v406 = vpop.f32.mrf.mxu0
    %407 = vdwg.mxu0
    %408 = vrot.lane.b32.xlu0 %v27, 88
    %v409 = vpop.permute.xlu0 %408
    %v410 = vsel %vm38, %v409, 0
    %412 = vmatprep.subr.mxu0 0.0
    %413 = vmatpush1.msra.mxu0 0.0
    %414 = vmatprep.subr.mxu0 0.0
    %415 = vmatpush1.msra.mxu0 0.0
    %416 = vmatprep.subr.mxu0 0.0
    %417 = vmatpush1.msra.mxu0 0.0
    %418 = vmatprep.subr.mxu0 0.0
    %419 = vmatpush1.msra.mxu0 0.0
    %420 = vmatprep.subr.mxu0 0.0
    %421 = vmatpush1.msra.mxu0 0.0
    %422 = vmatprep.subr.mxu0 0.0
    %423 = vmatpush1.msra.mxu0 0.0
    %424 = vmatprep.subr.mxu0 0.0
    %425 = vmatpush1.msra.mxu0 0.0
    %426 = vmatprep.subr.mxu0 0.0
    %427 = vmatpush1.msra.mxu0 0.0
    %428 = vmatprep.subr.mxu0 0.0
    %429 = vmatpush1.msra.mxu0 0.0
    %430 = vmatprep.subr.mxu0 0.0
    %431 = vmatpush1.msra.mxu0 0.0
    %432 = vmatprep.subr.mxu0 0.0
    %433 = vmatpush1.msra.mxu0 0.0
    %434 = vmatprep.subr.mxu0 0.0
    %435 = vmatpush1.msra.mxu0 0.0
    %436 = vmatprep.subr.mxu0 0.0
    %437 = vmatpush1.msra.mxu0 0.0
    %438 = vmatprep.subr.mxu0 0.0
    %439 = vmatpush1.msra.mxu0 0.0
    %440 = vmatprep.subr.mxu0 0.0
    %441 = vmatpush1.msra.mxu0 0.0
    %442 = vmatprep.subr.mxu0 0.0
    %443 = vmatpush1.msra.mxu0 %v28
    %444 = vmatprep.subr.mxu0 0.0
    %445 = vmatpush2.msra.mxu0 0.0
    %446 = vmatprep.subr.mxu0 0.0
    %447 = vmatpush2.msra.mxu0 0.0
    %448 = vmatprep.subr.mxu0 0.0
    %449 = vmatpush2.msra.mxu0 0.0
    %450 = vmatprep.subr.mxu0 0.0
    %451 = vmatpush2.msra.mxu0 0.0
    %452 = vmatprep.subr.mxu0 0.0
    %453 = vmatpush2.msra.mxu0 0.0
    %454 = vmatprep.subr.mxu0 0.0
    %455 = vmatpush2.msra.mxu0 0.0
    %456 = vmatprep.subr.mxu0 0.0
    %457 = vmatpush2.msra.mxu0 0.0
    %458 = vmatprep.subr.mxu0 0.0
    %459 = vmatpush2.msra.mxu0 0.0
    %460 = vmatprep.subr.mxu0 0.0
    %461 = vmatpush2.msra.mxu0 0.0
    %462 = vmatprep.subr.mxu0 0.0
    %463 = vmatpush2.msra.mxu0 0.0
    %464 = vmatprep.subr.mxu0 0.0
    %465 = vmatpush2.msra.mxu0 0.0
    %466 = vmatprep.subr.mxu0 0.0
    %467 = vmatpush2.msra.mxu0 0.0
    %468 = vmatprep.subr.mxu0 0.0
    %469 = vmatpush2.msra.mxu0 0.0
    %470 = vmatprep.subr.mxu0 0.0
    %471 = vmatpush2.msra.mxu0 0.0
    %472 = vmatprep.subr.mxu0 0.0
    %473 = vmatpush2.msra.mxu0 0.0
    %474 = vmatprep.subr.mxu0 0.0
    %475 = vmatpush2.msra.mxu0 0.0
    %476 = vmatprep.mubr.f32.mxu0 0.0
    %477 = vmatmul.mubr.f32.gmra.mxu0 %v410
    %v478 = vpop.f32.mrf.mxu0
    %v479 = vadd.f32 %v37, %v478
    %v480 = vpop.f32.mrf.mxu0
    %481 = vdwg.mxu0
    %482 = vrot.lane.b32.xlu0 %v27, 80
    %v483 = vpop.permute.xlu0 %482
    %v484 = vsel %vm38, %v483, 0
    %486 = vmatprep.subr.mxu0 0.0
    %487 = vmatpush1.msra.mxu0 0.0
    %488 = vmatprep.subr.mxu0 0.0
    %489 = vmatpush1.msra.mxu0 0.0
    %490 = vmatprep.subr.mxu0 0.0
    %491 = vmatpush1.msra.mxu0 0.0
    %492 = vmatprep.subr.mxu0 0.0
    %493 = vmatpush1.msra.mxu0 0.0
    %494 = vmatprep.subr.mxu0 0.0
    %495 = vmatpush1.msra.mxu0 0.0
    %496 = vmatprep.subr.mxu0 0.0
    %497 = vmatpush1.msra.mxu0 0.0
    %498 = vmatprep.subr.mxu0 0.0
    %499 = vmatpush1.msra.mxu0 0.0
    %500 = vmatprep.subr.mxu0 0.0
    %501 = vmatpush1.msra.mxu0 0.0
    %502 = vmatprep.subr.mxu0 0.0
    %503 = vmatpush1.msra.mxu0 0.0
    %504 = vmatprep.subr.mxu0 0.0
    %505 = vmatpush1.msra.mxu0 0.0
    %506 = vmatprep.subr.mxu0 0.0
    %507 = vmatpush1.msra.mxu0 0.0
    %508 = vmatprep.subr.mxu0 0.0
    %509 = vmatpush1.msra.mxu0 0.0
    %510 = vmatprep.subr.mxu0 0.0
    %511 = vmatpush1.msra.mxu0 0.0
    %512 = vmatprep.subr.mxu0 0.0
    %513 = vmatpush1.msra.mxu0 0.0
    %514 = vmatprep.subr.mxu0 0.0
    %515 = vmatpush1.msra.mxu0 0.0
    %516 = vmatprep.subr.mxu0 0.0
    %517 = vmatpush1.msra.mxu0 %v28
    %518 = vmatprep.subr.mxu0 0.0
    %519 = vmatpush2.msra.mxu0 0.0
    %520 = vmatprep.subr.mxu0 0.0
    %521 = vmatpush2.msra.mxu0 0.0
    %522 = vmatprep.subr.mxu0 0.0
    %523 = vmatpush2.msra.mxu0 0.0
    %524 = vmatprep.subr.mxu0 0.0
    %525 = vmatpush2.msra.mxu0 0.0
    %526 = vmatprep.subr.mxu0 0.0
    %527 = vmatpush2.msra.mxu0 0.0
    %528 = vmatprep.subr.mxu0 0.0
    %529 = vmatpush2.msra.mxu0 0.0
    %530 = vmatprep.subr.mxu0 0.0
    %531 = vmatpush2.msra.mxu0 0.0
    %532 = vmatprep.subr.mxu0 0.0
    %533 = vmatpush2.msra.mxu0 0.0
    %534 = vmatprep.subr.mxu0 0.0
    %535 = vmatpush2.msra.mxu0 0.0
    %536 = vmatprep.subr.mxu0 0.0
    %537 = vmatpush2.msra.mxu0 0.0
    %538 = vmatprep.subr.mxu0 0.0
    %539 = vmatpush2.msra.mxu0 0.0
    %540 = vmatprep.subr.mxu0 0.0
    %541 = vmatpush2.msra.mxu0 0.0
    %542 = vmatprep.subr.mxu0 0.0
    %543 = vmatpush2.msra.mxu0 0.0
    %544 = vmatprep.subr.mxu0 0.0
    %545 = vmatpush2.msra.mxu0 0.0
    %546 = vmatprep.subr.mxu0 0.0
    %547 = vmatpush2.msra.mxu0 0.0
    %548 = vmatprep.subr.mxu0 0.0
    %549 = vmatpush2.msra.mxu0 0.0
    %550 = vmatprep.mubr.f32.mxu0 0.0
    %551 = vmatmul.mubr.f32.gmra.mxu0 %v484
    %v552 = vpop.f32.mrf.mxu0
    %v553 = vadd.f32 %v37, %v552
    %v554 = vpop.f32.mrf.mxu0
    %555 = vdwg.mxu0
    %556 = vrot.lane.b32.xlu0 %v27, 72
    %v557 = vpop.permute.xlu0 %556
    %v558 = vsel %vm38, %v557, 0
    %560 = vmatprep.subr.mxu0 0.0
    %561 = vmatpush1.msra.mxu0 0.0
    %562 = vmatprep.subr.mxu0 0.0
    %563 = vmatpush1.msra.mxu0 0.0
    %564 = vmatprep.subr.mxu0 0.0
    %565 = vmatpush1.msra.mxu0 0.0
    %566 = vmatprep.subr.mxu0 0.0
    %567 = vmatpush1.msra.mxu0 0.0
    %568 = vmatprep.subr.mxu0 0.0
    %569 = vmatpush1.msra.mxu0 0.0
    %570 = vmatprep.subr.mxu0 0.0
    %571 = vmatpush1.msra.mxu0 0.0
    %572 = vmatprep.subr.mxu0 0.0
    %573 = vmatpush1.msra.mxu0 0.0
    %574 = vmatprep.subr.mxu0 0.0
    %575 = vmatpush1.msra.mxu0 0.0
    %576 = vmatprep.subr.mxu0 0.0
    %577 = vmatpush1.msra.mxu0 0.0
    %578 = vmatprep.subr.mxu0 0.0
    %579 = vmatpush1.msra.mxu0 0.0
    %580 = vmatprep.subr.mxu0 0.0
    %581 = vmatpush1.msra.mxu0 0.0
    %582 = vmatprep.subr.mxu0 0.0
    %583 = vmatpush1.msra.mxu0 0.0
    %584 = vmatprep.subr.mxu0 0.0
    %585 = vmatpush1.msra.mxu0 0.0
    %586 = vmatprep.subr.mxu0 0.0
    %587 = vmatpush1.msra.mxu0 0.0
    %588 = vmatprep.subr.mxu0 0.0
    %589 = vmatpush1.msra.mxu0 0.0
    %590 = vmatprep.subr.mxu0 0.0
    %591 = vmatpush1.msra.mxu0 %v28
    %592 = vmatprep.subr.mxu0 0.0
    %593 = vmatpush2.msra.mxu0 0.0
    %594 = vmatprep.subr.mxu0 0.0
    %595 = vmatpush2.msra.mxu0 0.0
    %596 = vmatprep.subr.mxu0 0.0
    %597 = vmatpush2.msra.mxu0 0.0
    %598 = vmatprep.subr.mxu0 0.0
    %599 = vmatpush2.msra.mxu0 0.0
    %600 = vmatprep.subr.mxu0 0.0
    %601 = vmatpush2.msra.mxu0 0.0
    %602 = vmatprep.subr.mxu0 0.0
    %603 = vmatpush2.msra.mxu0 0.0
    %604 = vmatprep.subr.mxu0 0.0
    %605 = vmatpush2.msra.mxu0 0.0
    %606 = vmatprep.subr.mxu0 0.0
    %607 = vmatpush2.msra.mxu0 0.0
    %608 = vmatprep.subr.mxu0 0.0
    %609 = vmatpush2.msra.mxu0 0.0
    %610 = vmatprep.subr.mxu0 0.0
    %611 = vmatpush2.msra.mxu0 0.0
    %612 = vmatprep.subr.mxu0 0.0
    %613 = vmatpush2.msra.mxu0 0.0
    %614 = vmatprep.subr.mxu0 0.0
    %615 = vmatpush2.msra.mxu0 0.0
    %616 = vmatprep.subr.mxu0 0.0
    %617 = vmatpush2.msra.mxu0 0.0
    %618 = vmatprep.subr.mxu0 0.0
    %619 = vmatpush2.msra.mxu0 0.0
    %620 = vmatprep.subr.mxu0 0.0
    %621 = vmatpush2.msra.mxu0 0.0
    %622 = vmatprep.subr.mxu0 0.0
    %623 = vmatpush2.msra.mxu0 0.0
    %624 = vmatprep.mubr.f32.mxu0 0.0
    %625 = vmatmul.mubr.f32.gmra.mxu0 %v558
    %v626 = vpop.f32.mrf.mxu0
    %v627 = vadd.f32 %v37, %v626
    %v628 = vpop.f32.mrf.mxu0
    %629 = vdwg.mxu0
    %vm630 = vcmask 261120
    %v632 = vsel %vm630, 0.0, 0
    %634 = vmatprep.subr.mxu0 0.0
    %635 = vmatpush1.msra.mxu0 0.0
    %636 = vmatprep.subr.mxu0 0.0
    %637 = vmatpush1.msra.mxu0 0.0
    %638 = vmatprep.subr.mxu0 0.0
    %639 = vmatpush1.msra.mxu0 0.0
    %640 = vmatprep.subr.mxu0 0.0
    %641 = vmatpush1.msra.mxu0 0.0
    %642 = vmatprep.subr.mxu0 0.0
    %643 = vmatpush1.msra.mxu0 0.0
    %644 = vmatprep.subr.mxu0 0.0
    %645 = vmatpush1.msra.mxu0 0.0
    %646 = vmatprep.subr.mxu0 0.0
    %647 = vmatpush1.msra.mxu0 0.0
    %648 = vmatprep.subr.mxu0 0.0
    %649 = vmatpush1.msra.mxu0 0.0
    %650 = vmatprep.subr.mxu0 0.0
    %651 = vmatpush1.msra.mxu0 0.0
    %652 = vmatprep.subr.mxu0 0.0
    %653 = vmatpush1.msra.mxu0 0.0
    %654 = vmatprep.subr.mxu0 0.0
    %655 = vmatpush1.msra.mxu0 0.0
    %656 = vmatprep.subr.mxu0 0.0
    %657 = vmatpush1.msra.mxu0 0.0
    %658 = vmatprep.subr.mxu0 0.0
    %659 = vmatpush1.msra.mxu0 %v32
    %660 = vmatprep.subr.mxu0 0.0
    %661 = vmatpush1.msra.mxu0 %v31
    %662 = vmatprep.subr.mxu0 0.0
    %663 = vmatpush1.msra.mxu0 %v30
    %664 = vmatprep.subr.mxu0 0.0
    %665 = vmatpush1.msra.mxu0 %v29
    %666 = vmatprep.subr.mxu0 0.0
    %667 = vmatpush2.msra.mxu0 0.0
    %668 = vmatprep.subr.mxu0 0.0
    %669 = vmatpush2.msra.mxu0 0.0
    %670 = vmatprep.subr.mxu0 0.0
    %671 = vmatpush2.msra.mxu0 0.0
    %672 = vmatprep.subr.mxu0 0.0
    %673 = vmatpush2.msra.mxu0 0.0
    %674 = vmatprep.subr.mxu0 0.0
    %675 = vmatpush2.msra.mxu0 0.0
    %676 = vmatprep.subr.mxu0 0.0
    %677 = vmatpush2.msra.mxu0 0.0
    %678 = vmatprep.subr.mxu0 0.0
    %679 = vmatpush2.msra.mxu0 0.0
    %680 = vmatprep.subr.mxu0 0.0
    %681 = vmatpush2.msra.mxu0 0.0
    %682 = vmatprep.subr.mxu0 0.0
    %683 = vmatpush2.msra.mxu0 0.0
    %684 = vmatprep.subr.mxu0 0.0
    %685 = vmatpush2.msra.mxu0 0.0
    %686 = vmatprep.subr.mxu0 0.0
    %687 = vmatpush2.msra.mxu0 0.0
    %688 = vmatprep.subr.mxu0 0.0
    %689 = vmatpush2.msra.mxu0 0.0
    %690 = vmatprep.subr.mxu0 0.0
    %691 = vmatpush2.msra.mxu0 0.0
    %692 = vmatprep.subr.mxu0 0.0
    %693 = vmatpush2.msra.mxu0 0.0
    %694 = vmatprep.subr.mxu0 0.0
    %695 = vmatpush2.msra.mxu0 0.0
    %696 = vmatprep.subr.mxu0 0.0
    %697 = vmatpush2.msra.mxu0 0.0
    %698 = vmatprep.mubr.f32.mxu0 0.0
    %699 = vmatmul.mubr.f32.gmra.mxu0 %v632
    %v700 = vpop.f32.mrf.mxu0
    %v701 = vadd.f32 0.0, %v700
    %v702 = vpop.f32.mrf.mxu0
    %703 = vdwg.mxu0
    %v704 = vadd.f32 %v109, %v701
    %v705 = vtanh.pop %v704
    %v706 = vmul.f32 %v705, 0.5
    %v707 = vadd.f32 %v706, 0.5
    %v708 = vmul.f32 %v707, 0.0
    %710 = vrot.lane.b32.xlu0 %v705, 64
    %v711 = vpop.permute.xlu0 %710
    %v713 = vmul.f32 %v707, %v711
    %715 = vrot.lane.b32.xlu0 %v713, 32
    %v716 = vpop.permute.xlu0 %715
    %v718 = vadd.f32 %v708, %v716
    %v719 = vtanh.pop %v718
    %721 = vrot.lane.b32.xlu0 %v719, 64
    %v722 = vpop.permute.xlu0 %721
    %v724 = vmul.f32 %v707, %v722
    %726 = vrot.lane.b32.xlu0 %v724, 32
    %v727 = vpop.permute.xlu0 %726
    %729 = vst.msk [vmem:[#allocation2] sm:$0xff] %vm630, %v727
    %v730 = vsel %vm630, %v727, 0
    %732 = vmatprep.subr.mxu0 0.0
    %733 = vmatpush1.msra.mxu0 0.0
    %734 = vmatprep.subr.mxu0 0.0
    %735 = vmatpush1.msra.mxu0 0.0
    %736 = vmatprep.subr.mxu0 0.0
    %737 = vmatpush1.msra.mxu0 0.0
    %738 = vmatprep.subr.mxu0 0.0
    %739 = vmatpush1.msra.mxu0 0.0
    %740 = vmatprep.subr.mxu0 0.0
    %741 = vmatpush1.msra.mxu0 0.0
    %742 = vmatprep.subr.mxu0 0.0
    %743 = vmatpush1.msra.mxu0 0.0
    %744 = vmatprep.subr.mxu0 0.0
    %745 = vmatpush1.msra.mxu0 0.0
    %746 = vmatprep.subr.mxu0 0.0
    %747 = vmatpush1.msra.mxu0 0.0
    %748 = vmatprep.subr.mxu0 0.0
    %749 = vmatpush1.msra.mxu0 0.0
    %750 = vmatprep.subr.mxu0 0.0
    %751 = vmatpush1.msra.mxu0 0.0
    %752 = vmatprep.subr.mxu0 0.0
    %753 = vmatpush1.msra.mxu0 0.0
    %754 = vmatprep.subr.mxu0 0.0
    %755 = vmatpush1.msra.mxu0 0.0
    %756 = vmatprep.subr.mxu0 0.0
    %757 = vmatpush1.msra.mxu0 %v32
    %758 = vmatprep.subr.mxu0 0.0
    %759 = vmatpush1.msra.mxu0 %v31
    %760 = vmatprep.subr.mxu0 0.0
    %761 = vmatpush1.msra.mxu0 %v30
    %762 = vmatprep.subr.mxu0 0.0
    %763 = vmatpush1.msra.mxu0 %v29
    %764 = vmatprep.subr.mxu0 0.0
    %765 = vmatpush2.msra.mxu0 0.0
    %766 = vmatprep.subr.mxu0 0.0
    %767 = vmatpush2.msra.mxu0 0.0
    %768 = vmatprep.subr.mxu0 0.0
    %769 = vmatpush2.msra.mxu0 0.0
    %770 = vmatprep.subr.mxu0 0.0
    %771 = vmatpush2.msra.mxu0 0.0
    %772 = vmatprep.subr.mxu0 0.0
    %773 = vmatpush2.msra.mxu0 0.0
    %774 = vmatprep.subr.mxu0 0.0
    %775 = vmatpush2.msra.mxu0 0.0
    %776 = vmatprep.subr.mxu0 0.0
    %777 = vmatpush2.msra.mxu0 0.0
    %778 = vmatprep.subr.mxu0 0.0
    %779 = vmatpush2.msra.mxu0 0.0
    %780 = vmatprep.subr.mxu0 0.0
    %781 = vmatpush2.msra.mxu0 0.0
    %782 = vmatprep.subr.mxu0 0.0
    %783 = vmatpush2.msra.mxu0 0.0
    %784 = vmatprep.subr.mxu0 0.0
    %785 = vmatpush2.msra.mxu0 0.0
    %786 = vmatprep.subr.mxu0 0.0
    %787 = vmatpush2.msra.mxu0 0.0
    %788 = vmatprep.subr.mxu0 0.0
    %789 = vmatpush2.msra.mxu0 0.0
    %790 = vmatprep.subr.mxu0 0.0
    %791 = vmatpush2.msra.mxu0 0.0
    %792 = vmatprep.subr.mxu0 0.0
    %793 = vmatpush2.msra.mxu0 0.0
    %794 = vmatprep.subr.mxu0 0.0
    %795 = vmatpush2.msra.mxu0 0.0
    %796 = vmatprep.mubr.f32.mxu0 0.0
    %797 = vmatmul.mubr.f32.gmra.mxu0 %v730
    %v798 = vpop.f32.mrf.mxu0
    %v799 = vadd.f32 0.0, %v798
    %v800 = vpop.f32.mrf.mxu0
    %801 = vdwg.mxu0
    %v802 = vadd.f32 %v183, %v799
    %v803 = vtanh.pop %v802
    %v804 = vmul.f32 %v803, 0.5
    %v805 = vadd.f32 %v804, 0.5
    %v806 = vmul.f32 %v805, %v718
    %808 = vrot.lane.b32.xlu0 %v803, 64
    %v809 = vpop.permute.xlu0 %808
    %v811 = vmul.f32 %v805, %v809
    %813 = vrot.lane.b32.xlu0 %v811, 32
    %v814 = vpop.permute.xlu0 %813
    %v816 = vadd.f32 %v806, %v814
    %v817 = vtanh.pop %v816
    %819 = vrot.lane.b32.xlu0 %v817, 64
    %v820 = vpop.permute.xlu0 %819
    %v822 = vmul.f32 %v805, %v820
    %824 = vrot.lane.b32.xlu0 %v822, 32
    %v825 = vpop.permute.xlu0 %824
    %827 = vst.msk [vmem:[#allocation2 + $0x8] sm:$0xff] %vm630, %v825
    %v828 = vsel %vm630, %v825, 0
    %830 = vmatprep.subr.mxu0 0.0
    %831 = vmatpush1.msra.mxu0 0.0
    %832 = vmatprep.subr.mxu0 0.0
    %833 = vmatpush1.msra.mxu0 0.0
    %834 = vmatprep.subr.mxu0 0.0
    %835 = vmatpush1.msra.mxu0 0.0
    %836 = vmatprep.subr.mxu0 0.0
    %837 = vmatpush1.msra.mxu0 0.0
    %838 = vmatprep.subr.mxu0 0.0
    %839 = vmatpush1.msra.mxu0 0.0
    %840 = vmatprep.subr.mxu0 0.0
    %841 = vmatpush1.msra.mxu0 0.0
    %842 = vmatprep.subr.mxu0 0.0
    %843 = vmatpush1.msra.mxu0 0.0
    %844 = vmatprep.subr.mxu0 0.0
    %845 = vmatpush1.msra.mxu0 0.0
    %846 = vmatprep.subr.mxu0 0.0
    %847 = vmatpush1.msra.mxu0 0.0
    %848 = vmatprep.subr.mxu0 0.0
    %849 = vmatpush1.msra.mxu0 0.0
    %850 = vmatprep.subr.mxu0 0.0
    %851 = vmatpush1.msra.mxu0 0.0
    %852 = vmatprep.subr.mxu0 0.0
    %853 = vmatpush1.msra.mxu0 0.0
    %854 = vmatprep.subr.mxu0 0.0
    %855 = vmatpush1.msra.mxu0 %v32
    %856 = vmatprep.subr.mxu0 0.0
    %857 = vmatpush1.msra.mxu0 %v31
    %858 = vmatprep.subr.mxu0 0.0
    %859 = vmatpush1.msra.mxu0 %v30
    %860 = vmatprep.subr.mxu0 0.0
    %861 = vmatpush1.msra.mxu0 %v29
    %862 = vmatprep.subr.mxu0 0.0
    %863 = vmatpush2.msra.mxu0 0.0
    %864 = vmatprep.subr.mxu0 0.0
    %865 = vmatpush2.msra.mxu0 0.0
    %866 = vmatprep.subr.mxu0 0.0
    %867 = vmatpush2.msra.mxu0 0.0
    %868 = vmatprep.subr.mxu0 0.0
    %869 = vmatpush2.msra.mxu0 0.0
    %870 = vmatprep.subr.mxu0 0.0
    %871 = vmatpush2.msra.mxu0 0.0
    %872 = vmatprep.subr.mxu0 0.0
    %873 = vmatpush2.msra.mxu0 0.0
    %874 = vmatprep.subr.mxu0 0.0
    %875 = vmatpush2.msra.mxu0 0.0
    %876 = vmatprep.subr.mxu0 0.0
    %877 = vmatpush2.msra.mxu0 0.0
    %878 = vmatprep.subr.mxu0 0.0
    %879 = vmatpush2.msra.mxu0 0.0
    %880 = vmatprep.subr.mxu0 0.0
    %881 = vmatpush2.msra.mxu0 0.0
    %882 = vmatprep.subr.mxu0 0.0
    %883 = vmatpush2.msra.mxu0 0.0
    %884 = vmatprep.subr.mxu0 0.0
    %885 = vmatpush2.msra.mxu0 0.0
    %886 = vmatprep.subr.mxu0 0.0
    %887 = vmatpush2.msra.mxu0 0.0
    %888 = vmatprep.subr.mxu0 0.0
    %889 = vmatpush2.msra.mxu0 0.0
    %890 = vmatprep.subr.mxu0 0.0
    %891 = vmatpush2.msra.mxu0 0.0
    %892 = vmatprep.subr.mxu0 0.0
    %893 = vmatpush2.msra.mxu0 0.0
    %894 = vmatprep.mubr.f32.mxu0 0.0
    %895 = vmatmul.mubr.f32.gmra.mxu0 %v828
    %v896 = vpop.f32.mrf.mxu0
    %v897 = vadd.f32 0.0, %v896
    %v898 = vpop.f32.mrf.mxu0
    %899 = vdwg.mxu0
    %v900 = vadd.f32 %v257, %v897
    %v901 = vtanh.pop %v900
    %v902 = vmul.f32 %v901, 0.5
    %v903 = vadd.f32 %v902, 0.5
    %v904 = vmul.f32 %v903, %v816
    %906 = vrot.lane.b32.xlu0 %v901, 64
    %v907 = vpop.permute.xlu0 %906
    %v909 = vmul.f32 %v903, %v907
    %911 = vrot.lane.b32.xlu0 %v909, 32
    %v912 = vpop.permute.xlu0 %911
    %v914 = vadd.f32 %v904, %v912
    %v915 = vtanh.pop %v914
    %917 = vrot.lane.b32.xlu0 %v915, 64
    %v918 = vpop.permute.xlu0 %917
    %v920 = vmul.f32 %v903, %v918
    %922 = vrot.lane.b32.xlu0 %v920, 32
    %v923 = vpop.permute.xlu0 %922
    %925 = vst.msk [vmem:[#allocation2 + $0x10] sm:$0xff] %vm630, %v923
    %v926 = vsel %vm630, %v923, 0
    %928 = vmatprep.subr.mxu0 0.0
    %929 = vmatpush1.msra.mxu0 0.0
    %930 = vmatprep.subr.mxu0 0.0
    %931 = vmatpush1.msra.mxu0 0.0
    %932 = vmatprep.subr.mxu0 0.0
    %933 = vmatpush1.msra.mxu0 0.0
    %934 = vmatprep.subr.mxu0 0.0
    %935 = vmatpush1.msra.mxu0 0.0
    %936 = vmatprep.subr.mxu0 0.0
    %937 = vmatpush1.msra.mxu0 0.0
    %938 = vmatprep.subr.mxu0 0.0
    %939 = vmatpush1.msra.mxu0 0.0
    %940 = vmatprep.subr.mxu0 0.0
    %941 = vmatpush1.msra.mxu0 0.0
    %942 = vmatprep.subr.mxu0 0.0
    %943 = vmatpush1.msra.mxu0 0.0
    %944 = vmatprep.subr.mxu0 0.0
    %945 = vmatpush1.msra.mxu0 0.0
    %946 = vmatprep.subr.mxu0 0.0
    %947 = vmatpush1.msra.mxu0 0.0
    %948 = vmatprep.subr.mxu0 0.0
    %949 = vmatpush1.msra.mxu0 0.0
    %950 = vmatprep.subr.mxu0 0.0
    %951 = vmatpush1.msra.mxu0 0.0
    %952 = vmatprep.subr.mxu0 0.0
    %953 = vmatpush1.msra.mxu0 %v32
    %954 = vmatprep.subr.mxu0 0.0
    %955 = vmatpush1.msra.mxu0 %v31
    %956 = vmatprep.subr.mxu0 0.0
    %957 = vmatpush1.msra.mxu0 %v30
    %958 = vmatprep.subr.mxu0 0.0
    %959 = vmatpush1.msra.mxu0 %v29
    %960 = vmatprep.subr.mxu0 0.0
    %961 = vmatpush2.msra.mxu0 0.0
    %962 = vmatprep.subr.mxu0 0.0
    %963 = vmatpush2.msra.mxu0 0.0
    %964 = vmatprep.subr.mxu0 0.0
    %965 = vmatpush2.msra.mxu0 0.0
    %966 = vmatprep.subr.mxu0 0.0
    %967 = vmatpush2.msra.mxu0 0.0
    %968 = vmatprep.subr.mxu0 0.0
    %969 = vmatpush2.msra.mxu0 0.0
    %970 = vmatprep.subr.mxu0 0.0
    %971 = vmatpush2.msra.mxu0 0.0
    %972 = vmatprep.subr.mxu0 0.0
    %973 = vmatpush2.msra.mxu0 0.0
    %974 = vmatprep.subr.mxu0 0.0
    %975 = vmatpush2.msra.mxu0 0.0
    %976 = vmatprep.subr.mxu0 0.0
    %977 = vmatpush2.msra.mxu0 0.0
    %978 = vmatprep.subr.mxu0 0.0
    %979 = vmatpush2.msra.mxu0 0.0
    %980 = vmatprep.subr.mxu0 0.0
    %981 = vmatpush2.msra.mxu0 0.0
    %982 = vmatprep.subr.mxu0 0.0
    %983 = vmatpush2.msra.mxu0 0.0
    %984 = vmatprep.subr.mxu0 0.0
    %985 = vmatpush2.msra.mxu0 0.0
    %986 = vmatprep.subr.mxu0 0.0
    %987 = vmatpush2.msra.mxu0 0.0
    %988 = vmatprep.subr.mxu0 0.0
    %989 = vmatpush2.msra.mxu0 0.0
    %990 = vmatprep.subr.mxu0 0.0
    %991 = vmatpush2.msra.mxu0 0.0
    %992 = vmatprep.mubr.f32.mxu0 0.0
    %993 = vmatmul.mubr.f32.gmra.mxu0 %v926
    %v994 = vpop.f32.mrf.mxu0
    %v995 = vadd.f32 0.0, %v994
    %v996 = vpop.f32.mrf.mxu0
    %997 = vdwg.mxu0
    %v998 = vadd.f32 %v331, %v995
    %v999 = vtanh.pop %v998
    %v1000 = vmul.f32 %v999, 0.5
    %v1001 = vadd.f32 %v1000, 0.5
    %v1002 = vmul.f32 %v1001, %v914
    %1004 = vrot.lane.b32.xlu0 %v999, 64
    %v1005 = vpop.permute.xlu0 %1004
    %v1007 = vmul.f32 %v1001, %v1005
    %1009 = vrot.lane.b32.xlu0 %v1007, 32
    %v1010 = vpop.permute.xlu0 %1009
    %v1012 = vadd.f32 %v1002, %v1010
    %v1013 = vtanh.pop %v1012
    %1015 = vrot.lane.b32.xlu0 %v1013, 64
    %v1016 = vpop.permute.xlu0 %1015
    %v1018 = vmul.f32 %v1001, %v1016
    %1020 = vrot.lane.b32.xlu0 %v1018, 32
    %v1021 = vpop.permute.xlu0 %1020
    %1023 = vst.msk [vmem:[#allocation2 + $0x18] sm:$0xff] %vm630, %v1021
    %v1024 = vsel %vm630, %v1021, 0
    %1026 = vmatprep.subr.mxu0 0.0
    %1027 = vmatpush1.msra.mxu0 0.0
    %1028 = vmatprep.subr.mxu0 0.0
    %1029 = vmatpush1.msra.mxu0 0.0
    %1030 = vmatprep.subr.mxu0 0.0
    %1031 = vmatpush1.msra.mxu0 0.0
    %1032 = vmatprep.subr.mxu0 0.0
    %1033 = vmatpush1.msra.mxu0 0.0
    %1034 = vmatprep.subr.mxu0 0.0
    %1035 = vmatpush1.msra.mxu0 0.0
    %1036 = vmatprep.subr.mxu0 0.0
    %1037 = vmatpush1.msra.mxu0 0.0
    %1038 = vmatprep.subr.mxu0 0.0
    %1039 = vmatpush1.msra.mxu0 0.0
    %1040 = vmatprep.subr.mxu0 0.0
    %1041 = vmatpush1.msra.mxu0 0.0
    %1042 = vmatprep.subr.mxu0 0.0
    %1043 = vmatpush1.msra.mxu0 0.0
    %1044 = vmatprep.subr.mxu0 0.0
    %1045 = vmatpush1.msra.mxu0 0.0
    %1046 = vmatprep.subr.mxu0 0.0
    %1047 = vmatpush1.msra.mxu0 0.0
    %1048 = vmatprep.subr.mxu0 0.0
    %1049 = vmatpush1.msra.mxu0 0.0
    %1050 = vmatprep.subr.mxu0 0.0
    %1051 = vmatpush1.msra.mxu0 %v32
    %1052 = vmatprep.subr.mxu0 0.0
    %1053 = vmatpush1.msra.mxu0 %v31
    %1054 = vmatprep.subr.mxu0 0.0
    %1055 = vmatpush1.msra.mxu0 %v30
    %1056 = vmatprep.subr.mxu0 0.0
    %1057 = vmatpush1.msra.mxu0 %v29
    %1058 = vmatprep.subr.mxu0 0.0
    %1059 = vmatpush2.msra.mxu0 0.0
    %1060 = vmatprep.subr.mxu0 0.0
    %1061 = vmatpush2.msra.mxu0 0.0
    %1062 = vmatprep.subr.mxu0 0.0
    %1063 = vmatpush2.msra.mxu0 0.0
    %1064 = vmatprep.subr.mxu0 0.0
    %1065 = vmatpush2.msra.mxu0 0.0
    %1066 = vmatprep.subr.mxu0 0.0
    %1067 = vmatpush2.msra.mxu0 0.0
    %1068 = vmatprep.subr.mxu0 0.0
    %1069 = vmatpush2.msra.mxu0 0.0
    %1070 = vmatprep.subr.mxu0 0.0
    %1071 = vmatpush2.msra.mxu0 0.0
    %1072 = vmatprep.subr.mxu0 0.0
    %1073 = vmatpush2.msra.mxu0 0.0
    %1074 = vmatprep.subr.mxu0 0.0
    %1075 = vmatpush2.msra.mxu0 0.0
    %1076 = vmatprep.subr.mxu0 0.0
    %1077 = vmatpush2.msra.mxu0 0.0
    %1078 = vmatprep.subr.mxu0 0.0
    %1079 = vmatpush2.msra.mxu0 0.0
    %1080 = vmatprep.subr.mxu0 0.0
    %1081 = vmatpush2.msra.mxu0 0.0
    %1082 = vmatprep.subr.mxu0 0.0
    %1083 = vmatpush2.msra.mxu0 0.0
    %1084 = vmatprep.subr.mxu0 0.0
    %1085 = vmatpush2.msra.mxu0 0.0
    %1086 = vmatprep.subr.mxu0 0.0
    %1087 = vmatpush2.msra.mxu0 0.0
    %1088 = vmatprep.subr.mxu0 0.0
    %1089 = vmatpush2.msra.mxu0 0.0
    %1090 = vmatprep.mubr.f32.mxu0 0.0
    %1091 = vmatmul.mubr.f32.gmra.mxu0 %v1024
    %v1092 = vpop.f32.mrf.mxu0
    %v1093 = vadd.f32 0.0, %v1092
    %v1094 = vpop.f32.mrf.mxu0
    %1095 = vdwg.mxu0
    %v1096 = vadd.f32 %v405, %v1093
    %v1097 = vtanh.pop %v1096
    %v1098 = vmul.f32 %v1097, 0.5
    %v1099 = vadd.f32 %v1098, 0.5
    %v1100 = vmul.f32 %v1099, %v1012
    %1102 = vrot.lane.b32.xlu0 %v1097, 64
    %v1103 = vpop.permute.xlu0 %1102
    %v1105 = vmul.f32 %v1099, %v1103
    %1107 = vrot.lane.b32.xlu0 %v1105, 32
    %v1108 = vpop.permute.xlu0 %1107
    %v1110 = vadd.f32 %v1100, %v1108
    %v1111 = vtanh.pop %v1110
    %1113 = vrot.lane.b32.xlu0 %v1111, 64
    %v1114 = vpop.permute.xlu0 %1113
    %v1116 = vmul.f32 %v1099, %v1114
    %1118 = vrot.lane.b32.xlu0 %v1116, 32
    %v1119 = vpop.permute.xlu0 %1118
    %1121 = vst.msk [vmem:[#allocation2 + $0x20] sm:$0xff] %vm630, %v1119
    %v1122 = vsel %vm630, %v1119, 0
    %1124 = vmatprep.subr.mxu0 0.0
    %1125 = vmatpush1.msra.mxu0 0.0
    %1126 = vmatprep.subr.mxu0 0.0
    %1127 = vmatpush1.msra.mxu0 0.0
    %1128 = vmatprep.subr.mxu0 0.0
    %1129 = vmatpush1.msra.mxu0 0.0
    %1130 = vmatprep.subr.mxu0 0.0
    %1131 = vmatpush1.msra.mxu0 0.0
    %1132 = vmatprep.subr.mxu0 0.0
    %1133 = vmatpush1.msra.mxu0 0.0
    %1134 = vmatprep.subr.mxu0 0.0
    %1135 = vmatpush1.msra.mxu0 0.0
    %1136 = vmatprep.subr.mxu0 0.0
    %1137 = vmatpush1.msra.mxu0 0.0
    %1138 = vmatprep.subr.mxu0 0.0
    %1139 = vmatpush1.msra.mxu0 0.0
    %1140 = vmatprep.subr.mxu0 0.0
    %1141 = vmatpush1.msra.mxu0 0.0
    %1142 = vmatprep.subr.mxu0 0.0
    %1143 = vmatpush1.msra.mxu0 0.0
    %1144 = vmatprep.subr.mxu0 0.0
    %1145 = vmatpush1.msra.mxu0 0.0
    %1146 = vmatprep.subr.mxu0 0.0
    %1147 = vmatpush1.msra.mxu0 0.0
    %1148 = vmatprep.subr.mxu0 0.0
    %1149 = vmatpush1.msra.mxu0 %v32
    %1150 = vmatprep.subr.mxu0 0.0
    %1151 = vmatpush1.msra.mxu0 %v31
    %1152 = vmatprep.subr.mxu0 0.0
    %1153 = vmatpush1.msra.mxu0 %v30
    %1154 = vmatprep.subr.mxu0 0.0
    %1155 = vmatpush1.msra.mxu0 %v29
    %1156 = vmatprep.subr.mxu0 0.0
    %1157 = vmatpush2.msra.mxu0 0.0
    %1158 = vmatprep.subr.mxu0 0.0
    %1159 = vmatpush2.msra.mxu0 0.0
    %1160 = vmatprep.subr.mxu0 0.0
    %1161 = vmatpush2.msra.mxu0 0.0
    %1162 = vmatprep.subr.mxu0 0.0
    %1163 = vmatpush2.msra.mxu0 0.0
    %1164 = vmatprep.subr.mxu0 0.0
    %1165 = vmatpush2.msra.mxu0 0.0
    %1166 = vmatprep.subr.mxu0 0.0
    %1167 = vmatpush2.msra.mxu0 0.0
    %1168 = vmatprep.subr.mxu0 0.0
    %1169 = vmatpush2.msra.mxu0 0.0
    %1170 = vmatprep.subr.mxu0 0.0
    %1171 = vmatpush2.msra.mxu0 0.0
    %1172 = vmatprep.subr.mxu0 0.0
    %1173 = vmatpush2.msra.mxu0 0.0
    %1174 = vmatprep.subr.mxu0 0.0
    %1175 = vmatpush2.msra.mxu0 0.0
    %1176 = vmatprep.subr.mxu0 0.0
    %1177 = vmatpush2.msra.mxu0 0.0
    %1178 = vmatprep.subr.mxu0 0.0
    %1179 = vmatpush2.msra.mxu0 0.0
    %1180 = vmatprep.subr.mxu0 0.0
    %1181 = vmatpush2.msra.mxu0 0.0
    %1182 = vmatprep.subr.mxu0 0.0
    %1183 = vmatpush2.msra.mxu0 0.0
    %1184 = vmatprep.subr.mxu0 0.0
    %1185 = vmatpush2.msra.mxu0 0.0
    %1186 = vmatprep.subr.mxu0 0.0
    %1187 = vmatpush2.msra.mxu0 0.0
    %1188 = vmatprep.mubr.f32.mxu0 0.0
    %1189 = vmatmul.mubr.f32.gmra.mxu0 %v1122
    %v1190 = vpop.f32.mrf.mxu0
    %v1191 = vadd.f32 0.0, %v1190
    %v1192 = vpop.f32.mrf.mxu0
    %1193 = vdwg.mxu0
    %v1194 = vadd.f32 %v479, %v1191
    %v1195 = vtanh.pop %v1194
    %v1196 = vmul.f32 %v1195, 0.5
    %v1197 = vadd.f32 %v1196, 0.5
    %v1198 = vmul.f32 %v1197, %v1110
    %1200 = vrot.lane.b32.xlu0 %v1195, 64
    %v1201 = vpop.permute.xlu0 %1200
    %v1203 = vmul.f32 %v1197, %v1201
    %1205 = vrot.lane.b32.xlu0 %v1203, 32
    %v1206 = vpop.permute.xlu0 %1205
    %v1208 = vadd.f32 %v1198, %v1206
    %v1209 = vtanh.pop %v1208
    %1211 = vrot.lane.b32.xlu0 %v1209, 64
    %v1212 = vpop.permute.xlu0 %1211
    %v1214 = vmul.f32 %v1197, %v1212
    %1216 = vrot.lane.b32.xlu0 %v1214, 32
    %v1217 = vpop.permute.xlu0 %1216
    %1219 = vst.msk [vmem:[#allocation2 + $0x28] sm:$0xff] %vm630, %v1217
    %v1220 = vsel %vm630, %v1217, 0
    %1222 = vmatprep.subr.mxu0 0.0
    %1223 = vmatpush1.msra.mxu0 0.0
    %1224 = vmatprep.subr.mxu0 0.0
    %1225 = vmatpush1.msra.mxu0 0.0
    %1226 = vmatprep.subr.mxu0 0.0
    %1227 = vmatpush1.msra.mxu0 0.0
    %1228 = vmatprep.subr.mxu0 0.0
    %1229 = vmatpush1.msra.mxu0 0.0
    %1230 = vmatprep.subr.mxu0 0.0
    %1231 = vmatpush1.msra.mxu0 0.0
    %1232 = vmatprep.subr.mxu0 0.0
    %1233 = vmatpush1.msra.mxu0 0.0
    %1234 = vmatprep.subr.mxu0 0.0
    %1235 = vmatpush1.msra.mxu0 0.0
    %1236 = vmatprep.subr.mxu0 0.0
    %1237 = vmatpush1.msra.mxu0 0.0
    %1238 = vmatprep.subr.mxu0 0.0
    %1239 = vmatpush1.msra.mxu0 0.0
    %1240 = vmatprep.subr.mxu0 0.0
    %1241 = vmatpush1.msra.mxu0 0.0
    %1242 = vmatprep.subr.mxu0 0.0
    %1243 = vmatpush1.msra.mxu0 0.0
    %1244 = vmatprep.subr.mxu0 0.0
    %1245 = vmatpush1.msra.mxu0 0.0
    %1246 = vmatprep.subr.mxu0 0.0
    %1247 = vmatpush1.msra.mxu0 %v32
    %1248 = vmatprep.subr.mxu0 0.0
    %1249 = vmatpush1.msra.mxu0 %v31
    %1250 = vmatprep.subr.mxu0 0.0
    %1251 = vmatpush1.msra.mxu0 %v30
    %1252 = vmatprep.subr.mxu0 0.0
    %1253 = vmatpush1.msra.mxu0 %v29
    %1254 = vmatprep.subr.mxu0 0.0
    %1255 = vmatpush2.msra.mxu0 0.0
    %1256 = vmatprep.subr.mxu0 0.0
    %1257 = vmatpush2.msra.mxu0 0.0
    %1258 = vmatprep.subr.mxu0 0.0
    %1259 = vmatpush2.msra.mxu0 0.0
    %1260 = vmatprep.subr.mxu0 0.0
    %1261 = vmatpush2.msra.mxu0 0.0
    %1262 = vmatprep.subr.mxu0 0.0
    %1263 = vmatpush2.msra.mxu0 0.0
    %1264 = vmatprep.subr.mxu0 0.0
    %1265 = vmatpush2.msra.mxu0 0.0
    %1266 = vmatprep.subr.mxu0 0.0
    %1267 = vmatpush2.msra.mxu0 0.0
    %1268 = vmatprep.subr.mxu0 0.0
    %1269 = vmatpush2.msra.mxu0 0.0
    %1270 = vmatprep.subr.mxu0 0.0
    %1271 = vmatpush2.msra.mxu0 0.0
    %1272 = vmatprep.subr.mxu0 0.0
    %1273 = vmatpush2.msra.mxu0 0.0
    %1274 = vmatprep.subr.mxu0 0.0
    %1275 = vmatpush2.msra.mxu0 0.0
    %1276 = vmatprep.subr.mxu0 0.0
    %1277 = vmatpush2.msra.mxu0 0.0
    %1278 = vmatprep.subr.mxu0 0.0
    %1279 = vmatpush2.msra.mxu0 0.0
    %1280 = vmatprep.subr.mxu0 0.0
    %1281 = vmatpush2.msra.mxu0 0.0
    %1282 = vmatprep.subr.mxu0 0.0
    %1283 = vmatpush2.msra.mxu0 0.0
    %1284 = vmatprep.subr.mxu0 0.0
    %1285 = vmatpush2.msra.mxu0 0.0
    %1286 = vmatprep.mubr.f32.mxu0 0.0
    %1287 = vmatmul.mubr.f32.gmra.mxu0 %v1220
    %v1288 = vpop.f32.mrf.mxu0
    %v1289 = vadd.f32 0.0, %v1288
    %v1290 = vpop.f32.mrf.mxu0
    %1291 = vdwg.mxu0
    %v1292 = vadd.f32 %v553, %v1289
    %v1293 = vtanh.pop %v1292
    %v1294 = vmul.f32 %v1293, 0.5
    %v1295 = vadd.f32 %v1294, 0.5
    %v1296 = vmul.f32 %v1295, %v1208
    %1298 = vrot.lane.b32.xlu0 %v1293, 64
    %v1299 = vpop.permute.xlu0 %1298
    %v1301 = vmul.f32 %v1295, %v1299
    %1303 = vrot.lane.b32.xlu0 %v1301, 32
    %v1304 = vpop.permute.xlu0 %1303
    %v1306 = vadd.f32 %v1296, %v1304
    %v1307 = vtanh.pop %v1306
    %1309 = vrot.lane.b32.xlu0 %v1307, 64
    %v1310 = vpop.permute.xlu0 %1309
    %v1312 = vmul.f32 %v1295, %v1310
    %1314 = vrot.lane.b32.xlu0 %v1312, 32
    %v1315 = vpop.permute.xlu0 %1314
    %1317 = vst.msk [vmem:[#allocation2 + $0x30] sm:$0xff] %vm630, %v1315
    %v1318 = vsel %vm630, %v1315, 0
    %1320 = vmatprep.subr.mxu0 0.0
    %1321 = vmatpush1.msra.mxu0 0.0
    %1322 = vmatprep.subr.mxu0 0.0
    %1323 = vmatpush1.msra.mxu0 0.0
    %1324 = vmatprep.subr.mxu0 0.0
    %1325 = vmatpush1.msra.mxu0 0.0
    %1326 = vmatprep.subr.mxu0 0.0
    %1327 = vmatpush1.msra.mxu0 0.0
    %1328 = vmatprep.subr.mxu0 0.0
    %1329 = vmatpush1.msra.mxu0 0.0
    %1330 = vmatprep.subr.mxu0 0.0
    %1331 = vmatpush1.msra.mxu0 0.0
    %1332 = vmatprep.subr.mxu0 0.0
    %1333 = vmatpush1.msra.mxu0 0.0
    %1334 = vmatprep.subr.mxu0 0.0
    %1335 = vmatpush1.msra.mxu0 0.0
    %1336 = vmatprep.subr.mxu0 0.0
    %1337 = vmatpush1.msra.mxu0 0.0
    %1338 = vmatprep.subr.mxu0 0.0
    %1339 = vmatpush1.msra.mxu0 0.0
    %1340 = vmatprep.subr.mxu0 0.0
    %1341 = vmatpush1.msra.mxu0 0.0
    %1342 = vmatprep.subr.mxu0 0.0
    %1343 = vmatpush1.msra.mxu0 0.0
    %1344 = vmatprep.subr.mxu0 0.0
    %1345 = vmatpush1.msra.mxu0 %v32
    %1346 = vmatprep.subr.mxu0 0.0
    %1347 = vmatpush1.msra.mxu0 %v31
    %1348 = vmatprep.subr.mxu0 0.0
    %1349 = vmatpush1.msra.mxu0 %v30
    %1350 = vmatprep.subr.mxu0 0.0
    %1351 = vmatpush1.msra.mxu0 %v29
    %1352 = vmatprep.subr.mxu0 0.0
    %1353 = vmatpush2.msra.mxu0 0.0
    %1354 = vmatprep.subr.mxu0 0.0
    %1355 = vmatpush2.msra.mxu0 0.0
    %1356 = vmatprep.subr.mxu0 0.0
    %1357 = vmatpush2.msra.mxu0 0.0
    %1358 = vmatprep.subr.mxu0 0.0
    %1359 = vmatpush2.msra.mxu0 0.0
    %1360 = vmatprep.subr.mxu0 0.0
    %1361 = vmatpush2.msra.mxu0 0.0
    %1362 = vmatprep.subr.mxu0 0.0
    %1363 = vmatpush2.msra.mxu0 0.0
    %1364 = vmatprep.subr.mxu0 0.0
    %1365 = vmatpush2.msra.mxu0 0.0
    %1366 = vmatprep.subr.mxu0 0.0
    %1367 = vmatpush2.msra.mxu0 0.0
    %1368 = vmatprep.subr.mxu0 0.0
    %1369 = vmatpush2.msra.mxu0 0.0
    %1370 = vmatprep.subr.mxu0 0.0
    %1371 = vmatpush2.msra.mxu0 0.0
    %1372 = vmatprep.subr.mxu0 0.0
    %1373 = vmatpush2.msra.mxu0 0.0
    %1374 = vmatprep.subr.mxu0 0.0
    %1375 = vmatpush2.msra.mxu0 0.0
    %1376 = vmatprep.subr.mxu0 0.0
    %1377 = vmatpush2.msra.mxu0 0.0
    %1378 = vmatprep.subr.mxu0 0.0
    %1379 = vmatpush2.msra.mxu0 0.0
    %1380 = vmatprep.subr.mxu0 0.0
    %1381 = vmatpush2.msra.mxu0 0.0
    %1382 = vmatprep.subr.mxu0 0.0
    %1383 = vmatpush2.msra.mxu0 0.0
    %1384 = vmatprep.mubr.f32.mxu0 0.0
    %1385 = vmatmul.mubr.f32.gmra.mxu0 %v1318
    %v1386 = vpop.f32.mrf.mxu0
    %v1387 = vadd.f32 0.0, %v1386
    %v1388 = vpop.f32.mrf.mxu0
    %1389 = vdwg.mxu0
    %v1390 = vadd.f32 %v627, %v1387
    %v1391 = vtanh.pop %v1390
    %v1392 = vmul.f32 %v1391, 0.5
    %v1393 = vadd.f32 %v1392, 0.5
    %v1394 = vmul.f32 %v1393, %v1306
    %1396 = vrot.lane.b32.xlu0 %v1391, 64
    %v1397 = vpop.permute.xlu0 %1396
    %v1399 = vmul.f32 %v1393, %v1397
    %1401 = vrot.lane.b32.xlu0 %v1399, 32
    %v1402 = vpop.permute.xlu0 %1401
    %v1404 = vadd.f32 %v1394, %v1402
    %v1405 = vtanh.pop %v1404
    %1407 = vrot.lane.b32.xlu0 %v1405, 64
    %v1408 = vpop.permute.xlu0 %1407
    %v1410 = vmul.f32 %v1393, %v1408
    %1412 = vrot.lane.b32.xlu0 %v1410, 32
    %v1413 = vpop.permute.xlu0 %1412
    %1415 = vst.msk [vmem:[#allocation2 + $0x38] sm:$0xff] %vm630, %v1413
    %v1416 = vld [vmem:[#allocation2] sm:$0xff]
    %v1417 = vld [vmem:[#allocation2 + $0x8] sm:$0xff]
    %v1418 = vld [vmem:[#allocation2 + $0x10] sm:$0xff]
    %v1419 = vld [vmem:[#allocation2 + $0x18] sm:$0xff]
    %v1420 = vld [vmem:[#allocation2 + $0x20] sm:$0xff]
    %v1421 = vld [vmem:[#allocation2 + $0x28] sm:$0xff]
    %v1422 = vld [vmem:[#allocation2 + $0x30] sm:$0xff]
    %v1423 = vld [vmem:[#allocation2 + $0x38] sm:$0xff]
    %v1424 = vld [vmem:[#allocation4 + $0x78] sm:$0xff]
    %v1425 = vld [vmem:[#allocation4 + $0x80] sm:$0xff]
    %v1426 = vld [vmem:[#allocation4 + $0x88] sm:$0xff]
    %v1427 = vld [vmem:[#allocation4 + $0x90] sm:$0xff]
    %v1428 = vld [vmem:[#allocation4 + $0x98] sm:$0x1]
    %v1429 = vlaneseq
    %v1430 = vshrl.u32 %v1429, 7
    %v1431 = vsub.s32 0, %v1430
    %v1432 = vrot.slane %v1428, %v1431
    %v1434 = vsel %vm630, %v1416, 0
    %v1437 = vsel %vm630, %v1417, 0
    %v1440 = vsel %vm630, %v1418, 0
    %v1443 = vsel %vm630, %v1419, 0
    %v1446 = vsel %vm630, %v1420, 0
    %v1449 = vsel %vm630, %v1421, 0
    %v1452 = vsel %vm630, %v1422, 0
    %v1455 = vsel %vm630, %v1423, 0
    %1457 = vmatprep.subr.mxu0 0.0
    %1458 = vmatpush1.msra.mxu0 0.0
    %1459 = vmatprep.subr.mxu0 0.0
    %1460 = vmatpush1.msra.mxu0 0.0
    %1461 = vmatprep.subr.mxu0 0.0
    %1462 = vmatpush1.msra.mxu0 0.0
    %1463 = vmatprep.subr.mxu0 0.0
    %1464 = vmatpush1.msra.mxu0 0.0
    %1465 = vmatprep.subr.mxu0 0.0
    %1466 = vmatpush1.msra.mxu0 0.0
    %1467 = vmatprep.subr.mxu0 0.0
    %1468 = vmatpush1.msra.mxu0 0.0
    %1469 = vmatprep.subr.mxu0 0.0
    %1470 = vmatpush1.msra.mxu0 0.0
    %1471 = vmatprep.subr.mxu0 0.0
    %1472 = vmatpush1.msra.mxu0 0.0
    %1473 = vmatprep.subr.mxu0 0.0
    %1474 = vmatpush1.msra.mxu0 0.0
    %1475 = vmatprep.subr.mxu0 0.0
    %1476 = vmatpush1.msra.mxu0 0.0
    %1477 = vmatprep.subr.mxu0 0.0
    %1478 = vmatpush1.msra.mxu0 0.0
    %1479 = vmatprep.subr.mxu0 0.0
    %1480 = vmatpush1.msra.mxu0 0.0
    %1481 = vmatprep.subr.mxu0 0.0
    %1482 = vmatpush1.msra.mxu0 %v1427
    %1483 = vmatprep.subr.mxu0 0.0
    %1484 = vmatpush1.msra.mxu0 %v1426
    %1485 = vmatprep.subr.mxu0 0.0
    %1486 = vmatpush1.msra.mxu0 %v1425
    %1487 = vmatprep.subr.mxu0 0.0
    %1488 = vmatpush1.msra.mxu0 %v1424
    %1489 = vmatprep.subr.mxu0 0.0
    %1490 = vmatpush2.msra.mxu0 0.0
    %1491 = vmatprep.subr.mxu0 0.0
    %1492 = vmatpush2.msra.mxu0 0.0
    %1493 = vmatprep.subr.mxu0 0.0
    %1494 = vmatpush2.msra.mxu0 0.0
    %1495 = vmatprep.subr.mxu0 0.0
    %1496 = vmatpush2.msra.mxu0 0.0
    %1497 = vmatprep.subr.mxu0 0.0
    %1498 = vmatpush2.msra.mxu0 0.0
    %1499 = vmatprep.subr.mxu0 0.0
    %1500 = vmatpush2.msra.mxu0 0.0
    %1501 = vmatprep.subr.mxu0 0.0
    %1502 = vmatpush2.msra.mxu0 0.0
    %1503 = vmatprep.subr.mxu0 0.0
    %1504 = vmatpush2.msra.mxu0 0.0
    %1505 = vmatprep.subr.mxu0 0.0
    %1506 = vmatpush2.msra.mxu0 0.0
    %1507 = vmatprep.subr.mxu0 0.0
    %1508 = vmatpush2.msra.mxu0 0.0
    %1509 = vmatprep.subr.mxu0 0.0
    %1510 = vmatpush2.msra.mxu0 0.0
    %1511 = vmatprep.subr.mxu0 0.0
    %1512 = vmatpush2.msra.mxu0 0.0
    %1513 = vmatprep.subr.mxu0 0.0
    %1514 = vmatpush2.msra.mxu0 0.0
    %1515 = vmatprep.subr.mxu0 0.0
    %1516 = vmatpush2.msra.mxu0 0.0
    %1517 = vmatprep.subr.mxu0 0.0
    %1518 = vmatpush2.msra.mxu0 0.0
    %1519 = vmatprep.subr.mxu0 0.0
    %1520 = vmatpush2.msra.mxu0 0.0
    %1521 = vmatprep.mubr.f32.mxu0 0.0
    %1522 = vmatmul.mubr.f32.gmra.mxu0 %v1434
    %v1523 = vpop.f32.mrf.mxu0
    %v1524 = vadd.f32 %v1432, %v1523
    %v1525 = vpop.f32.mrf.mxu0
    %1526 = vmatprep.mubr.f32.mxu0 0.0
    %1527 = vmatmul.mubr.f32.gmra.mxu0 %v1437
    %v1528 = vpop.f32.mrf.mxu0
    %v1529 = vadd.f32 %v1432, %v1528
    %v1530 = vpop.f32.mrf.mxu0
    %1531 = vmatprep.mubr.f32.mxu0 0.0
    %1532 = vmatmul.mubr.f32.gmra.mxu0 %v1440
    %v1533 = vpop.f32.mrf.mxu0
    %v1534 = vadd.f32 %v1432, %v1533
    %v1535 = vpop.f32.mrf.mxu0
    %1536 = vmatprep.mubr.f32.mxu0 0.0
    %1537 = vmatmul.mubr.f32.gmra.mxu0 %v1443
    %v1538 = vpop.f32.mrf.mxu0
    %v1539 = vadd.f32 %v1432, %v1538
    %v1540 = vpop.f32.mrf.mxu0
    %1541 = vmatprep.mubr.f32.mxu0 0.0
    %1542 = vmatmul.mubr.f32.gmra.mxu0 %v1446
    %v1543 = vpop.f32.mrf.mxu0
    %v1544 = vadd.f32 %v1432, %v1543
    %v1545 = vpop.f32.mrf.mxu0
    %1546 = vmatprep.mubr.f32.mxu0 0.0
    %1547 = vmatmul.mubr.f32.gmra.mxu0 %v1449
    %v1548 = vpop.f32.mrf.mxu0
    %v1549 = vadd.f32 %v1432, %v1548
    %v1550 = vpop.f32.mrf.mxu0
    %1551 = vmatprep.mubr.f32.mxu0 0.0
    %1552 = vmatmul.mubr.f32.gmra.mxu0 %v1452
    %v1553 = vpop.f32.mrf.mxu0
    %v1554 = vadd.f32 %v1432, %v1553
    %v1555 = vpop.f32.mrf.mxu0
    %1556 = vmatprep.mubr.f32.mxu0 0.0
    %1557 = vmatmul.mubr.f32.gmra.mxu0 %v1455
    %v1558 = vpop.f32.mrf.mxu0
    %v1559 = vadd.f32 %v1432, %v1558
    %v1560 = vpop.f32.mrf.mxu0
    %1561 = vdwg.mxu0
    %v1562 = vmax.f32 %v1524, 0.0
    %v1563 = vmax.f32 %v1529, 0.0
    %v1564 = vmax.f32 %v1534, 0.0
    %v1565 = vmax.f32 %v1539, 0.0
    %v1566 = vmax.f32 %v1544, 0.0
    %v1567 = vmax.f32 %v1549, 0.0
    %v1568 = vmax.f32 %v1554, 0.0
    %v1569 = vmax.f32 %v1559, 0.0
    %v1570 = vld [vmem:[#allocation4 + $0xa0] sm:$0xff]
    %v1571 = vld [vmem:[#allocation4 + $0xa8] sm:$0xff]
    %v1572 = vld [vmem:[#allocation4 + $0xb0] sm:$0xff]
    %v1573 = vld [vmem:[#allocation4 + $0xb8] sm:$0xff]
    %v1574 = vld [vmem:[#allocation4 + $0xc0] sm:$0x1]
    %v1575 = vlaneseq
    %v1576 = vshrl.u32 %v1575, 7
    %v1577 = vsub.s32 0, %v1576
    %v1578 = vrot.slane %v1574, %v1577
    %v1580 = vsel %vm630, %v1562, 0
    %v1583 = vsel %vm630, %v1563, 0
    %v1586 = vsel %vm630, %v1564, 0
    %v1589 = vsel %vm630, %v1565, 0
    %v1592 = vsel %vm630, %v1566, 0
    %v1595 = vsel %vm630, %v1567, 0
    %v1598 = vsel %vm630, %v1568, 0
    %v1601 = vsel %vm630, %v1569, 0
    %1603 = vmatprep.subr.mxu0 0.0
    %1604 = vmatpush1.msra.mxu0 0.0
    %1605 = vmatprep.subr.mxu0 0.0
    %1606 = vmatpush1.msra.mxu0 0.0
    %1607 = vmatprep.subr.mxu0 0.0
    %1608 = vmatpush1.msra.mxu0 0.0
    %1609 = vmatprep.subr.mxu0 0.0
    %1610 = vmatpush1.msra.mxu0 0.0
    %1611 = vmatprep.subr.mxu0 0.0
    %1612 = vmatpush1.msra.mxu0 0.0
    %1613 = vmatprep.subr.mxu0 0.0
    %1614 = vmatpush1.msra.mxu0 0.0
    %1615 = vmatprep.subr.mxu0 0.0
    %1616 = vmatpush1.msra.mxu0 0.0
    %1617 = vmatprep.subr.mxu0 0.0
    %1618 = vmatpush1.msra.mxu0 0.0
    %1619 = vmatprep.subr.mxu0 0.0
    %1620 = vmatpush1.msra.mxu0 0.0
    %1621 = vmatprep.subr.mxu0 0.0
    %1622 = vmatpush1.msra.mxu0 0.0
    %1623 = vmatprep.subr.mxu0 0.0
    %1624 = vmatpush1.msra.mxu0 0.0
    %1625 = vmatprep.subr.mxu0 0.0
    %1626 = vmatpush1.msra.mxu0 0.0
    %1627 = vmatprep.subr.mxu0 0.0
    %1628 = vmatpush1.msra.mxu0 %v1573
    %1629 = vmatprep.subr.mxu0 0.0
    %1630 = vmatpush1.msra.mxu0 %v1572
    %1631 = vmatprep.subr.mxu0 0.0
    %1632 = vmatpush1.msra.mxu0 %v1571
    %1633 = vmatprep.subr.mxu0 0.0
    %1634 = vmatpush1.msra.mxu0 %v1570
    %1635 = vmatprep.subr.mxu0 0.0
    %1636 = vmatpush2.msra.mxu0 0.0
    %1637 = vmatprep.subr.mxu0 0.0
    %1638 = vmatpush2.msra.mxu0 0.0
    %1639 = vmatprep.subr.mxu0 0.0
    %1640 = vmatpush2.msra.mxu0 0.0
    %1641 = vmatprep.subr.mxu0 0.0
    %1642 = vmatpush2.msra.mxu0 0.0
    %1643 = vmatprep.subr.mxu0 0.0
    %1644 = vmatpush2.msra.mxu0 0.0
    %1645 = vmatprep.subr.mxu0 0.0
    %1646 = vmatpush2.msra.mxu0 0.0
    %1647 = vmatprep.subr.mxu0 0.0
    %1648 = vmatpush2.msra.mxu0 0.0
    %1649 = vmatprep.subr.mxu0 0.0
    %1650 = vmatpush2.msra.mxu0 0.0
    %1651 = vmatprep.subr.mxu0 0.0
    %1652 = vmatpush2.msra.mxu0 0.0
    %1653 = vmatprep.subr.mxu0 0.0
    %1654 = vmatpush2.msra.mxu0 0.0
    %1655 = vmatprep.subr.mxu0 0.0
    %1656 = vmatpush2.msra.mxu0 0.0
    %1657 = vmatprep.subr.mxu0 0.0
    %1658 = vmatpush2.msra.mxu0 0.0
    %1659 = vmatprep.subr.mxu0 0.0
    %1660 = vmatpush2.msra.mxu0 0.0
    %1661 = vmatprep.subr.mxu0 0.0
    %1662 = vmatpush2.msra.mxu0 0.0
    %1663 = vmatprep.subr.mxu0 0.0
    %1664 = vmatpush2.msra.mxu0 0.0
    %1665 = vmatprep.subr.mxu0 0.0
    %1666 = vmatpush2.msra.mxu0 0.0
    %1667 = vmatprep.mubr.f32.mxu0 0.0
    %1668 = vmatmul.mubr.f32.gmra.mxu0 %v1580
    %v1669 = vpop.f32.mrf.mxu0
    %v1670 = vadd.f32 %v1578, %v1669
    %v1671 = vpop.f32.mrf.mxu0
    %1672 = vmatprep.mubr.f32.mxu0 0.0
    %1673 = vmatmul.mubr.f32.gmra.mxu0 %v1583
    %v1674 = vpop.f32.mrf.mxu0
    %v1675 = vadd.f32 %v1578, %v1674
    %v1676 = vpop.f32.mrf.mxu0
    %1677 = vmatprep.mubr.f32.mxu0 0.0
    %1678 = vmatmul.mubr.f32.gmra.mxu0 %v1586
    %v1679 = vpop.f32.mrf.mxu0
    %v1680 = vadd.f32 %v1578, %v1679
    %v1681 = vpop.f32.mrf.mxu0
    %1682 = vmatprep.mubr.f32.mxu0 0.0
    %1683 = vmatmul.mubr.f32.gmra.mxu0 %v1589
    %v1684 = vpop.f32.mrf.mxu0
    %v1685 = vadd.f32 %v1578, %v1684
    %v1686 = vpop.f32.mrf.mxu0
    %1687 = vmatprep.mubr.f32.mxu0 0.0
    %1688 = vmatmul.mubr.f32.gmra.mxu0 %v1592
    %v1689 = vpop.f32.mrf.mxu0
    %v1690 = vadd.f32 %v1578, %v1689
    %v1691 = vpop.f32.mrf.mxu0
    %1692 = vmatprep.mubr.f32.mxu0 0.0
    %1693 = vmatmul.mubr.f32.gmra.mxu0 %v1595
    %v1694 = vpop.f32.mrf.mxu0
    %v1695 = vadd.f32 %v1578, %v1694
    %v1696 = vpop.f32.mrf.mxu0
    %1697 = vmatprep.mubr.f32.mxu0 0.0
    %1698 = vmatmul.mubr.f32.gmra.mxu0 %v1598
    %v1699 = vpop.f32.mrf.mxu0
    %v1700 = vadd.f32 %v1578, %v1699
    %v1701 = vpop.f32.mrf.mxu0
    %1702 = vmatprep.mubr.f32.mxu0 0.0
    %1703 = vmatmul.mubr.f32.gmra.mxu0 %v1601
    %v1704 = vpop.f32.mrf.mxu0
    %v1705 = vpop.f32.mrf.mxu0
    %1706 = vdwg.mxu0
    %1707 = vrot.lane.b32.xlu0 %v27, 56
    %v1708 = vpop.permute.xlu0 %1707
    %vm1710 = vcmask 589312
    %1711 = vst.msk [vmem:[%s2] sm:$0xff] %vm1710, %v1708
    %1713 = vrot.lane.b32.xlu0 %v1670, 72
    %v1714 = vpop.permute.xlu0 %1713
    %vm1716 = vcmask 654912
    %1717 = vst.msk [vmem:[%s2] sm:$0xff] %vm1716, %v1714
    %1719 = vrot.lane.b32.xlu0 %v1675, 80
    %v1720 = vpop.permute.xlu0 %1719
    %vm1722 = vcmask 720512
    %1723 = vst.msk [vmem:[%s2] sm:$0xff] %vm1722, %v1720
    %1725 = vrot.lane.b32.xlu0 %v1680, 88
    %v1726 = vpop.permute.xlu0 %1725
    %vm1728 = vcmask 786112
    %1729 = vst.msk [vmem:[%s2] sm:$0xff] %vm1728, %v1726
    %1731 = vrot.lane.b32.xlu0 %v1685, 96
    %v1732 = vpop.permute.xlu0 %1731
    %vm1734 = vcmask 851712
    %1735 = vst.msk [vmem:[%s2] sm:$0xff] %vm1734, %v1732
    %1737 = vrot.lane.b32.xlu0 %v1690, 104
    %v1738 = vpop.permute.xlu0 %1737
    %vm1740 = vcmask 917312
    %1741 = vst.msk [vmem:[%s2] sm:$0xff] %vm1740, %v1738
    %1743 = vrot.lane.b32.xlu0 %v1695, 112
    %v1744 = vpop.permute.xlu0 %1743
    %vm1746 = vcmask 982912
    %1747 = vst.msk [vmem:[%s2] sm:$0xff] %vm1746, %v1744
    %1749 = vrot.lane.b32.xlu0 %v1700, 120
    %v1750 = vpop.permute.xlu0 %1749
    %vm1752 = vcmask 1048512
    %1753 = vst.msk [vmem:[%s2] sm:$0xff] %vm1752, %v1750
    %v1754 = vld [vmem:[#allocation4 + $0x30] sm:$0xff]
    %v1755 = vld [vmem:[#allocation4 + $0x38] sm:$0xff]
    %v1756 = vld [vmem:[#allocation4 + $0x40] sm:$0xff]
    %v1757 = vld [vmem:[#allocation4 + $0x48] sm:$0xff]
    %v1758 = vld [vmem:[#allocation4 + $0x50] sm:$0xff]
    %v1759 = vld [vmem:[#allocation4 + $0x58] sm:$0xff]
    %v1760 = vld [vmem:[#allocation4 + $0x60] sm:$0xff]
    %v1761 = vld [vmem:[#allocation4 + $0x68] sm:$0xff]
    %v1762 = vld [vmem:[#allocation4 + $0x70] sm:$0x1]
    %v1763 = vlaneseq
    %v1764 = vshrl.u32 %v1763, 7
    %v1765 = vsub.s32 0, %v1764
    %v1766 = vrot.slane %v1762, %v1765
    %v1767 = vsel %vm630, %v1413, 0
    %1769 = vmatprep.subr.mxu0 0.0
    %1770 = vmatpush1.msra.mxu0 0.0
    %1771 = vmatprep.subr.mxu0 0.0
    %1772 = vmatpush1.msra.mxu0 0.0
    %1773 = vmatprep.subr.mxu0 0.0
    %1774 = vmatpush1.msra.mxu0 0.0
    %1775 = vmatprep.subr.mxu0 0.0
    %1776 = vmatpush1.msra.mxu0 0.0
    %1777 = vmatprep.subr.mxu0 0.0
    %1778 = vmatpush1.msra.mxu0 0.0
    %1779 = vmatprep.subr.mxu0 0.0
    %1780 = vmatpush1.msra.mxu0 0.0
    %1781 = vmatprep.subr.mxu0 0.0
    %1782 = vmatpush1.msra.mxu0 0.0
    %1783 = vmatprep.subr.mxu0 0.0
    %1784 = vmatpush1.msra.mxu0 0.0
    %1785 = vmatprep.subr.mxu0 0.0
    %1786 = vmatpush1.msra.mxu0 0.0
    %1787 = vmatprep.subr.mxu0 0.0
    %1788 = vmatpush1.msra.mxu0 0.0
    %1789 = vmatprep.subr.mxu0 0.0
    %1790 = vmatpush1.msra.mxu0 0.0
    %1791 = vmatprep.subr.mxu0 0.0
    %1792 = vmatpush1.msra.mxu0 0.0
    %1793 = vmatprep.subr.mxu0 0.0
    %1794 = vmatpush1.msra.mxu0 %v1757
    %1795 = vmatprep.subr.mxu0 0.0
    %1796 = vmatpush1.msra.mxu0 %v1756
    %1797 = vmatprep.subr.mxu0 0.0
    %1798 = vmatpush1.msra.mxu0 %v1755
    %1799 = vmatprep.subr.mxu0 0.0
    %1800 = vmatpush1.msra.mxu0 %v1754
    %1801 = vmatprep.subr.mxu0 0.0
    %1802 = vmatpush2.msra.mxu0 0.0
    %1803 = vmatprep.subr.mxu0 0.0
    %1804 = vmatpush2.msra.mxu0 0.0
    %1805 = vmatprep.subr.mxu0 0.0
    %1806 = vmatpush2.msra.mxu0 0.0
    %1807 = vmatprep.subr.mxu0 0.0
    %1808 = vmatpush2.msra.mxu0 0.0
    %1809 = vmatprep.subr.mxu0 0.0
    %1810 = vmatpush2.msra.mxu0 0.0
    %1811 = vmatprep.subr.mxu0 0.0
    %1812 = vmatpush2.msra.mxu0 0.0
    %1813 = vmatprep.subr.mxu0 0.0
    %1814 = vmatpush2.msra.mxu0 0.0
    %1815 = vmatprep.subr.mxu0 0.0
    %1816 = vmatpush2.msra.mxu0 0.0
    %1817 = vmatprep.subr.mxu0 0.0
    %1818 = vmatpush2.msra.mxu0 0.0
    %1819 = vmatprep.subr.mxu0 0.0
    %1820 = vmatpush2.msra.mxu0 0.0
    %1821 = vmatprep.subr.mxu0 0.0
    %1822 = vmatpush2.msra.mxu0 0.0
    %1823 = vmatprep.subr.mxu0 0.0
    %1824 = vmatpush2.msra.mxu0 0.0
    %1825 = vmatprep.subr.mxu0 0.0
    %1826 = vmatpush2.msra.mxu0 0.0
    %1827 = vmatprep.subr.mxu0 0.0
    %1828 = vmatpush2.msra.mxu0 0.0
    %1829 = vmatprep.subr.mxu0 0.0
    %1830 = vmatpush2.msra.mxu0 0.0
    %1831 = vmatprep.subr.mxu0 0.0
    %1832 = vmatpush2.msra.mxu0 0.0
    %1833 = vmatprep.mubr.f32.mxu0 0.0
    %1834 = vmatmul.mubr.f32.gmra.mxu0 %v1767
    %v1835 = vpop.f32.mrf.mxu0
    %v1836 = vadd.f32 %v1766, %v1835
    %v1837 = vpop.f32.mrf.mxu0
    %1838 = vdwg.mxu0
    %1839 = vmatprep.subr.mxu0 0.0
    %1840 = vmatpush1.msra.mxu0 0.0
    %1841 = vmatprep.subr.mxu0 0.0
    %1842 = vmatpush1.msra.mxu0 0.0
    %1843 = vmatprep.subr.mxu0 0.0
    %1844 = vmatpush1.msra.mxu0 0.0
    %1845 = vmatprep.subr.mxu0 0.0
    %1846 = vmatpush1.msra.mxu0 0.0
    %1847 = vmatprep.subr.mxu0 0.0
    %1848 = vmatpush1.msra.mxu0 0.0
    %1849 = vmatprep.subr.mxu0 0.0
    %1850 = vmatpush1.msra.mxu0 0.0
    %1851 = vmatprep.subr.mxu0 0.0
    %1852 = vmatpush1.msra.mxu0 0.0
    %1853 = vmatprep.subr.mxu0 0.0
    %1854 = vmatpush1.msra.mxu0 0.0
    %1855 = vmatprep.subr.mxu0 0.0
    %1856 = vmatpush1.msra.mxu0 0.0
    %1857 = vmatprep.subr.mxu0 0.0
    %1858 = vmatpush1.msra.mxu0 0.0
    %1859 = vmatprep.subr.mxu0 0.0
    %1860 = vmatpush1.msra.mxu0 0.0
    %1861 = vmatprep.subr.mxu0 0.0
    %1862 = vmatpush1.msra.mxu0 0.0
    %1863 = vmatprep.subr.mxu0 0.0
    %1864 = vmatpush1.msra.mxu0 %v1761
    %1865 = vmatprep.subr.mxu0 0.0
    %1866 = vmatpush1.msra.mxu0 %v1760
    %1867 = vmatprep.subr.mxu0 0.0
    %1868 = vmatpush1.msra.mxu0 %v1759
    %1869 = vmatprep.subr.mxu0 0.0
    %1870 = vmatpush1.msra.mxu0 %v1758
    %1871 = vmatprep.subr.mxu0 0.0
    %1872 = vmatpush2.msra.mxu0 0.0
    %1873 = vmatprep.subr.mxu0 0.0
    %1874 = vmatpush2.msra.mxu0 0.0
    %1875 = vmatprep.subr.mxu0 0.0
    %1876 = vmatpush2.msra.mxu0 0.0
    %1877 = vmatprep.subr.mxu0 0.0
    %1878 = vmatpush2.msra.mxu0 0.0
    %1879 = vmatprep.subr.mxu0 0.0
    %1880 = vmatpush2.msra.mxu0 0.0
    %1881 = vmatprep.subr.mxu0 0.0
    %1882 = vmatpush2.msra.mxu0 0.0
    %1883 = vmatprep.subr.mxu0 0.0
    %1884 = vmatpush2.msra.mxu0 0.0
    %1885 = vmatprep.subr.mxu0 0.0
    %1886 = vmatpush2.msra.mxu0 0.0
    %1887 = vmatprep.subr.mxu0 0.0
    %1888 = vmatpush2.msra.mxu0 0.0
    %1889 = vmatprep.subr.mxu0 0.0
    %1890 = vmatpush2.msra.mxu0 0.0
    %1891 = vmatprep.subr.mxu0 0.0
    %1892 = vmatpush2.msra.mxu0 0.0
    %1893 = vmatprep.subr.mxu0 0.0
    %1894 = vmatpush2.msra.mxu0 0.0
    %1895 = vmatprep.subr.mxu0 0.0
    %1896 = vmatpush2.msra.mxu0 0.0
    %1897 = vmatprep.subr.mxu0 0.0
    %1898 = vmatpush2.msra.mxu0 0.0
    %1899 = vmatprep.subr.mxu0 0.0
    %1900 = vmatpush2.msra.mxu0 0.0
    %1901 = vmatprep.subr.mxu0 0.0
    %1902 = vmatpush2.msra.mxu0 0.0
    %1903 = vmatprep.mubr.f32.mxu0 0.0
    %1904 = vmatmul.mubr.f32.gmra.mxu0 %v632
    %v1905 = vpop.f32.mrf.mxu0
    %v1906 = vadd.f32 0.0, %v1905
    %v1907 = vpop.f32.mrf.mxu0
    %1908 = vdwg.mxu0
    %v1909 = vadd.f32 %v1836, %v1906
    %v1910 = vtanh.pop %v1909
    %v1911 = vmul.f32 %v1910, 0.5
    %v1912 = vadd.f32 %v1911, 0.5
    %v1913 = vmul.f32 %v1912, 0.0
    %1915 = vrot.lane.b32.xlu0 %v1910, 64
    %v1916 = vpop.permute.xlu0 %1915
    %v1918 = vmul.f32 %v1912, %v1916
    %1920 = vrot.lane.b32.xlu0 %v1918, 32
    %v1921 = vpop.permute.xlu0 %1920
    %v1923 = vadd.f32 %v1913, %v1921
    %v1924 = vtanh.pop %v1923
    %1926 = vrot.lane.b32.xlu0 %v1924, 64
    %v1927 = vpop.permute.xlu0 %1926
    %v1929 = vmul.f32 %v1912, %v1927
    %1931 = vrot.lane.b32.xlu0 %v1929, 32
    %v1932 = vpop.permute.xlu0 %1931
    %1934 = vst.msk [vmem:[#allocation3] sm:$0xff] %vm630, %v1932
    %v1935 = vsel %vm630, %v1932, 0
    %1937 = vmatprep.subr.mxu0 0.0
    %1938 = vmatpush1.msra.mxu0 0.0
    %1939 = vmatprep.subr.mxu0 0.0
    %1940 = vmatpush1.msra.mxu0 0.0
    %1941 = vmatprep.subr.mxu0 0.0
    %1942 = vmatpush1.msra.mxu0 0.0
    %1943 = vmatprep.subr.mxu0 0.0
    %1944 = vmatpush1.msra.mxu0 0.0
    %1945 = vmatprep.subr.mxu0 0.0
    %1946 = vmatpush1.msra.mxu0 0.0
    %1947 = vmatprep.subr.mxu0 0.0
    %1948 = vmatpush1.msra.mxu0 0.0
    %1949 = vmatprep.subr.mxu0 0.0
    %1950 = vmatpush1.msra.mxu0 0.0
    %1951 = vmatprep.subr.mxu0 0.0
    %1952 = vmatpush1.msra.mxu0 0.0
    %1953 = vmatprep.subr.mxu0 0.0
    %1954 = vmatpush1.msra.mxu0 0.0
    %1955 = vmatprep.subr.mxu0 0.0
    %1956 = vmatpush1.msra.mxu0 0.0
    %1957 = vmatprep.subr.mxu0 0.0
    %1958 = vmatpush1.msra.mxu0 0.0
    %1959 = vmatprep.subr.mxu0 0.0
    %1960 = vmatpush1.msra.mxu0 0.0
    %1961 = vmatprep.subr.mxu0 0.0
    %1962 = vmatpush1.msra.mxu0 %v1761
    %1963 = vmatprep.subr.mxu0 0.0
    %1964 = vmatpush1.msra.mxu0 %v1760
    %1965 = vmatprep.subr.mxu0 0.0
    %1966 = vmatpush1.msra.mxu0 %v1759
    %1967 = vmatprep.subr.mxu0 0.0
    %1968 = vmatpush1.msra.mxu0 %v1758
    %1969 = vmatprep.subr.mxu0 0.0
    %1970 = vmatpush2.msra.mxu0 0.0
    %1971 = vmatprep.subr.mxu0 0.0
    %1972 = vmatpush2.msra.mxu0 0.0
    %1973 = vmatprep.subr.mxu0 0.0
    %1974 = vmatpush2.msra.mxu0 0.0
    %1975 = vmatprep.subr.mxu0 0.0
    %1976 = vmatpush2.msra.mxu0 0.0
    %1977 = vmatprep.subr.mxu0 0.0
    %1978 = vmatpush2.msra.mxu0 0.0
    %1979 = vmatprep.subr.mxu0 0.0
    %1980 = vmatpush2.msra.mxu0 0.0
    %1981 = vmatprep.subr.mxu0 0.0
    %1982 = vmatpush2.msra.mxu0 0.0
    %1983 = vmatprep.subr.mxu0 0.0
    %1984 = vmatpush2.msra.mxu0 0.0
    %1985 = vmatprep.subr.mxu0 0.0
    %1986 = vmatpush2.msra.mxu0 0.0
    %1987 = vmatprep.subr.mxu0 0.0
    %1988 = vmatpush2.msra.mxu0 0.0
    %1989 = vmatprep.subr.mxu0 0.0
    %1990 = vmatpush2.msra.mxu0 0.0
    %1991 = vmatprep.subr.mxu0 0.0
    %1992 = vmatpush2.msra.mxu0 0.0
    %1993 = vmatprep.subr.mxu0 0.0
    %1994 = vmatpush2.msra.mxu0 0.0
    %1995 = vmatprep.subr.mxu0 0.0
    %1996 = vmatpush2.msra.mxu0 0.0
    %1997 = vmatprep.subr.mxu0 0.0
    %1998 = vmatpush2.msra.mxu0 0.0
    %1999 = vmatprep.subr.mxu0 0.0
    %2000 = vmatpush2.msra.mxu0 0.0
    %2001 = vmatprep.mubr.f32.mxu0 0.0
    %2002 = vmatmul.mubr.f32.gmra.mxu0 %v1935
    %v2003 = vpop.f32.mrf.mxu0
    %v2004 = vadd.f32 0.0, %v2003
    %v2005 = vpop.f32.mrf.mxu0
    %2006 = vdwg.mxu0
    %v2007 = vadd.f32 %v1836, %v2004
    %v2008 = vtanh.pop %v2007
    %v2009 = vmul.f32 %v2008, 0.5
    %v2010 = vadd.f32 %v2009, 0.5
    %v2011 = vmul.f32 %v2010, %v1923
    %2013 = vrot.lane.b32.xlu0 %v2008, 64
    %v2014 = vpop.permute.xlu0 %2013
    %v2016 = vmul.f32 %v2010, %v2014
    %2018 = vrot.lane.b32.xlu0 %v2016, 32
    %v2019 = vpop.permute.xlu0 %2018
    %v2021 = vadd.f32 %v2011, %v2019
    %v2022 = vtanh.pop %v2021
    %2024 = vrot.lane.b32.xlu0 %v2022, 64
    %v2025 = vpop.permute.xlu0 %2024
    %v2027 = vmul.f32 %v2010, %v2025
    %2029 = vrot.lane.b32.xlu0 %v2027, 32
    %v2030 = vpop.permute.xlu0 %2029
    %2032 = vst.msk [vmem:[#allocation3 + $0x8] sm:$0xff] %vm630, %v2030
    %v2033 = vsel %vm630, %v2030, 0
    %2035 = vmatprep.subr.mxu0 0.0
    %2036 = vmatpush1.msra.mxu0 0.0
    %2037 = vmatprep.subr.mxu0 0.0
    %2038 = vmatpush1.msra.mxu0 0.0
    %2039 = vmatprep.subr.mxu0 0.0
    %2040 = vmatpush1.msra.mxu0 0.0
    %2041 = vmatprep.subr.mxu0 0.0
    %2042 = vmatpush1.msra.mxu0 0.0
    %2043 = vmatprep.subr.mxu0 0.0
    %2044 = vmatpush1.msra.mxu0 0.0
    %2045 = vmatprep.subr.mxu0 0.0
    %2046 = vmatpush1.msra.mxu0 0.0
    %2047 = vmatprep.subr.mxu0 0.0
    %2048 = vmatpush1.msra.mxu0 0.0
    %2049 = vmatprep.subr.mxu0 0.0
    %2050 = vmatpush1.msra.mxu0 0.0
    %2051 = vmatprep.subr.mxu0 0.0
    %2052 = vmatpush1.msra.mxu0 0.0
    %2053 = vmatprep.subr.mxu0 0.0
    %2054 = vmatpush1.msra.mxu0 0.0
    %2055 = vmatprep.subr.mxu0 0.0
    %2056 = vmatpush1.msra.mxu0 0.0
    %2057 = vmatprep.subr.mxu0 0.0
    %2058 = vmatpush1.msra.mxu0 0.0
    %2059 = vmatprep.subr.mxu0 0.0
    %2060 = vmatpush1.msra.mxu0 %v1761
    %2061 = vmatprep.subr.mxu0 0.0
    %2062 = vmatpush1.msra.mxu0 %v1760
    %2063 = vmatprep.subr.mxu0 0.0
    %2064 = vmatpush1.msra.mxu0 %v1759
    %2065 = vmatprep.subr.mxu0 0.0
    %2066 = vmatpush1.msra.mxu0 %v1758
    %2067 = vmatprep.subr.mxu0 0.0
    %2068 = vmatpush2.msra.mxu0 0.0
    %2069 = vmatprep.subr.mxu0 0.0
    %2070 = vmatpush2.msra.mxu0 0.0
    %2071 = vmatprep.subr.mxu0 0.0
    %2072 = vmatpush2.msra.mxu0 0.0
    %2073 = vmatprep.subr.mxu0 0.0
    %2074 = vmatpush2.msra.mxu0 0.0
    %2075 = vmatprep.subr.mxu0 0.0
    %2076 = vmatpush2.msra.mxu0 0.0
    %2077 = vmatprep.subr.mxu0 0.0
    %2078 = vmatpush2.msra.mxu0 0.0
    %2079 = vmatprep.subr.mxu0 0.0
    %2080 = vmatpush2.msra.mxu0 0.0
    %2081 = vmatprep.subr.mxu0 0.0
    %2082 = vmatpush2.msra.mxu0 0.0
    %2083 = vmatprep.subr.mxu0 0.0
    %2084 = vmatpush2.msra.mxu0 0.0
    %2085 = vmatprep.subr.mxu0 0.0
    %2086 = vmatpush2.msra.mxu0 0.0
    %2087 = vmatprep.subr.mxu0 0.0
    %2088 = vmatpush2.msra.mxu0 0.0
    %2089 = vmatprep.subr.mxu0 0.0
    %2090 = vmatpush2.msra.mxu0 0.0
    %2091 = vmatprep.subr.mxu0 0.0
    %2092 = vmatpush2.msra.mxu0 0.0
    %2093 = vmatprep.subr.mxu0 0.0
    %2094 = vmatpush2.msra.mxu0 0.0
    %2095 = vmatprep.subr.mxu0 0.0
    %2096 = vmatpush2.msra.mxu0 0.0
    %2097 = vmatprep.subr.mxu0 0.0
    %2098 = vmatpush2.msra.mxu0 0.0
    %2099 = vmatprep.mubr.f32.mxu0 0.0
    %2100 = vmatmul.mubr.f32.gmra.mxu0 %v2033
    %v2101 = vpop.f32.mrf.mxu0
    %v2102 = vadd.f32 0.0, %v2101
    %v2103 = vpop.f32.mrf.mxu0
    %2104 = vdwg.mxu0
    %v2105 = vadd.f32 %v1836, %v2102
    %v2106 = vtanh.pop %v2105
    %v2107 = vmul.f32 %v2106, 0.5
    %v2108 = vadd.f32 %v2107, 0.5
    %v2109 = vmul.f32 %v2108, %v2021
    %2111 = vrot.lane.b32.xlu0 %v2106, 64
    %v2112 = vpop.permute.xlu0 %2111
    %v2114 = vmul.f32 %v2108, %v2112
    %2116 = vrot.lane.b32.xlu0 %v2114, 32
    %v2117 = vpop.permute.xlu0 %2116
    %v2119 = vadd.f32 %v2109, %v2117
    %v2120 = vtanh.pop %v2119
    %2122 = vrot.lane.b32.xlu0 %v2120, 64
    %v2123 = vpop.permute.xlu0 %2122
    %v2125 = vmul.f32 %v2108, %v2123
    %2127 = vrot.lane.b32.xlu0 %v2125, 32
    %v2128 = vpop.permute.xlu0 %2127
    %2130 = vst.msk [vmem:[#allocation3 + $0x10] sm:$0xff] %vm630, %v2128
    %v2131 = vsel %vm630, %v2128, 0
    %2133 = vmatprep.subr.mxu0 0.0
    %2134 = vmatpush1.msra.mxu0 0.0
    %2135 = vmatprep.subr.mxu0 0.0
    %2136 = vmatpush1.msra.mxu0 0.0
    %2137 = vmatprep.subr.mxu0 0.0
    %2138 = vmatpush1.msra.mxu0 0.0
    %2139 = vmatprep.subr.mxu0 0.0
    %2140 = vmatpush1.msra.mxu0 0.0
    %2141 = vmatprep.subr.mxu0 0.0
    %2142 = vmatpush1.msra.mxu0 0.0
    %2143 = vmatprep.subr.mxu0 0.0
    %2144 = vmatpush1.msra.mxu0 0.0
    %2145 = vmatprep.subr.mxu0 0.0
    %2146 = vmatpush1.msra.mxu0 0.0
    %2147 = vmatprep.subr.mxu0 0.0
    %2148 = vmatpush1.msra.mxu0 0.0
    %2149 = vmatprep.subr.mxu0 0.0
    %2150 = vmatpush1.msra.mxu0 0.0
    %2151 = vmatprep.subr.mxu0 0.0
    %2152 = vmatpush1.msra.mxu0 0.0
    %2153 = vmatprep.subr.mxu0 0.0
    %2154 = vmatpush1.msra.mxu0 0.0
    %2155 = vmatprep.subr.mxu0 0.0
    %2156 = vmatpush1.msra.mxu0 0.0
    %2157 = vmatprep.subr.mxu0 0.0
    %2158 = vmatpush1.msra.mxu0 %v1761
    %2159 = vmatprep.subr.mxu0 0.0
    %2160 = vmatpush1.msra.mxu0 %v1760
    %2161 = vmatprep.subr.mxu0 0.0
    %2162 = vmatpush1.msra.mxu0 %v1759
    %2163 = vmatprep.subr.mxu0 0.0
    %2164 = vmatpush1.msra.mxu0 %v1758
    %2165 = vmatprep.subr.mxu0 0.0
    %2166 = vmatpush2.msra.mxu0 0.0
    %2167 = vmatprep.subr.mxu0 0.0
    %2168 = vmatpush2.msra.mxu0 0.0
    %2169 = vmatprep.subr.mxu0 0.0
    %2170 = vmatpush2.msra.mxu0 0.0
    %2171 = vmatprep.subr.mxu0 0.0
    %2172 = vmatpush2.msra.mxu0 0.0
    %2173 = vmatprep.subr.mxu0 0.0
    %2174 = vmatpush2.msra.mxu0 0.0
    %2175 = vmatprep.subr.mxu0 0.0
    %2176 = vmatpush2.msra.mxu0 0.0
    %2177 = vmatprep.subr.mxu0 0.0
    %2178 = vmatpush2.msra.mxu0 0.0
    %2179 = vmatprep.subr.mxu0 0.0
    %2180 = vmatpush2.msra.mxu0 0.0
    %2181 = vmatprep.subr.mxu0 0.0
    %2182 = vmatpush2.msra.mxu0 0.0
    %2183 = vmatprep.subr.mxu0 0.0
    %2184 = vmatpush2.msra.mxu0 0.0
    %2185 = vmatprep.subr.mxu0 0.0
    %2186 = vmatpush2.msra.mxu0 0.0
    %2187 = vmatprep.subr.mxu0 0.0
    %2188 = vmatpush2.msra.mxu0 0.0
    %2189 = vmatprep.subr.mxu0 0.0
    %2190 = vmatpush2.msra.mxu0 0.0
    %2191 = vmatprep.subr.mxu0 0.0
    %2192 = vmatpush2.msra.mxu0 0.0
    %2193 = vmatprep.subr.mxu0 0.0
    %2194 = vmatpush2.msra.mxu0 0.0
    %2195 = vmatprep.subr.mxu0 0.0
    %2196 = vmatpush2.msra.mxu0 0.0
    %2197 = vmatprep.mubr.f32.mxu0 0.0
    %2198 = vmatmul.mubr.f32.gmra.mxu0 %v2131
    %v2199 = vpop.f32.mrf.mxu0
    %v2200 = vadd.f32 0.0, %v2199
    %v2201 = vpop.f32.mrf.mxu0
    %2202 = vdwg.mxu0
    %v2203 = vadd.f32 %v1836, %v2200
    %v2204 = vtanh.pop %v2203
    %v2205 = vmul.f32 %v2204, 0.5
    %v2206 = vadd.f32 %v2205, 0.5
    %v2207 = vmul.f32 %v2206, %v2119
    %2209 = vrot.lane.b32.xlu0 %v2204, 64
    %v2210 = vpop.permute.xlu0 %2209
    %v2212 = vmul.f32 %v2206, %v2210
    %2214 = vrot.lane.b32.xlu0 %v2212, 32
    %v2215 = vpop.permute.xlu0 %2214
    %v2217 = vadd.f32 %v2207, %v2215
    %v2218 = vtanh.pop %v2217
    %2220 = vrot.lane.b32.xlu0 %v2218, 64
    %v2221 = vpop.permute.xlu0 %2220
    %v2223 = vmul.f32 %v2206, %v2221
    %2225 = vrot.lane.b32.xlu0 %v2223, 32
    %v2226 = vpop.permute.xlu0 %2225
    %2228 = vst.msk [vmem:[#allocation3 + $0x18] sm:$0xff] %vm630, %v2226
    %v2229 = vsel %vm630, %v2226, 0
    %2231 = vmatprep.subr.mxu0 0.0
    %2232 = vmatpush1.msra.mxu0 0.0
    %2233 = vmatprep.subr.mxu0 0.0
    %2234 = vmatpush1.msra.mxu0 0.0
    %2235 = vmatprep.subr.mxu0 0.0
    %2236 = vmatpush1.msra.mxu0 0.0
    %2237 = vmatprep.subr.mxu0 0.0
    %2238 = vmatpush1.msra.mxu0 0.0
    %2239 = vmatprep.subr.mxu0 0.0
    %2240 = vmatpush1.msra.mxu0 0.0
    %2241 = vmatprep.subr.mxu0 0.0
    %2242 = vmatpush1.msra.mxu0 0.0
    %2243 = vmatprep.subr.mxu0 0.0
    %2244 = vmatpush1.msra.mxu0 0.0
    %2245 = vmatprep.subr.mxu0 0.0
    %2246 = vmatpush1.msra.mxu0 0.0
    %2247 = vmatprep.subr.mxu0 0.0
    %2248 = vmatpush1.msra.mxu0 0.0
    %2249 = vmatprep.subr.mxu0 0.0
    %2250 = vmatpush1.msra.mxu0 0.0
    %2251 = vmatprep.subr.mxu0 0.0
    %2252 = vmatpush1.msra.mxu0 0.0
    %2253 = vmatprep.subr.mxu0 0.0
    %2254 = vmatpush1.msra.mxu0 0.0
    %2255 = vmatprep.subr.mxu0 0.0
    %2256 = vmatpush1.msra.mxu0 %v1761
    %2257 = vmatprep.subr.mxu0 0.0
    %2258 = vmatpush1.msra.mxu0 %v1760
    %2259 = vmatprep.subr.mxu0 0.0
    %2260 = vmatpush1.msra.mxu0 %v1759
    %2261 = vmatprep.subr.mxu0 0.0
    %2262 = vmatpush1.msra.mxu0 %v1758
    %2263 = vmatprep.subr.mxu0 0.0
    %2264 = vmatpush2.msra.mxu0 0.0
    %2265 = vmatprep.subr.mxu0 0.0
    %2266 = vmatpush2.msra.mxu0 0.0
    %2267 = vmatprep.subr.mxu0 0.0
    %2268 = vmatpush2.msra.mxu0 0.0
    %2269 = vmatprep.subr.mxu0 0.0
    %2270 = vmatpush2.msra.mxu0 0.0
    %2271 = vmatprep.subr.mxu0 0.0
    %2272 = vmatpush2.msra.mxu0 0.0
    %2273 = vmatprep.subr.mxu0 0.0
    %2274 = vmatpush2.msra.mxu0 0.0
    %2275 = vmatprep.subr.mxu0 0.0
    %2276 = vmatpush2.msra.mxu0 0.0
    %2277 = vmatprep.subr.mxu0 0.0
    %2278 = vmatpush2.msra.mxu0 0.0
    %2279 = vmatprep.subr.mxu0 0.0
    %2280 = vmatpush2.msra.mxu0 0.0
    %2281 = vmatprep.subr.mxu0 0.0
    %2282 = vmatpush2.msra.mxu0 0.0
    %2283 = vmatprep.subr.mxu0 0.0
    %2284 = vmatpush2.msra.mxu0 0.0
    %2285 = vmatprep.subr.mxu0 0.0
    %2286 = vmatpush2.msra.mxu0 0.0
    %2287 = vmatprep.subr.mxu0 0.0
    %2288 = vmatpush2.msra.mxu0 0.0
    %2289 = vmatprep.subr.mxu0 0.0
    %2290 = vmatpush2.msra.mxu0 0.0
    %2291 = vmatprep.subr.mxu0 0.0
    %2292 = vmatpush2.msra.mxu0 0.0
    %2293 = vmatprep.subr.mxu0 0.0
    %2294 = vmatpush2.msra.mxu0 0.0
    %2295 = vmatprep.mubr.f32.mxu0 0.0
    %2296 = vmatmul.mubr.f32.gmra.mxu0 %v2229
    %v2297 = vpop.f32.mrf.mxu0
    %v2298 = vadd.f32 0.0, %v2297
    %v2299 = vpop.f32.mrf.mxu0
    %2300 = vdwg.mxu0
    %v2301 = vadd.f32 %v1836, %v2298
    %v2302 = vtanh.pop %v2301
    %v2303 = vmul.f32 %v2302, 0.5
    %v2304 = vadd.f32 %v2303, 0.5
    %v2305 = vmul.f32 %v2304, %v2217
    %2307 = vrot.lane.b32.xlu0 %v2302, 64
    %v2308 = vpop.permute.xlu0 %2307
    %v2310 = vmul.f32 %v2304, %v2308
    %2312 = vrot.lane.b32.xlu0 %v2310, 32
    %v2313 = vpop.permute.xlu0 %2312
    %v2315 = vadd.f32 %v2305, %v2313
    %v2316 = vtanh.pop %v2315
    %2318 = vrot.lane.b32.xlu0 %v2316, 64
    %v2319 = vpop.permute.xlu0 %2318
    %v2321 = vmul.f32 %v2304, %v2319
    %2323 = vrot.lane.b32.xlu0 %v2321, 32
    %v2324 = vpop.permute.xlu0 %2323
    %2326 = vst.msk [vmem:[#allocation3 + $0x20] sm:$0xff] %vm630, %v2324
    %v2327 = vsel %vm630, %v2324, 0
    %2329 = vmatprep.subr.mxu0 0.0
    %2330 = vmatpush1.msra.mxu0 0.0
    %2331 = vmatprep.subr.mxu0 0.0
    %2332 = vmatpush1.msra.mxu0 0.0
    %2333 = vmatprep.subr.mxu0 0.0
    %2334 = vmatpush1.msra.mxu0 0.0
    %2335 = vmatprep.subr.mxu0 0.0
    %2336 = vmatpush1.msra.mxu0 0.0
    %2337 = vmatprep.subr.mxu0 0.0
    %2338 = vmatpush1.msra.mxu0 0.0
    %2339 = vmatprep.subr.mxu0 0.0
    %2340 = vmatpush1.msra.mxu0 0.0
    %2341 = vmatprep.subr.mxu0 0.0
    %2342 = vmatpush1.msra.mxu0 0.0
    %2343 = vmatprep.subr.mxu0 0.0
    %2344 = vmatpush1.msra.mxu0 0.0
    %2345 = vmatprep.subr.mxu0 0.0
    %2346 = vmatpush1.msra.mxu0 0.0
    %2347 = vmatprep.subr.mxu0 0.0
    %2348 = vmatpush1.msra.mxu0 0.0
    %2349 = vmatprep.subr.mxu0 0.0
    %2350 = vmatpush1.msra.mxu0 0.0
    %2351 = vmatprep.subr.mxu0 0.0
    %2352 = vmatpush1.msra.mxu0 0.0
    %2353 = vmatprep.subr.mxu0 0.0
    %2354 = vmatpush1.msra.mxu0 %v1761
    %2355 = vmatprep.subr.mxu0 0.0
    %2356 = vmatpush1.msra.mxu0 %v1760
    %2357 = vmatprep.subr.mxu0 0.0
    %2358 = vmatpush1.msra.mxu0 %v1759
    %2359 = vmatprep.subr.mxu0 0.0
    %2360 = vmatpush1.msra.mxu0 %v1758
    %2361 = vmatprep.subr.mxu0 0.0
    %2362 = vmatpush2.msra.mxu0 0.0
    %2363 = vmatprep.subr.mxu0 0.0
    %2364 = vmatpush2.msra.mxu0 0.0
    %2365 = vmatprep.subr.mxu0 0.0
    %2366 = vmatpush2.msra.mxu0 0.0
    %2367 = vmatprep.subr.mxu0 0.0
    %2368 = vmatpush2.msra.mxu0 0.0
    %2369 = vmatprep.subr.mxu0 0.0
    %2370 = vmatpush2.msra.mxu0 0.0
    %2371 = vmatprep.subr.mxu0 0.0
    %2372 = vmatpush2.msra.mxu0 0.0
    %2373 = vmatprep.subr.mxu0 0.0
    %2374 = vmatpush2.msra.mxu0 0.0
    %2375 = vmatprep.subr.mxu0 0.0
    %2376 = vmatpush2.msra.mxu0 0.0
    %2377 = vmatprep.subr.mxu0 0.0
    %2378 = vmatpush2.msra.mxu0 0.0
    %2379 = vmatprep.subr.mxu0 0.0
    %2380 = vmatpush2.msra.mxu0 0.0
    %2381 = vmatprep.subr.mxu0 0.0
    %2382 = vmatpush2.msra.mxu0 0.0
    %2383 = vmatprep.subr.mxu0 0.0
    %2384 = vmatpush2.msra.mxu0 0.0
    %2385 = vmatprep.subr.mxu0 0.0
    %2386 = vmatpush2.msra.mxu0 0.0
    %2387 = vmatprep.subr.mxu0 0.0
    %2388 = vmatpush2.msra.mxu0 0.0
    %2389 = vmatprep.subr.mxu0 0.0
    %2390 = vmatpush2.msra.mxu0 0.0
    %2391 = vmatprep.subr.mxu0 0.0
    %2392 = vmatpush2.msra.mxu0 0.0
    %2393 = vmatprep.mubr.f32.mxu0 0.0
    %2394 = vmatmul.mubr.f32.gmra.mxu0 %v2327
    %v2395 = vpop.f32.mrf.mxu0
    %v2396 = vadd.f32 0.0, %v2395
    %v2397 = vpop.f32.mrf.mxu0
    %2398 = vdwg.mxu0
    %v2399 = vadd.f32 %v1836, %v2396
    %v2400 = vtanh.pop %v2399
    %v2401 = vmul.f32 %v2400, 0.5
    %v2402 = vadd.f32 %v2401, 0.5
    %v2403 = vmul.f32 %v2402, %v2315
    %2405 = vrot.lane.b32.xlu0 %v2400, 64
    %v2406 = vpop.permute.xlu0 %2405
    %v2408 = vmul.f32 %v2402, %v2406
    %2410 = vrot.lane.b32.xlu0 %v2408, 32
    %v2411 = vpop.permute.xlu0 %2410
    %v2413 = vadd.f32 %v2403, %v2411
    %v2414 = vtanh.pop %v2413
    %2416 = vrot.lane.b32.xlu0 %v2414, 64
    %v2417 = vpop.permute.xlu0 %2416
    %v2419 = vmul.f32 %v2402, %v2417
    %2421 = vrot.lane.b32.xlu0 %v2419, 32
    %v2422 = vpop.permute.xlu0 %2421
    %2424 = vst.msk [vmem:[#allocation3 + $0x28] sm:$0xff] %vm630, %v2422
    %v2425 = vsel %vm630, %v2422, 0
    %2427 = vmatprep.subr.mxu0 0.0
    %2428 = vmatpush1.msra.mxu0 0.0
    %2429 = vmatprep.subr.mxu0 0.0
    %2430 = vmatpush1.msra.mxu0 0.0
    %2431 = vmatprep.subr.mxu0 0.0
    %2432 = vmatpush1.msra.mxu0 0.0
    %2433 = vmatprep.subr.mxu0 0.0
    %2434 = vmatpush1.msra.mxu0 0.0
    %2435 = vmatprep.subr.mxu0 0.0
    %2436 = vmatpush1.msra.mxu0 0.0
    %2437 = vmatprep.subr.mxu0 0.0
    %2438 = vmatpush1.msra.mxu0 0.0
    %2439 = vmatprep.subr.mxu0 0.0
    %2440 = vmatpush1.msra.mxu0 0.0
    %2441 = vmatprep.subr.mxu0 0.0
    %2442 = vmatpush1.msra.mxu0 0.0
    %2443 = vmatprep.subr.mxu0 0.0
    %2444 = vmatpush1.msra.mxu0 0.0
    %2445 = vmatprep.subr.mxu0 0.0
    %2446 = vmatpush1.msra.mxu0 0.0
    %2447 = vmatprep.subr.mxu0 0.0
    %2448 = vmatpush1.msra.mxu0 0.0
    %2449 = vmatprep.subr.mxu0 0.0
    %2450 = vmatpush1.msra.mxu0 0.0
    %2451 = vmatprep.subr.mxu0 0.0
    %2452 = vmatpush1.msra.mxu0 %v1761
    %2453 = vmatprep.subr.mxu0 0.0
    %2454 = vmatpush1.msra.mxu0 %v1760
    %2455 = vmatprep.subr.mxu0 0.0
    %2456 = vmatpush1.msra.mxu0 %v1759
    %2457 = vmatprep.subr.mxu0 0.0
    %2458 = vmatpush1.msra.mxu0 %v1758
    %2459 = vmatprep.subr.mxu0 0.0
    %2460 = vmatpush2.msra.mxu0 0.0
    %2461 = vmatprep.subr.mxu0 0.0
    %2462 = vmatpush2.msra.mxu0 0.0
    %2463 = vmatprep.subr.mxu0 0.0
    %2464 = vmatpush2.msra.mxu0 0.0
    %2465 = vmatprep.subr.mxu0 0.0
    %2466 = vmatpush2.msra.mxu0 0.0
    %2467 = vmatprep.subr.mxu0 0.0
    %2468 = vmatpush2.msra.mxu0 0.0
    %2469 = vmatprep.subr.mxu0 0.0
    %2470 = vmatpush2.msra.mxu0 0.0
    %2471 = vmatprep.subr.mxu0 0.0
    %2472 = vmatpush2.msra.mxu0 0.0
    %2473 = vmatprep.subr.mxu0 0.0
    %2474 = vmatpush2.msra.mxu0 0.0
    %2475 = vmatprep.subr.mxu0 0.0
    %2476 = vmatpush2.msra.mxu0 0.0
    %2477 = vmatprep.subr.mxu0 0.0
    %2478 = vmatpush2.msra.mxu0 0.0
    %2479 = vmatprep.subr.mxu0 0.0
    %2480 = vmatpush2.msra.mxu0 0.0
    %2481 = vmatprep.subr.mxu0 0.0
    %2482 = vmatpush2.msra.mxu0 0.0
    %2483 = vmatprep.subr.mxu0 0.0
    %2484 = vmatpush2.msra.mxu0 0.0
    %2485 = vmatprep.subr.mxu0 0.0
    %2486 = vmatpush2.msra.mxu0 0.0
    %2487 = vmatprep.subr.mxu0 0.0
    %2488 = vmatpush2.msra.mxu0 0.0
    %2489 = vmatprep.subr.mxu0 0.0
    %2490 = vmatpush2.msra.mxu0 0.0
    %2491 = vmatprep.mubr.f32.mxu0 0.0
    %2492 = vmatmul.mubr.f32.gmra.mxu0 %v2425
    %v2493 = vpop.f32.mrf.mxu0
    %v2494 = vadd.f32 0.0, %v2493
    %v2495 = vpop.f32.mrf.mxu0
    %2496 = vdwg.mxu0
    %v2497 = vadd.f32 %v1836, %v2494
    %v2498 = vtanh.pop %v2497
    %v2499 = vmul.f32 %v2498, 0.5
    %v2500 = vadd.f32 %v2499, 0.5
    %v2501 = vmul.f32 %v2500, %v2413
    %2503 = vrot.lane.b32.xlu0 %v2498, 64
    %v2504 = vpop.permute.xlu0 %2503
    %v2506 = vmul.f32 %v2500, %v2504
    %2508 = vrot.lane.b32.xlu0 %v2506, 32
    %v2509 = vpop.permute.xlu0 %2508
    %v2511 = vadd.f32 %v2501, %v2509
    %v2512 = vtanh.pop %v2511
    %2514 = vrot.lane.b32.xlu0 %v2512, 64
    %v2515 = vpop.permute.xlu0 %2514
    %v2517 = vmul.f32 %v2500, %v2515
    %2519 = vrot.lane.b32.xlu0 %v2517, 32
    %v2520 = vpop.permute.xlu0 %2519
    %2522 = vst.msk [vmem:[#allocation3 + $0x30] sm:$0xff] %vm630, %v2520
    %v2523 = vsel %vm630, %v2520, 0
    %2525 = vmatprep.subr.mxu0 0.0
    %2526 = vmatpush1.msra.mxu0 0.0
    %2527 = vmatprep.subr.mxu0 0.0
    %2528 = vmatpush1.msra.mxu0 0.0
    %2529 = vmatprep.subr.mxu0 0.0
    %2530 = vmatpush1.msra.mxu0 0.0
    %2531 = vmatprep.subr.mxu0 0.0
    %2532 = vmatpush1.msra.mxu0 0.0
    %2533 = vmatprep.subr.mxu0 0.0
    %2534 = vmatpush1.msra.mxu0 0.0
    %2535 = vmatprep.subr.mxu0 0.0
    %2536 = vmatpush1.msra.mxu0 0.0
    %2537 = vmatprep.subr.mxu0 0.0
    %2538 = vmatpush1.msra.mxu0 0.0
    %2539 = vmatprep.subr.mxu0 0.0
    %2540 = vmatpush1.msra.mxu0 0.0
    %2541 = vmatprep.subr.mxu0 0.0
    %2542 = vmatpush1.msra.mxu0 0.0
    %2543 = vmatprep.subr.mxu0 0.0
    %2544 = vmatpush1.msra.mxu0 0.0
    %2545 = vmatprep.subr.mxu0 0.0
    %2546 = vmatpush1.msra.mxu0 0.0
    %2547 = vmatprep.subr.mxu0 0.0
    %2548 = vmatpush1.msra.mxu0 0.0
    %2549 = vmatprep.subr.mxu0 0.0
    %2550 = vmatpush1.msra.mxu0 %v1761
    %2551 = vmatprep.subr.mxu0 0.0
    %2552 = vmatpush1.msra.mxu0 %v1760
    %2553 = vmatprep.subr.mxu0 0.0
    %2554 = vmatpush1.msra.mxu0 %v1759
    %2555 = vmatprep.subr.mxu0 0.0
    %2556 = vmatpush1.msra.mxu0 %v1758
    %2557 = vmatprep.subr.mxu0 0.0
    %2558 = vmatpush2.msra.mxu0 0.0
    %2559 = vmatprep.subr.mxu0 0.0
    %2560 = vmatpush2.msra.mxu0 0.0
    %2561 = vmatprep.subr.mxu0 0.0
    %2562 = vmatpush2.msra.mxu0 0.0
    %2563 = vmatprep.subr.mxu0 0.0
    %2564 = vmatpush2.msra.mxu0 0.0
    %2565 = vmatprep.subr.mxu0 0.0
    %2566 = vmatpush2.msra.mxu0 0.0
    %2567 = vmatprep.subr.mxu0 0.0
    %2568 = vmatpush2.msra.mxu0 0.0
    %2569 = vmatprep.subr.mxu0 0.0
    %2570 = vmatpush2.msra.mxu0 0.0
    %2571 = vmatprep.subr.mxu0 0.0
    %2572 = vmatpush2.msra.mxu0 0.0
    %2573 = vmatprep.subr.mxu0 0.0
    %2574 = vmatpush2.msra.mxu0 0.0
    %2575 = vmatprep.subr.mxu0 0.0
    %2576 = vmatpush2.msra.mxu0 0.0
    %2577 = vmatprep.subr.mxu0 0.0
    %2578 = vmatpush2.msra.mxu0 0.0
    %2579 = vmatprep.subr.mxu0 0.0
    %2580 = vmatpush2.msra.mxu0 0.0
    %2581 = vmatprep.subr.mxu0 0.0
    %2582 = vmatpush2.msra.mxu0 0.0
    %2583 = vmatprep.subr.mxu0 0.0
    %2584 = vmatpush2.msra.mxu0 0.0
    %2585 = vmatprep.subr.mxu0 0.0
    %2586 = vmatpush2.msra.mxu0 0.0
    %2587 = vmatprep.subr.mxu0 0.0
    %2588 = vmatpush2.msra.mxu0 0.0
    %2589 = vmatprep.mubr.f32.mxu0 0.0
    %2590 = vmatmul.mubr.f32.gmra.mxu0 %v2523
    %v2591 = vpop.f32.mrf.mxu0
    %v2592 = vadd.f32 0.0, %v2591
    %v2593 = vpop.f32.mrf.mxu0
    %2594 = vdwg.mxu0
    %v2595 = vadd.f32 %v1836, %v2592
    %v2596 = vtanh.pop %v2595
    %v2597 = vmul.f32 %v2596, 0.5
    %v2598 = vadd.f32 %v2597, 0.5
    %v2599 = vmul.f32 %v2598, %v2511
    %2601 = vrot.lane.b32.xlu0 %v2596, 64
    %v2602 = vpop.permute.xlu0 %2601
    %v2604 = vmul.f32 %v2598, %v2602
    %2606 = vrot.lane.b32.xlu0 %v2604, 32
    %v2607 = vpop.permute.xlu0 %2606
    %v2609 = vadd.f32 %v2599, %v2607
    %v2610 = vtanh.pop %v2609
    %2612 = vrot.lane.b32.xlu0 %v2610, 64
    %v2613 = vpop.permute.xlu0 %2612
    %v2615 = vmul.f32 %v2598, %v2613
    %2617 = vrot.lane.b32.xlu0 %v2615, 32
    %v2618 = vpop.permute.xlu0 %2617
    %2620 = vst.msk [vmem:[#allocation3 + $0x38] sm:$0xff] %vm630, %v2618
    %v2621 = vld [vmem:[#allocation3] sm:$0xff]
    %v2622 = vld [vmem:[#allocation3 + $0x8] sm:$0xff]
    %v2623 = vld [vmem:[#allocation3 + $0x10] sm:$0xff]
    %v2624 = vld [vmem:[#allocation3 + $0x18] sm:$0xff]
    %v2625 = vld [vmem:[#allocation3 + $0x20] sm:$0xff]
    %v2626 = vld [vmem:[#allocation3 + $0x28] sm:$0xff]
    %v2627 = vld [vmem:[#allocation3 + $0x30] sm:$0xff]
    %v2628 = vld [vmem:[#allocation3 + $0x38] sm:$0xff]
    %v2629 = vld [vmem:[#allocation4 + $0xc8] sm:$0xff]
    %v2630 = vld [vmem:[#allocation4 + $0xd0] sm:$0xff]
    %v2631 = vld [vmem:[#allocation4 + $0xd8] sm:$0xff]
    %v2632 = vld [vmem:[#allocation4 + $0xe0] sm:$0xff]
    %v2633 = vld [vmem:[#allocation4 + $0xe8] sm:$0x1]
    %v2634 = vlaneseq
    %v2635 = vshrl.u32 %v2634, 7
    %v2636 = vsub.s32 0, %v2635
    %v2637 = vrot.slane %v2633, %v2636
    %v2639 = vsel %vm630, %v2621, 0
    %v2642 = vsel %vm630, %v2622, 0
    %v2645 = vsel %vm630, %v2623, 0
    %v2648 = vsel %vm630, %v2624, 0
    %v2651 = vsel %vm630, %v2625, 0
    %v2654 = vsel %vm630, %v2626, 0
    %v2657 = vsel %vm630, %v2627, 0
    %v2660 = vsel %vm630, %v2628, 0
    %2662 = vmatprep.subr.mxu0 0.0
    %2663 = vmatpush1.msra.mxu0 0.0
    %2664 = vmatprep.subr.mxu0 0.0
    %2665 = vmatpush1.msra.mxu0 0.0
    %2666 = vmatprep.subr.mxu0 0.0
    %2667 = vmatpush1.msra.mxu0 0.0
    %2668 = vmatprep.subr.mxu0 0.0
    %2669 = vmatpush1.msra.mxu0 0.0
    %2670 = vmatprep.subr.mxu0 0.0
    %2671 = vmatpush1.msra.mxu0 0.0
    %2672 = vmatprep.subr.mxu0 0.0
    %2673 = vmatpush1.msra.mxu0 0.0
    %2674 = vmatprep.subr.mxu0 0.0
    %2675 = vmatpush1.msra.mxu0 0.0
    %2676 = vmatprep.subr.mxu0 0.0
    %2677 = vmatpush1.msra.mxu0 0.0
    %2678 = vmatprep.subr.mxu0 0.0
    %2679 = vmatpush1.msra.mxu0 0.0
    %2680 = vmatprep.subr.mxu0 0.0
    %2681 = vmatpush1.msra.mxu0 0.0
    %2682 = vmatprep.subr.mxu0 0.0
    %2683 = vmatpush1.msra.mxu0 0.0
    %2684 = vmatprep.subr.mxu0 0.0
    %2685 = vmatpush1.msra.mxu0 0.0
    %2686 = vmatprep.subr.mxu0 0.0
    %2687 = vmatpush1.msra.mxu0 %v2632
    %2688 = vmatprep.subr.mxu0 0.0
    %2689 = vmatpush1.msra.mxu0 %v2631
    %2690 = vmatprep.subr.mxu0 0.0
    %2691 = vmatpush1.msra.mxu0 %v2630
    %2692 = vmatprep.subr.mxu0 0.0
    %2693 = vmatpush1.msra.mxu0 %v2629
    %2694 = vmatprep.subr.mxu0 0.0
    %2695 = vmatpush2.msra.mxu0 0.0
    %2696 = vmatprep.subr.mxu0 0.0
    %2697 = vmatpush2.msra.mxu0 0.0
    %2698 = vmatprep.subr.mxu0 0.0
    %2699 = vmatpush2.msra.mxu0 0.0
    %2700 = vmatprep.subr.mxu0 0.0
    %2701 = vmatpush2.msra.mxu0 0.0
    %2702 = vmatprep.subr.mxu0 0.0
    %2703 = vmatpush2.msra.mxu0 0.0
    %2704 = vmatprep.subr.mxu0 0.0
    %2705 = vmatpush2.msra.mxu0 0.0
    %2706 = vmatprep.subr.mxu0 0.0
    %2707 = vmatpush2.msra.mxu0 0.0
    %2708 = vmatprep.subr.mxu0 0.0
    %2709 = vmatpush2.msra.mxu0 0.0
    %2710 = vmatprep.subr.mxu0 0.0
    %2711 = vmatpush2.msra.mxu0 0.0
    %2712 = vmatprep.subr.mxu0 0.0
    %2713 = vmatpush2.msra.mxu0 0.0
    %2714 = vmatprep.subr.mxu0 0.0
    %2715 = vmatpush2.msra.mxu0 0.0
    %2716 = vmatprep.subr.mxu0 0.0
    %2717 = vmatpush2.msra.mxu0 0.0
    %2718 = vmatprep.subr.mxu0 0.0
    %2719 = vmatpush2.msra.mxu0 0.0
    %2720 = vmatprep.subr.mxu0 0.0
    %2721 = vmatpush2.msra.mxu0 0.0
    %2722 = vmatprep.subr.mxu0 0.0
    %2723 = vmatpush2.msra.mxu0 0.0
    %2724 = vmatprep.subr.mxu0 0.0
    %2725 = vmatpush2.msra.mxu0 0.0
    %2726 = vmatprep.mubr.f32.mxu0 0.0
    %2727 = vmatmul.mubr.f32.gmra.mxu0 %v2639
    %v2728 = vpop.f32.mrf.mxu0
    %v2729 = vadd.f32 %v2637, %v2728
    %v2730 = vpop.f32.mrf.mxu0
    %2731 = vmatprep.mubr.f32.mxu0 0.0
    %2732 = vmatmul.mubr.f32.gmra.mxu0 %v2642
    %v2733 = vpop.f32.mrf.mxu0
    %v2734 = vadd.f32 %v2637, %v2733
    %v2735 = vpop.f32.mrf.mxu0
    %2736 = vmatprep.mubr.f32.mxu0 0.0
    %2737 = vmatmul.mubr.f32.gmra.mxu0 %v2645
    %v2738 = vpop.f32.mrf.mxu0
    %v2739 = vadd.f32 %v2637, %v2738
    %v2740 = vpop.f32.mrf.mxu0
    %2741 = vmatprep.mubr.f32.mxu0 0.0
    %2742 = vmatmul.mubr.f32.gmra.mxu0 %v2648
    %v2743 = vpop.f32.mrf.mxu0
    %v2744 = vadd.f32 %v2637, %v2743
    %v2745 = vpop.f32.mrf.mxu0
    %2746 = vmatprep.mubr.f32.mxu0 0.0
    %2747 = vmatmul.mubr.f32.gmra.mxu0 %v2651
    %v2748 = vpop.f32.mrf.mxu0
    %v2749 = vadd.f32 %v2637, %v2748
    %v2750 = vpop.f32.mrf.mxu0
    %2751 = vmatprep.mubr.f32.mxu0 0.0
    %2752 = vmatmul.mubr.f32.gmra.mxu0 %v2654
    %v2753 = vpop.f32.mrf.mxu0
    %v2754 = vadd.f32 %v2637, %v2753
    %v2755 = vpop.f32.mrf.mxu0
    %2756 = vmatprep.mubr.f32.mxu0 0.0
    %2757 = vmatmul.mubr.f32.gmra.mxu0 %v2657
    %v2758 = vpop.f32.mrf.mxu0
    %v2759 = vadd.f32 %v2637, %v2758
    %v2760 = vpop.f32.mrf.mxu0
    %2761 = vmatprep.mubr.f32.mxu0 0.0
    %2762 = vmatmul.mubr.f32.gmra.mxu0 %v2660
    %v2763 = vpop.f32.mrf.mxu0
    %v2764 = vadd.f32 %v2637, %v2763
    %v2765 = vpop.f32.mrf.mxu0
    %2766 = vdwg.mxu0
    %2767 = vst.msk [vmem:[%s2] sm:$0xff] %vm38, %v2729
    %2769 = vrot.lane.b32.xlu0 %v2734, 8
    %v2770 = vpop.permute.xlu0 %2769
    %vm2772 = vcmask 130112
    %2773 = vst.msk [vmem:[%s2] sm:$0xff] %vm2772, %v2770
    %2775 = vrot.lane.b32.xlu0 %v2739, 16
    %v2776 = vpop.permute.xlu0 %2775
    %vm2778 = vcmask 195712
    %2779 = vst.msk [vmem:[%s2] sm:$0xff] %vm2778, %v2776
    %2781 = vrot.lane.b32.xlu0 %v2744, 24
    %v2782 = vpop.permute.xlu0 %2781
    %vm2784 = vcmask 261312
    %2785 = vst.msk [vmem:[%s2] sm:$0xff] %vm2784, %v2782
    %2787 = vrot.lane.b32.xlu0 %v2749, 32
    %v2788 = vpop.permute.xlu0 %2787
    %vm2790 = vcmask 326912
    %2791 = vst.msk [vmem:[%s2] sm:$0xff] %vm2790, %v2788
    %2793 = vrot.lane.b32.xlu0 %v2754, 40
    %v2794 = vpop.permute.xlu0 %2793
    %vm2796 = vcmask 392512
    %2797 = vst.msk [vmem:[%s2] sm:$0xff] %vm2796, %v2794
    %2799 = vrot.lane.b32.xlu0 %v2759, 48
    %v2800 = vpop.permute.xlu0 %2799
    %vm2802 = vcmask 458112
    %2803 = vst.msk [vmem:[%s2] sm:$0xff] %vm2802, %v2800
    %2805 = vrot.lane.b32.xlu0 %v2764, 56
    %v2806 = vpop.permute.xlu0 %2805
    %vm2808 = vcmask 523712
    %2809 = vst.msk [vmem:[%s2] sm:$0xff] %vm2808, %v2806
    // Predicated region
    $region14: #{forward.1} parent=1 // pred_check
      _
    $region15: #{forward.1} parent=1 // pred_check_branch
      %2811 = sbr.rel (0) target = $region17
    $region16: #{forward.1} parent=1 // pred_region
      _
    $region17: #{forward.1} parent=1 // pred_fallthru
      _
    // Predicated region
    $region18: #{forward.1} parent=1 // pred_check
      _
    $region19: #{forward.1} parent=1 // pred_check_branch
      %2813 = sbr.rel (0) target = $region21
    $region20: #{forward.1} parent=1 // pred_region
      _
    $region21: #{forward.1} parent=1 // pred_fallthru
      _
    %2814 = vsyncpa [#allocation5], 1

</llo_original>
